<compile_context>
chip_gen: v6e
topology: v6e:2x2x1
jax: 0.10.0
libtpu: 0.0.40
codegen_flags: <defaults>
</compile_context>

<pallas_src>
import functools

import jax
import jax.numpy as jnp
import numpy as np
from jax.experimental import pallas as pl
from jax.experimental.pallas import tpu as pltpu


# ----------------------------- Pallas kernel --------------------------------

def _notears_kernel(dims, d_pad, *refs):
    """Fused forward for one batch tile.

    refs = (x, w1_hm, b1_hm, [lc_w2d_i, lc_b2d_i] * n_lc, out)

      w1_hm : [d, d*m1]   fused (pos-neg) fc1 weight, columns in hidden-major
                          order:  col = k*d + j  (hidden unit k of feature j)
      b1_hm : [1, d*m1]   fused fc1 bias, same column order
      lc_w2d: [m_in*m_out, d]  row k*m_out + l == w[:, k, l]
      lc_b2d: [m_out, d]
      out   : [bn, d_pad] (lane-dense; first d columns are the real output)
    """
    d = dims[0]
    n_lc = len(dims) - 2
    x_ref, w1_ref, b1_ref = refs[0], refs[1], refs[2]
    lc_refs = refs[3:3 + 2 * n_lc]
    out_ref = refs[-1]

    # fc1 (pos - neg already fused in the wrapper): one MXU matmul, f32 accum.
    h = jnp.dot(x_ref[...], w1_ref[...],
                preferred_element_type=jnp.float32) + b1_ref[...]   # [bn, d*m1]

    # LocallyConnected layers: per-feature contraction as VPU multiply+accumulate
    # over contiguous [bn, d] lane slices (hidden-major layout). No block-diagonal
    # weights, no MXU flops on structural zeros.
    for li in range(n_lc):
        m_in, m_out = dims[li + 1], dims[li + 2]
        w_ref = lc_refs[2 * li]        # [m_in*m_out, d]
        b_ref = lc_refs[2 * li + 1]    # [m_out, d]
        s = jax.nn.sigmoid(h)
        cols = []
        for l in range(m_out):
            acc = b_ref[pl.ds(l, 1), :]                              # [1, d]
            for k in range(m_in):
                acc = acc + s[:, k * d:(k + 1) * d] * w_ref[pl.ds(k * m_out + l, 1), :]
            cols.append(acc)                                         # [bn, d]
        h = cols[0] if m_out == 1 else jnp.concatenate(cols, axis=1)  # [bn, m_out*d]

    # h is [bn, d]; pad lanes with zeros so the store is lane-dense (unmasked vst).
    if d_pad > d:
        h = jnp.concatenate(
            [h, jnp.zeros((h.shape[0], d_pad - d), dtype=h.dtype)], axis=1)
    out_ref[...] = h.astype(out_ref.dtype)


# ------------------------------- wrapper -------------------------------------

def _round_up(a, b):
    return ((a + b - 1) // b) * b


def _pick_batch_tile(n, width_elems):
    """Largest batch tile (amortizes ~0.35us/grid-step overhead) whose f32
    activation footprint stays comfortably inside VMEM (conservative for v7x's
    64 MiB)."""
    budget_bytes = 4 * 1024 * 1024
    bn = 8
    for cand in (512, 256, 128, 64, 32, 16, 8):
        if cand * width_elems * 4 <= budget_bytes:
            bn = cand
            break
    return min(bn, _round_up(n, 8))


def notears_mlp_forward(x, params, dims, *, use_bf16=False):
    assert len(dims) >= 2 and dims[-1] == 1
    n, d = x.shape
    assert d == dims[0]
    m1 = dims[1]
    n_lc = len(dims) - 2
    out_dtype = x.dtype

    d_pad = pl.cdiv(d, 128) * 128                       # lane-dense output width
    width = max([d * m for m in dims[1:]] + [d_pad])    # widest live activation
    bn = _pick_batch_tile(n, width)
    n_pad = _round_up(n, bn)
    grid = (n_pad // bn,)

    # ---- one-time parameter glue (amortized over the whole grid) ----
    # Fuse fc1_pos - fc1_neg, transpose to [d, d*m1], and permute columns from
    # feature-major (j*m1 + k) to hidden-major (k*d + j).
    w1 = params["fc1_pos_w"] - params["fc1_neg_w"]      # [d*m1, d] (torch layout)
    b1 = params["fc1_pos_b"] - params["fc1_neg_b"]      # [d*m1]
    w1_hm = w1.T.reshape(d, d, m1).transpose(0, 2, 1).reshape(d, d * m1)
    b1_hm = b1.reshape(d, m1).T.reshape(1, d * m1).astype(jnp.float32)

    x_in = x
    if use_bf16:                                        # bf16 MXU inputs, f32 accum
        x_in = x_in.astype(jnp.bfloat16)
        w1_hm = w1_hm.astype(jnp.bfloat16)
    if n_pad != n:                                      # ragged batch: zero-pad rows
        x_in = jnp.concatenate(
            [x_in, jnp.zeros((n_pad - n, d), x_in.dtype)], axis=0)

    def const_spec(shape):
        # Grid-invariant operand: constant index_map + single buffer (no point
        # double-buffering data that never changes across the grid).
        return pl.BlockSpec(shape, lambda i: (0, 0), pipeline_mode=pl.Buffered(1))

    inputs = [x_in, w1_hm, b1_hm]
    in_specs = [
        pl.BlockSpec((bn, d), lambda i: (i, 0)),
        const_spec(w1_hm.shape),
        const_spec(b1_hm.shape),
    ]
    for l in range(n_lc):
        m_in, m_out = dims[l + 1], dims[l + 2]
        w = params["lc_weights"][l]                     # [d, m_in, m_out]
        b = params["lc_biases"][l]                      # [d, m_out]
        w2d = jnp.transpose(w, (1, 2, 0)).reshape(m_in * m_out, d)
        b2d = b.T                                       # [m_out, d]
        inputs += [w2d, b2d]
        in_specs += [const_spec(w2d.shape), const_spec(b2d.shape)]

    kernel = functools.partial(_notears_kernel, tuple(dims), d_pad)
    out = pl.pallas_call(
        kernel,
        out_shape=jax.ShapeDtypeStruct((n_pad, d_pad), out_dtype),
        grid=grid,
        in_specs=in_specs,
        out_specs=pl.BlockSpec((bn, d_pad), lambda i: (i, 0)),
        compiler_params=pltpu.CompilerParams(
            dimension_semantics=("parallel",),          # megacore-shardable on v7x
            vmem_limit_bytes=32 * 1024 * 1024,
        ),
    )(*inputs)

    if n_pad != n or d_pad != d:
        out = out[:n, :d]
    return out


# ------------------------- deterministic parameters ---------------------------

def init_params(key, dims):
    d, m1 = dims[0], dims[1]
    n_lc = len(dims) - 2
    keys = jax.random.split(key, 4 + 2 * n_lc)

    def unif(k, shape, fan_in):
        bound = 1.0 / np.sqrt(fan_in)
        return jax.random.uniform(k, shape, jnp.float32, -bound, bound)

    params = {
        "fc1_pos_w": unif(keys[0], (d * m1, d), d),     # nn.Linear weight [out, in]
        "fc1_neg_w": unif(keys[1], (d * m1, d), d),
        "fc1_pos_b": unif(keys[2], (d * m1,), d),
        "fc1_neg_b": unif(keys[3], (d * m1,), d),
        "lc_weights": [],
        "lc_biases": [],
    }
    ki = 4
    for l in range(n_lc):
        mi, mo = dims[l + 1], dims[l + 2]
        params["lc_weights"].append(unif(keys[ki], (d, mi, mo), mi)); ki += 1
        params["lc_biases"].append(unif(keys[ki], (d, mo), mi)); ki += 1
    return params


# ----------------------------- pure-JAX reference -----------------------------

def reference_forward(x, params, dims):
    d, m1 = dims[0], dims[1]
    w1 = params["fc1_pos_w"] - params["fc1_neg_w"]
    b1 = params["fc1_pos_b"] - params["fc1_neg_b"]
    h = x @ w1.T + b1                                   # [n, d*m1]
    h = h.reshape(-1, d, m1)                            # [n, d, m1]
    for w, b in zip(params["lc_weights"], params["lc_biases"]):
        h = jax.nn.sigmoid(h)
        # LocallyConnected: exact elementwise multiply + reduce (f32).
        h = jnp.sum(h[:, :, :, None] * w[None, :, :, :], axis=2) + b[None, :, :]
    return h[:, :, 0]                                   # squeeze(dim=2)


# ----------------------------------- main -------------------------------------

if __name__ == "__main__":
    key = jax.random.PRNGKey(0)
    ka, kb, kc, kd = jax.random.split(key, 4)

    # Config A: canonical NOTEARS MLP (one LocallyConnected layer), multi-tile batch.
    dims_a = [8, 16, 1]
    n_a = 1024
    x_a = jax.random.normal(ka, (n_a, dims_a[0]), jnp.float32)
    p_a = init_params(kb, dims_a)
    out_a = jax.block_until_ready(notears_mlp_forward(x_a, p_a, dims_a))
    ref_a = reference_forward(x_a, p_a, dims_a)
    assert out_a.shape == (n_a, dims_a[0])
    np.testing.assert_allclose(np.asarray(out_a), np.asarray(ref_a),
                               rtol=3e-5, atol=3e-5)

    # Config B: deeper net (two LocallyConnected layers) exercising the general path.
    dims_b = [8, 16, 8, 1]
    n_b = 256
    x_b = jax.random.normal(kc, (n_b, dims_b[0]), jnp.float32)
    p_b = init_params(kd, dims_b)
    out_b = jax.block_until_ready(notears_mlp_forward(x_b, p_b, dims_b))
    ref_b = reference_forward(x_b, p_b, dims_b)
    assert out_b.shape == (n_b, dims_b[0])
    np.testing.assert_allclose(np.asarray(out_b), np.asarray(ref_b),
                               rtol=3e-5, atol=3e-5)

    # Config C: bf16 MXU inputs for fc1 (f32 accumulation), looser tolerance.
    out_c = jax.block_until_ready(
        notears_mlp_forward(x_a, p_a, dims_a, use_bf16=True))
    np.testing.assert_allclose(np.asarray(out_c), np.asarray(ref_a),
                               rtol=5e-2, atol=5e-2)

    print("KERNEL_OK")
</pallas_src>

<mosaic_0001>
module attributes {stable_mosaic.version = 11 : i64} {
  func.func @_notears_kernel(%arg0: i32, %arg1: memref<512x8xf32, #tpu.memory_space<vmem>>, %arg2: memref<8x128xf32, #tpu.memory_space<vmem>>, %arg3: memref<1x128xf32, #tpu.memory_space<vmem>>, %arg4: memref<16x8xf32, #tpu.memory_space<vmem>>, %arg5: memref<1x8xf32, #tpu.memory_space<vmem>>, %arg6: memref<512x128xf32, #tpu.memory_space<vmem>>) attributes {dimension_semantics = [#tpu.dimension_semantics<parallel>], iteration_bounds = array<i64: 2>, scalar_prefetch = 0 : i64, scratch_operands = 0 : i64, tpu.core_type = #tpu.core_type<tc>, window_params = [{transform_indices = @transform_0, window_bounds = array<i64: 512, 8>}, {pipeline_mode = #tpu.pipeline_mode<synchronous>, transform_indices = @transform_1, window_bounds = array<i64: 8, 128>}, {pipeline_mode = #tpu.pipeline_mode<synchronous>, transform_indices = @transform_2, window_bounds = array<i64: 1, 128>}, {pipeline_mode = #tpu.pipeline_mode<synchronous>, transform_indices = @transform_3, window_bounds = array<i64: 16, 8>}, {pipeline_mode = #tpu.pipeline_mode<synchronous>, transform_indices = @transform_4, window_bounds = array<i64: 1, 8>}, {transform_indices = @transform_5, window_bounds = array<i64: 512, 128>}]} {
    %c0 = arith.constant 0 : index
    %c0_0 = arith.constant 0 : index
    %0 = vector.load %arg1[%c0, %c0_0] : memref<512x8xf32, #tpu.memory_space<vmem>>, vector<512x8xf32>
    %c0_1 = arith.constant 0 : index
    %c0_2 = arith.constant 0 : index
    %1 = vector.load %arg2[%c0_1, %c0_2] : memref<8x128xf32, #tpu.memory_space<vmem>>, vector<8x128xf32>
    %cst = arith.constant dense<0.000000e+00> : vector<512x128xf32>
    %2 = tpu.matmul %0, %1, %cst {dimension_numbers = #tpu.dot_dimension_numbers<[1], [0], [0], [1], [0, 0, 1, 1], [], []>} : vector<512x8xf32>, vector<8x128xf32>, vector<512x128xf32> -> vector<512x128xf32>
    %c0_3 = arith.constant 0 : index
    %c0_4 = arith.constant 0 : index
    %3 = vector.load %arg3[%c0_3, %c0_4] : memref<1x128xf32, #tpu.memory_space<vmem>>, vector<1x128xf32>
    %4 = vector.broadcast %3 : vector<1x128xf32> to vector<512x128xf32>
    %5 = arith.addf %2, %4 : vector<512x128xf32>
    %6 = arith.negf %5 : vector<512x128xf32>
    %7 = math.exp %6 : vector<512x128xf32>
    %cst_5 = arith.constant 1.000000e+00 : f32
    %8 = vector.broadcast %cst_5 : f32 to vector<512x128xf32>
    %9 = arith.addf %8, %7 : vector<512x128xf32>
    %10 = arith.divf %8, %9 : vector<512x128xf32>
    %c0_6 = arith.constant 0 : index
    %c0_7 = arith.constant 0 : index
    %11 = vector.load %arg5[%c0_6, %c0_7] : memref<1x8xf32, #tpu.memory_space<vmem>>, vector<1x8xf32>
    %12 = vector.extract_strided_slice %10 {offsets = [0, 0], sizes = [512, 8], strides = [1, 1]} : vector<512x128xf32> to vector<512x8xf32>
    %c0_8 = arith.constant 0 : index
    %c0_9 = arith.constant 0 : index
    %13 = vector.load %arg4[%c0_8, %c0_9] : memref<16x8xf32, #tpu.memory_space<vmem>>, vector<1x8xf32>
    %14 = vector.broadcast %13 : vector<1x8xf32> to vector<512x8xf32>
    %15 = arith.mulf %12, %14 : vector<512x8xf32>
    %16 = vector.broadcast %11 : vector<1x8xf32> to vector<512x8xf32>
    %17 = arith.addf %16, %15 : vector<512x8xf32>
    %18 = vector.extract_strided_slice %10 {offsets = [0, 8], sizes = [512, 8], strides = [1, 1]} : vector<512x128xf32> to vector<512x8xf32>
    %c1 = arith.constant 1 : index
    %c0_10 = arith.constant 0 : index
    %19 = vector.load %arg4[%c1, %c0_10] : memref<16x8xf32, #tpu.memory_space<vmem>>, vector<1x8xf32>
    %20 = vector.broadcast %19 : vector<1x8xf32> to vector<512x8xf32>
    %21 = arith.mulf %18, %20 : vector<512x8xf32>
    %22 = arith.addf %17, %21 : vector<512x8xf32>
    %23 = vector.extract_strided_slice %10 {offsets = [0, 16], sizes = [512, 8], strides = [1, 1]} : vector<512x128xf32> to vector<512x8xf32>
    %c2 = arith.constant 2 : index
    %c0_11 = arith.constant 0 : index
    %24 = vector.load %arg4[%c2, %c0_11] : memref<16x8xf32, #tpu.memory_space<vmem>>, vector<1x8xf32>
    %25 = vector.broadcast %24 : vector<1x8xf32> to vector<512x8xf32>
    %26 = arith.mulf %23, %25 : vector<512x8xf32>
    %27 = arith.addf %22, %26 : vector<512x8xf32>
    %28 = vector.extract_strided_slice %10 {offsets = [0, 24], sizes = [512, 8], strides = [1, 1]} : vector<512x128xf32> to vector<512x8xf32>
    %c3 = arith.constant 3 : index
    %c0_12 = arith.constant 0 : index
    %29 = vector.load %arg4[%c3, %c0_12] : memref<16x8xf32, #tpu.memory_space<vmem>>, vector<1x8xf32>
    %30 = vector.broadcast %29 : vector<1x8xf32> to vector<512x8xf32>
    %31 = arith.mulf %28, %30 : vector<512x8xf32>
    %32 = arith.addf %27, %31 : vector<512x8xf32>
    %33 = vector.extract_strided_slice %10 {offsets = [0, 32], sizes = [512, 8], strides = [1, 1]} : vector<512x128xf32> to vector<512x8xf32>
    %c4 = arith.constant 4 : index
    %c0_13 = arith.constant 0 : index
    %34 = vector.load %arg4[%c4, %c0_13] : memref<16x8xf32, #tpu.memory_space<vmem>>, vector<1x8xf32>
    %35 = vector.broadcast %34 : vector<1x8xf32> to vector<512x8xf32>
    %36 = arith.mulf %33, %35 : vector<512x8xf32>
    %37 = arith.addf %32, %36 : vector<512x8xf32>
    %38 = vector.extract_strided_slice %10 {offsets = [0, 40], sizes = [512, 8], strides = [1, 1]} : vector<512x128xf32> to vector<512x8xf32>
    %c5 = arith.constant 5 : index
    %c0_14 = arith.constant 0 : index
    %39 = vector.load %arg4[%c5, %c0_14] : memref<16x8xf32, #tpu.memory_space<vmem>>, vector<1x8xf32>
    %40 = vector.broadcast %39 : vector<1x8xf32> to vector<512x8xf32>
    %41 = arith.mulf %38, %40 : vector<512x8xf32>
    %42 = arith.addf %37, %41 : vector<512x8xf32>
    %43 = vector.extract_strided_slice %10 {offsets = [0, 48], sizes = [512, 8], strides = [1, 1]} : vector<512x128xf32> to vector<512x8xf32>
    %c6 = arith.constant 6 : index
    %c0_15 = arith.constant 0 : index
    %44 = vector.load %arg4[%c6, %c0_15] : memref<16x8xf32, #tpu.memory_space<vmem>>, vector<1x8xf32>
    %45 = vector.broadcast %44 : vector<1x8xf32> to vector<512x8xf32>
    %46 = arith.mulf %43, %45 : vector<512x8xf32>
    %47 = arith.addf %42, %46 : vector<512x8xf32>
    %48 = vector.extract_strided_slice %10 {offsets = [0, 56], sizes = [512, 8], strides = [1, 1]} : vector<512x128xf32> to vector<512x8xf32>
    %c7 = arith.constant 7 : index
    %c0_16 = arith.constant 0 : index
    %49 = vector.load %arg4[%c7, %c0_16] : memref<16x8xf32, #tpu.memory_space<vmem>>, vector<1x8xf32>
    %50 = vector.broadcast %49 : vector<1x8xf32> to vector<512x8xf32>
    %51 = arith.mulf %48, %50 : vector<512x8xf32>
    %52 = arith.addf %47, %51 : vector<512x8xf32>
    %53 = vector.extract_strided_slice %10 {offsets = [0, 64], sizes = [512, 8], strides = [1, 1]} : vector<512x128xf32> to vector<512x8xf32>
    %c8 = arith.constant 8 : index
    %c0_17 = arith.constant 0 : index
    %54 = vector.load %arg4[%c8, %c0_17] : memref<16x8xf32, #tpu.memory_space<vmem>>, vector<1x8xf32>
    %55 = vector.broadcast %54 : vector<1x8xf32> to vector<512x8xf32>
    %56 = arith.mulf %53, %55 : vector<512x8xf32>
    %57 = arith.addf %52, %56 : vector<512x8xf32>
    %58 = vector.extract_strided_slice %10 {offsets = [0, 72], sizes = [512, 8], strides = [1, 1]} : vector<512x128xf32> to vector<512x8xf32>
    %c9 = arith.constant 9 : index
    %c0_18 = arith.constant 0 : index
    %59 = vector.load %arg4[%c9, %c0_18] : memref<16x8xf32, #tpu.memory_space<vmem>>, vector<1x8xf32>
    %60 = vector.broadcast %59 : vector<1x8xf32> to vector<512x8xf32>
    %61 = arith.mulf %58, %60 : vector<512x8xf32>
    %62 = arith.addf %57, %61 : vector<512x8xf32>
    %63 = vector.extract_strided_slice %10 {offsets = [0, 80], sizes = [512, 8], strides = [1, 1]} : vector<512x128xf32> to vector<512x8xf32>
    %c10 = arith.constant 10 : index
    %c0_19 = arith.constant 0 : index
    %64 = vector.load %arg4[%c10, %c0_19] : memref<16x8xf32, #tpu.memory_space<vmem>>, vector<1x8xf32>
    %65 = vector.broadcast %64 : vector<1x8xf32> to vector<512x8xf32>
    %66 = arith.mulf %63, %65 : vector<512x8xf32>
    %67 = arith.addf %62, %66 : vector<512x8xf32>
    %68 = vector.extract_strided_slice %10 {offsets = [0, 88], sizes = [512, 8], strides = [1, 1]} : vector<512x128xf32> to vector<512x8xf32>
    %c11 = arith.constant 11 : index
    %c0_20 = arith.constant 0 : index
    %69 = vector.load %arg4[%c11, %c0_20] : memref<16x8xf32, #tpu.memory_space<vmem>>, vector<1x8xf32>
    %70 = vector.broadcast %69 : vector<1x8xf32> to vector<512x8xf32>
    %71 = arith.mulf %68, %70 : vector<512x8xf32>
    %72 = arith.addf %67, %71 : vector<512x8xf32>
    %73 = vector.extract_strided_slice %10 {offsets = [0, 96], sizes = [512, 8], strides = [1, 1]} : vector<512x128xf32> to vector<512x8xf32>
    %c12 = arith.constant 12 : index
    %c0_21 = arith.constant 0 : index
    %74 = vector.load %arg4[%c12, %c0_21] : memref<16x8xf32, #tpu.memory_space<vmem>>, vector<1x8xf32>
    %75 = vector.broadcast %74 : vector<1x8xf32> to vector<512x8xf32>
    %76 = arith.mulf %73, %75 : vector<512x8xf32>
    %77 = arith.addf %72, %76 : vector<512x8xf32>
    %78 = vector.extract_strided_slice %10 {offsets = [0, 104], sizes = [512, 8], strides = [1, 1]} : vector<512x128xf32> to vector<512x8xf32>
    %c13 = arith.constant 13 : index
    %c0_22 = arith.constant 0 : index
    %79 = vector.load %arg4[%c13, %c0_22] : memref<16x8xf32, #tpu.memory_space<vmem>>, vector<1x8xf32>
    %80 = vector.broadcast %79 : vector<1x8xf32> to vector<512x8xf32>
    %81 = arith.mulf %78, %80 : vector<512x8xf32>
    %82 = arith.addf %77, %81 : vector<512x8xf32>
    %83 = vector.extract_strided_slice %10 {offsets = [0, 112], sizes = [512, 8], strides = [1, 1]} : vector<512x128xf32> to vector<512x8xf32>
    %c14 = arith.constant 14 : index
    %c0_23 = arith.constant 0 : index
    %84 = vector.load %arg4[%c14, %c0_23] : memref<16x8xf32, #tpu.memory_space<vmem>>, vector<1x8xf32>
    %85 = vector.broadcast %84 : vector<1x8xf32> to vector<512x8xf32>
    %86 = arith.mulf %83, %85 : vector<512x8xf32>
    %87 = arith.addf %82, %86 : vector<512x8xf32>
    %88 = vector.extract_strided_slice %10 {offsets = [0, 120], sizes = [512, 8], strides = [1, 1]} : vector<512x128xf32> to vector<512x8xf32>
    %c15 = arith.constant 15 : index
    %c0_24 = arith.constant 0 : index
    %89 = vector.load %arg4[%c15, %c0_24] : memref<16x8xf32, #tpu.memory_space<vmem>>, vector<1x8xf32>
    %90 = vector.broadcast %89 : vector<1x8xf32> to vector<512x8xf32>
    %91 = arith.mulf %88, %90 : vector<512x8xf32>
    %92 = arith.addf %87, %91 : vector<512x8xf32>
    %cst_25 = arith.constant 0.000000e+00 : f32
    %93 = vector.broadcast %cst_25 : f32 to vector<512x120xf32>
    %94 = tpu.concatenate %92, %93 in 1 : vector<512x8xf32>, vector<512x120xf32> -> vector<512x128xf32>
    %c0_26 = arith.constant 0 : index
    %c0_27 = arith.constant 0 : index
    %95 = vector.load %arg6[%c0_26, %c0_27] : memref<512x128xf32, #tpu.memory_space<vmem>>, vector<512x128xf32>
    tpu.vector_store %arg6[%c0_26, %c0_27], %94 {strides = array<i32>} : memref<512x128xf32, #tpu.memory_space<vmem>>, vector<512x128xf32>,
    return
  }
  func.func @transform_0(%arg0: i32) -> (i32, i32) {
    %c0_i32 = arith.constant 0 : i32
    %c0_i32_0 = arith.constant 0 : i32
    return %arg0, %c0_i32 : i32, i32
  }
  func.func @transform_1(%arg0: i32) -> (i32, i32) {
    %c0_i32 = arith.constant 0 : i32
    %c0_i32_0 = arith.constant 0 : i32
    %c0_i32_1 = arith.constant 0 : i32
    return %c0_i32, %c0_i32_0 : i32, i32
  }
  func.func @transform_2(%arg0: i32) -> (i32, i32) {
    %c0_i32 = arith.constant 0 : i32
    %c0_i32_0 = arith.constant 0 : i32
    %c0_i32_1 = arith.constant 0 : i32
    return %c0_i32, %c0_i32_0 : i32, i32
  }
  func.func @transform_3(%arg0: i32) -> (i32, i32) {
    %c0_i32 = arith.constant 0 : i32
    %c0_i32_0 = arith.constant 0 : i32
    %c0_i32_1 = arith.constant 0 : i32
    return %c0_i32, %c0_i32_0 : i32, i32
  }
  func.func @transform_4(%arg0: i32) -> (i32, i32) {
    %c0_i32 = arith.constant 0 : i32
    %c0_i32_0 = arith.constant 0 : i32
    %c0_i32_1 = arith.constant 0 : i32
    return %c0_i32, %c0_i32_0 : i32, i32
  }
  func.func @transform_5(%arg0: i32) -> (i32, i32) {
    %c0_i32 = arith.constant 0 : i32
    %c0_i32_0 = arith.constant 0 : i32
    return %arg0, %c0_i32 : i32, i32
  }
}

</mosaic_0001>

<llo_original>
// kernel: tpu_custom_call.1
$region0: #{tpu_custom_call.1}
  #allocation0 [shape = 'u32[]', space=smem, size = 0x4, offset = 0x4, fixed_abs, tag = 'smem constant byte address 0x4 - core index']
  #allocation1 [shape = 'u32[144,128]{1,0:T(1,128)}', space=vmem, size = 0x12000, scoped, tag = 'internal scratch']
  %s0 = inlined_call_operand.vmem [shape: f32[1024,8], index: 0, kind: input, shape index: {}]
  %s1 = inlined_call_operand.vmem [shape: f32[8,128], index: 1, kind: input, shape index: {}]
  %s2 = inlined_call_operand.vmem [shape: f32[1,128], index: 2, kind: input, shape index: {}]
  %s3 = inlined_call_operand.vmem [shape: f32[16,8], index: 3, kind: input, shape index: {}]
  %s4 = inlined_call_operand.vmem [shape: f32[1,8], index: 4, kind: input, shape index: {}]
  %s5 = inlined_call_operand.hbm [shape: f32[1024,128], index: 5, kind: output, shape index: {}]
  %s6 = sld [smem:[#allocation0]]
  $region53: #{tpu_custom_call.1} parent=0
    _
  %s8 = ssub.s32 1, %s6
  %s9 = scalar_select 0, %s8, %s6
  $region1: #{tpu_custom_call.1} parent=0
    #allocation2 [shape = 'u8[524288]{0}', space=vmem, size = 0x80000, scoped, tag = 'output window, operand 0']
    #allocation3 [shape = 's32[2]{0}', space=sflag, size = 0x8, scoped, tag = 'scoped memory for tpu_custom_call.1']
    %10 = vsyncpa [#allocation3], 0
    %s11 = scalar_lea.sflag [#allocation3], 1
    %12 = vsyncpa %s11, 0
    loop: start=0, step=1, limit=4
    $region2: #{tpu_custom_call.1} parent=1 // loop_pre_header
      _
    $region3: #{tpu_custom_call.1} parent=1 // loop_header
      %s14 = sphi 0, %s18
      %p15 = scmp.ge.s32.totalorder %s14, 4
      %s24 = sphi 0, %s26
      %s27 = sphi 0, %s24
      %s28 = sphi 0, %s27
      %s44 = sphi 0, %s28
      %s48 = sphi 0, %s48
      %s50 = sphi 0, %s48
      %s51 = sphi 0, %s50
      %s65 = sphi 0, %s51
      %s69 = sphi 0, %s69
      %s71 = sphi 0, %s69
      %s72 = sphi 0, %s71
      %s86 = sphi 0, %s72
      %s90 = sphi 0, %s90
      %s92 = sphi 0, %s90
      %s93 = sphi 0, %s92
      %s107 = sphi 0, %s93
      %s111 = sphi 0, %s111
      %s113 = sphi 0, %s111
      %s114 = sphi 0, %s113
      %s128 = sphi 0, %s114
      %s134 = sphi 0, %s136
      %s137 = sphi 0, %s134
      %s138 = sphi 0, %s137
      %s154 = sphi 0, %s138
    $region4: #{tpu_custom_call.1} parent=1 // loop_header_branch
      %17 = sbr.rel (%p15) target = $region8
    $region5: #{tpu_custom_call.1} parent=1 // loop_body
      %s19 = ssub.s32 %s14, 1
      %s20 = ssub.s32 %s14, 2
      %s21 = sadd.s32 %s14, 1
      %s22 = ssub.s32 %s14, %s21
      %p23 = scmp.eq.s32.totalorder %s22, 0
      %s25 = sadd.s32 %s24, 1
      %s26 = scalar_select %p23, %s24, %s25
      %p29 = pneg %p23
      %p30 = scmp.eq.s32.totalorder %s14, 1
      %p31 = por %p29, %p30
      %p32 = scmp.ne.s32.totalorder %s24, %s27
      %p33 = scmp.eq.s32.totalorder %s14, 0
      %p34 = por %p32, %p33
      %p35 = scmp.ne.s32.totalorder %s24, %s27
      %p36 = scmp.eq.s32.totalorder %s19, 1
      %p37 = por %p35, %p36
      %p38 = scmp.ne.s32.totalorder %s27, %s28
      %p39 = scmp.eq.s32.totalorder %s19, 0
      %p40 = por %p38, %p39
      %p41 = scmp.ne.s32.totalorder %s27, %s28
      %p42 = scmp.eq.s32.totalorder %s20, 1
      %p43 = por %p41, %p42
      %p45 = scmp.ne.s32.totalorder %s28, %s44
      %p46 = scmp.eq.s32.totalorder %s20, 0
      %p47 = por %p45, %p46
      %s49 = sadd.s32 %s48, 1
      %p52 = scmp.eq.s32.totalorder %s14, 1
      %p53 = scmp.ne.s32.totalorder %s48, %s50
      %p54 = scmp.eq.s32.totalorder %s14, 0
      %p55 = por %p53, %p54
      %p56 = scmp.ne.s32.totalorder %s48, %s50
      %p57 = scmp.eq.s32.totalorder %s19, 1
      %p58 = por %p56, %p57
      %p59 = scmp.ne.s32.totalorder %s50, %s51
      %p60 = scmp.eq.s32.totalorder %s19, 0
      %p61 = por %p59, %p60
      %p62 = scmp.ne.s32.totalorder %s50, %s51
      %p63 = scmp.eq.s32.totalorder %s20, 1
      %p64 = por %p62, %p63
      %p66 = scmp.ne.s32.totalorder %s51, %s65
      %p67 = scmp.eq.s32.totalorder %s20, 0
      %p68 = por %p66, %p67
      %s70 = sadd.s32 %s69, 1
      %p73 = scmp.eq.s32.totalorder %s14, 1
      %p74 = scmp.ne.s32.totalorder %s69, %s71
      %p75 = scmp.eq.s32.totalorder %s14, 0
      %p76 = por %p74, %p75
      %p77 = scmp.ne.s32.totalorder %s69, %s71
      %p78 = scmp.eq.s32.totalorder %s19, 1
      %p79 = por %p77, %p78
      %p80 = scmp.ne.s32.totalorder %s71, %s72
      %p81 = scmp.eq.s32.totalorder %s19, 0
      %p82 = por %p80, %p81
      %p83 = scmp.ne.s32.totalorder %s71, %s72
      %p84 = scmp.eq.s32.totalorder %s20, 1
      %p85 = por %p83, %p84
      %p87 = scmp.ne.s32.totalorder %s72, %s86
      %p88 = scmp.eq.s32.totalorder %s20, 0
      %p89 = por %p87, %p88
      %s91 = sadd.s32 %s90, 1
      %p94 = scmp.eq.s32.totalorder %s14, 1
      %p95 = scmp.ne.s32.totalorder %s90, %s92
      %p96 = scmp.eq.s32.totalorder %s14, 0
      %p97 = por %p95, %p96
      %p98 = scmp.ne.s32.totalorder %s90, %s92
      %p99 = scmp.eq.s32.totalorder %s19, 1
      %p100 = por %p98, %p99
      %p101 = scmp.ne.s32.totalorder %s92, %s93
      %p102 = scmp.eq.s32.totalorder %s19, 0
      %p103 = por %p101, %p102
      %p104 = scmp.ne.s32.totalorder %s92, %s93
      %p105 = scmp.eq.s32.totalorder %s20, 1
      %p106 = por %p104, %p105
      %p108 = scmp.ne.s32.totalorder %s93, %s107
      %p109 = scmp.eq.s32.totalorder %s20, 0
      %p110 = por %p108, %p109
      %s112 = sadd.s32 %s111, 1
      %p115 = scmp.eq.s32.totalorder %s14, 1
      %p116 = scmp.ne.s32.totalorder %s111, %s113
      %p117 = scmp.eq.s32.totalorder %s14, 0
      %p118 = por %p116, %p117
      %p119 = scmp.ne.s32.totalorder %s111, %s113
      %p120 = scmp.eq.s32.totalorder %s19, 1
      %p121 = por %p119, %p120
      %p122 = scmp.ne.s32.totalorder %s113, %s114
      %p123 = scmp.eq.s32.totalorder %s19, 0
      %p124 = por %p122, %p123
      %p125 = scmp.ne.s32.totalorder %s113, %s114
      %p126 = scmp.eq.s32.totalorder %s20, 1
      %p127 = por %p125, %p126
      %p129 = scmp.ne.s32.totalorder %s114, %s128
      %p130 = scmp.eq.s32.totalorder %s20, 0
      %p131 = por %p129, %p130
      %s132 = ssub.s32 %s14, %s21
      %p133 = scmp.eq.s32.totalorder %s132, 0
      %s135 = sadd.s32 %s134, 1
      %s136 = scalar_select %p133, %s134, %s135
      %p139 = pneg %p133
      %p140 = scmp.eq.s32.totalorder %s14, 1
      %p141 = por %p139, %p140
      %p142 = scmp.ne.s32.totalorder %s134, %s137
      %p143 = scmp.eq.s32.totalorder %s14, 0
      %p144 = por %p142, %p143
      %p145 = scmp.ne.s32.totalorder %s134, %s137
      %p146 = scmp.eq.s32.totalorder %s19, 1
      %p147 = por %p145, %p146
      %p148 = scmp.ne.s32.totalorder %s137, %s138
      %p149 = scmp.eq.s32.totalorder %s19, 0
      %p150 = por %p148, %p149
      %p151 = scmp.ne.s32.totalorder %s137, %s138
      %p152 = scmp.eq.s32.totalorder %s20, 1
      %p153 = por %p151, %p152
      %p155 = scmp.ne.s32.totalorder %s138, %s154
      %p156 = scmp.eq.s32.totalorder %s20, 0
      %p157 = por %p155, %p156
      %p158 = scmp.le.s32.totalorder 1, %s14
      %p159 = scmp.lt.s32.totalorder %s14, 3
      %p160 = pnand %p158, %p159
      %p161 = pneg %p160
      // Predicated region
      $region9: #{tpu_custom_call.1} parent=5 // pred_check
        _
      $region10: #{tpu_custom_call.1} parent=5 // pred_check_branch
        %163 = sbr.rel (%p160) target = $region12
      $region11: #{tpu_custom_call.1} parent=5 // pred_region
        %s164 = ssub.s32 %s14, 1
        // Predicated region
        $region13: #{tpu_custom_call.1} parent=11 // pred_check
          %p165 = pneg %p61
        $region14: #{tpu_custom_call.1} parent=11 // pred_check_branch
          %167 = sbr.rel (%p165) target = $region16
        $region15: #{tpu_custom_call.1} parent=11 // pred_region
          _
        $region16: #{tpu_custom_call.1} parent=11 // pred_fallthru
          _
        // Predicated region
        $region17: #{tpu_custom_call.1} parent=11 // pred_check
          %p168 = pneg %p82
        $region18: #{tpu_custom_call.1} parent=11 // pred_check_branch
          %170 = sbr.rel (%p168) target = $region20
        $region19: #{tpu_custom_call.1} parent=11 // pred_region
          _
        $region20: #{tpu_custom_call.1} parent=11 // pred_fallthru
          _
        // Predicated region
        $region21: #{tpu_custom_call.1} parent=11 // pred_check
          %p171 = pneg %p103
        $region22: #{tpu_custom_call.1} parent=11 // pred_check_branch
          %173 = sbr.rel (%p171) target = $region24
        $region23: #{tpu_custom_call.1} parent=11 // pred_region
          _
        $region24: #{tpu_custom_call.1} parent=11 // pred_fallthru
          _
        // Predicated region
        $region25: #{tpu_custom_call.1} parent=11 // pred_check
          %p174 = pneg %p124
        $region26: #{tpu_custom_call.1} parent=11 // pred_check_branch
          %176 = sbr.rel (%p174) target = $region28
        $region27: #{tpu_custom_call.1} parent=11 // pred_region
          _
        $region28: #{tpu_custom_call.1} parent=11 // pred_fallthru
          _
      $region12: #{tpu_custom_call.1} parent=5 // pred_fallthru
        _
      %p177 = scmp.lt.s32.totalorder %s14, 2
      // Predicated region
      $region29: #{tpu_custom_call.1} parent=5 // pred_check
        %p178 = pneg %p177
      $region30: #{tpu_custom_call.1} parent=5 // pred_check_branch
        %180 = sbr.rel (%p178) target = $region32
      $region31: #{tpu_custom_call.1} parent=5 // pred_region
        // Predicated region
        $region33: #{tpu_custom_call.1} parent=31 // pred_check
          %p181 = pneg %p34
        $region34: #{tpu_custom_call.1} parent=31 // pred_check_branch
          %183 = sbr.rel (%p181) target = $region36
        $region35: #{tpu_custom_call.1} parent=31 // pred_region
          %s184 = smul.u32 64, %s14
          %p185 = scmp.lt.s32.totalorder %s184, 127
          %s186 = scalar_select %p185, %s184, 127
          %s187 = smul.addr %s186, 8
          %s188 = scalar_lea.vmem %s0, %s187
          %s189 = smul.u32 64, %s14
        $region36: #{tpu_custom_call.1} parent=31 // pred_fallthru
          _
      $region32: #{tpu_custom_call.1} parent=5 // pred_fallthru
        _
      %p190 = scmp.le.s32.totalorder 1, %s14
      %p191 = scmp.lt.s32.totalorder %s14, 3
      %p192 = pnand %p190, %p191
      %p193 = pneg %p192
      // Predicated region
      $region37: #{tpu_custom_call.1} parent=5 // pred_check
        _
      $region38: #{tpu_custom_call.1} parent=5 // pred_check_branch
        %195 = sbr.rel (%p192) target = $region40
      $region39: #{tpu_custom_call.1} parent=5 // pred_region
        %s196 = ssub.s32 %s14, 1
        %s197 = smul.u32 64, %s19
        %p198 = scmp.lt.s32.totalorder %s197, 127
        %s199 = scalar_select %p198, %s197, 127
        %s200 = smul.addr %s199, 8
        %s201 = scalar_lea.vmem %s0, %s200
        %p202 = pneg %p40
        %p203 = pneg %p37
        %p204 = pneg %p61
        %p205 = pneg %p58
        %p206 = pneg %p82
        %p207 = pneg %p79
        %p208 = pneg %p103
        %p209 = pneg %p100
        %p210 = pneg %p124
        %p211 = pneg %p121
        %p212 = pneg %p150
        %p213 = pneg %p147
        %s214 = sand.u32 %s137, 1
        %s215 = scalar_lea.sflag [#allocation3], %s214
        %s216 = sand.u32 %s137, 1
        %s217 = smul.addr %s216, 512
        %s218 = scalar_lea.vmem [#allocation2], %s217
        %s219 = smul.u32 64, %s19
        %p220 = scmp.lt.s32.totalorder %s219, 127
        %s221 = scalar_select %p220, %s219, 127
        %s222 = smul.addr %s221, 8
        %s223 = scalar_lea.vmem %s0, %s222
        %s224 = smul.u32 64, %s19
        %s225 = smul.u32 64, %s19
        %v226 = vld [vmem:[%s223] sm:$0xff]
        %v227 = vld [vmem:[%s223 + $0x8] sm:$0xff]
        %v228 = vld [vmem:[%s223 + $0x10] sm:$0xff]
        %v229 = vld [vmem:[%s223 + $0x18] sm:$0xff]
        %v230 = vld [vmem:[%s223 + $0x20] sm:$0xff]
        %v231 = vld [vmem:[%s223 + $0x28] sm:$0xff]
        %v232 = vld [vmem:[%s223 + $0x30] sm:$0xff]
        %v233 = vld [vmem:[%s223 + $0x38] sm:$0xff]
        %v234 = vld [vmem:[%s223 + $0x40] sm:$0xff]
        %v235 = vld [vmem:[%s223 + $0x48] sm:$0xff]
        %v236 = vld [vmem:[%s223 + $0x50] sm:$0xff]
        %v237 = vld [vmem:[%s223 + $0x58] sm:$0xff]
        %v238 = vld [vmem:[%s223 + $0x60] sm:$0xff]
        %v239 = vld [vmem:[%s223 + $0x68] sm:$0xff]
        %v240 = vld [vmem:[%s223 + $0x70] sm:$0xff]
        %v241 = vld [vmem:[%s223 + $0x78] sm:$0xff]
        %v242 = vld [vmem:[%s223 + $0x80] sm:$0xff]
        %v243 = vld [vmem:[%s223 + $0x88] sm:$0xff]
        %v244 = vld [vmem:[%s223 + $0x90] sm:$0xff]
        %v245 = vld [vmem:[%s223 + $0x98] sm:$0xff]
        %v246 = vld [vmem:[%s223 + $0xa0] sm:$0xff]
        %v247 = vld [vmem:[%s223 + $0xa8] sm:$0xff]
        %v248 = vld [vmem:[%s223 + $0xb0] sm:$0xff]
        %v249 = vld [vmem:[%s223 + $0xb8] sm:$0xff]
        %v250 = vld [vmem:[%s223 + $0xc0] sm:$0xff]
        %v251 = vld [vmem:[%s223 + $0xc8] sm:$0xff]
        %v252 = vld [vmem:[%s223 + $0xd0] sm:$0xff]
        %v253 = vld [vmem:[%s223 + $0xd8] sm:$0xff]
        %v254 = vld [vmem:[%s223 + $0xe0] sm:$0xff]
        %v255 = vld [vmem:[%s223 + $0xe8] sm:$0xff]
        %v256 = vld [vmem:[%s223 + $0xf0] sm:$0xff]
        %v257 = vld [vmem:[%s223 + $0xf8] sm:$0xff]
        %v258 = vld [vmem:[%s223 + $0x100] sm:$0xff]
        %v259 = vld [vmem:[%s223 + $0x108] sm:$0xff]
        %v260 = vld [vmem:[%s223 + $0x110] sm:$0xff]
        %v261 = vld [vmem:[%s223 + $0x118] sm:$0xff]
        %v262 = vld [vmem:[%s223 + $0x120] sm:$0xff]
        %v263 = vld [vmem:[%s223 + $0x128] sm:$0xff]
        %v264 = vld [vmem:[%s223 + $0x130] sm:$0xff]
        %v265 = vld [vmem:[%s223 + $0x138] sm:$0xff]
        %v266 = vld [vmem:[%s223 + $0x140] sm:$0xff]
        %v267 = vld [vmem:[%s223 + $0x148] sm:$0xff]
        %v268 = vld [vmem:[%s223 + $0x150] sm:$0xff]
        %v269 = vld [vmem:[%s223 + $0x158] sm:$0xff]
        %v270 = vld [vmem:[%s223 + $0x160] sm:$0xff]
        %v271 = vld [vmem:[%s223 + $0x168] sm:$0xff]
        %v272 = vld [vmem:[%s223 + $0x170] sm:$0xff]
        %v273 = vld [vmem:[%s223 + $0x178] sm:$0xff]
        %v274 = vld [vmem:[%s223 + $0x180] sm:$0xff]
        %v275 = vld [vmem:[%s223 + $0x188] sm:$0xff]
        %v276 = vld [vmem:[%s223 + $0x190] sm:$0xff]
        %v277 = vld [vmem:[%s223 + $0x198] sm:$0xff]
        %v278 = vld [vmem:[%s223 + $0x1a0] sm:$0xff]
        %v279 = vld [vmem:[%s223 + $0x1a8] sm:$0xff]
        %v280 = vld [vmem:[%s223 + $0x1b0] sm:$0xff]
        %v281 = vld [vmem:[%s223 + $0x1b8] sm:$0xff]
        %v282 = vld [vmem:[%s223 + $0x1c0] sm:$0xff]
        %v283 = vld [vmem:[%s223 + $0x1c8] sm:$0xff]
        %v284 = vld [vmem:[%s223 + $0x1d0] sm:$0xff]
        %v285 = vld [vmem:[%s223 + $0x1d8] sm:$0xff]
        %v286 = vld [vmem:[%s223 + $0x1e0] sm:$0xff]
        %v287 = vld [vmem:[%s223 + $0x1e8] sm:$0xff]
        %v288 = vld [vmem:[%s223 + $0x1f0] sm:$0xff]
        %v289 = vld [vmem:[%s223 + $0x1f8] sm:$0xff]
        %v290 = vld [vmem:[%s1] sm:$0xff]
        %v291 = vld [vmem:[%s2] sm:$0x1]
        %v293 = vlaneseq
        %v294 = vshrl.u32 %v293, 7
        %v295 = vsub.s32 0, %v294
        %v296 = vrot.slane %v291, %v295
        %vm298 = vcmask 64512
        %v300 = vsel %vm298, %v226, 0
        %v303 = vsel %vm298, %v227, 0
        %v306 = vsel %vm298, %v228, 0
        %v309 = vsel %vm298, %v229, 0
        %v312 = vsel %vm298, %v230, 0
        %v315 = vsel %vm298, %v231, 0
        %v318 = vsel %vm298, %v232, 0
        %v321 = vsel %vm298, %v233, 0
        %v324 = vsel %vm298, %v234, 0
        %v327 = vsel %vm298, %v235, 0
        %v330 = vsel %vm298, %v236, 0
        %v333 = vsel %vm298, %v237, 0
        %v336 = vsel %vm298, %v238, 0
        %v339 = vsel %vm298, %v239, 0
        %v342 = vsel %vm298, %v240, 0
        %v345 = vsel %vm298, %v241, 0
        %v348 = vsel %vm298, %v242, 0
        %v351 = vsel %vm298, %v243, 0
        %v354 = vsel %vm298, %v244, 0
        %v357 = vsel %vm298, %v245, 0
        %v360 = vsel %vm298, %v246, 0
        %v363 = vsel %vm298, %v247, 0
        %v366 = vsel %vm298, %v248, 0
        %v369 = vsel %vm298, %v249, 0
        %v372 = vsel %vm298, %v250, 0
        %v375 = vsel %vm298, %v251, 0
        %v378 = vsel %vm298, %v252, 0
        %v381 = vsel %vm298, %v253, 0
        %v384 = vsel %vm298, %v254, 0
        %v387 = vsel %vm298, %v255, 0
        %v390 = vsel %vm298, %v256, 0
        %v393 = vsel %vm298, %v257, 0
        %v396 = vsel %vm298, %v258, 0
        %v399 = vsel %vm298, %v259, 0
        %v402 = vsel %vm298, %v260, 0
        %v405 = vsel %vm298, %v261, 0
        %v408 = vsel %vm298, %v262, 0
        %v411 = vsel %vm298, %v263, 0
        %v414 = vsel %vm298, %v264, 0
        %v417 = vsel %vm298, %v265, 0
        %v420 = vsel %vm298, %v266, 0
        %v423 = vsel %vm298, %v267, 0
        %v426 = vsel %vm298, %v268, 0
        %v429 = vsel %vm298, %v269, 0
        %v432 = vsel %vm298, %v270, 0
        %v435 = vsel %vm298, %v271, 0
        %v438 = vsel %vm298, %v272, 0
        %v441 = vsel %vm298, %v273, 0
        %v444 = vsel %vm298, %v274, 0
        %v447 = vsel %vm298, %v275, 0
        %v450 = vsel %vm298, %v276, 0
        %v453 = vsel %vm298, %v277, 0
        %v456 = vsel %vm298, %v278, 0
        %v459 = vsel %vm298, %v279, 0
        %v462 = vsel %vm298, %v280, 0
        %v465 = vsel %vm298, %v281, 0
        %v468 = vsel %vm298, %v282, 0
        %v471 = vsel %vm298, %v283, 0
        %v474 = vsel %vm298, %v284, 0
        %v477 = vsel %vm298, %v285, 0
        %v480 = vsel %vm298, %v286, 0
        %v483 = vsel %vm298, %v287, 0
        %v486 = vsel %vm298, %v288, 0
        %v489 = vsel %vm298, %v289, 0
        %491 = vmatprep.subr.mxu0 0.0
        %492 = vmatpush1.msra.mxu0 0.0
        %493 = vmatprep.subr.mxu0 0.0
        %494 = vmatpush1.msra.mxu0 0.0
        %495 = vmatprep.subr.mxu0 0.0
        %496 = vmatpush1.msra.mxu0 0.0
        %497 = vmatprep.subr.mxu0 0.0
        %498 = vmatpush1.msra.mxu0 0.0
        %499 = vmatprep.subr.mxu0 0.0
        %500 = vmatpush1.msra.mxu0 0.0
        %501 = vmatprep.subr.mxu0 0.0
        %502 = vmatpush1.msra.mxu0 0.0
        %503 = vmatprep.subr.mxu0 0.0
        %504 = vmatpush1.msra.mxu0 0.0
        %505 = vmatprep.subr.mxu0 0.0
        %506 = vmatpush1.msra.mxu0 0.0
        %507 = vmatprep.subr.mxu0 0.0
        %508 = vmatpush1.msra.mxu0 0.0
        %509 = vmatprep.subr.mxu0 0.0
        %510 = vmatpush1.msra.mxu0 0.0
        %511 = vmatprep.subr.mxu0 0.0
        %512 = vmatpush1.msra.mxu0 0.0
        %513 = vmatprep.subr.mxu0 0.0
        %514 = vmatpush1.msra.mxu0 0.0
        %515 = vmatprep.subr.mxu0 0.0
        %516 = vmatpush1.msra.mxu0 0.0
        %517 = vmatprep.subr.mxu0 0.0
        %518 = vmatpush1.msra.mxu0 0.0
        %519 = vmatprep.subr.mxu0 0.0
        %520 = vmatpush1.msra.mxu0 0.0
        %521 = vmatprep.subr.mxu0 0.0
        %522 = vmatpush1.msra.mxu0 %v290
        %523 = vmatprep.subr.mxu0 0.0
        %524 = vmatpush2.msra.mxu0 0.0
        %525 = vmatprep.subr.mxu0 0.0
        %526 = vmatpush2.msra.mxu0 0.0
        %527 = vmatprep.subr.mxu0 0.0
        %528 = vmatpush2.msra.mxu0 0.0
        %529 = vmatprep.subr.mxu0 0.0
        %530 = vmatpush2.msra.mxu0 0.0
        %531 = vmatprep.subr.mxu0 0.0
        %532 = vmatpush2.msra.mxu0 0.0
        %533 = vmatprep.subr.mxu0 0.0
        %534 = vmatpush2.msra.mxu0 0.0
        %535 = vmatprep.subr.mxu0 0.0
        %536 = vmatpush2.msra.mxu0 0.0
        %537 = vmatprep.subr.mxu0 0.0
        %538 = vmatpush2.msra.mxu0 0.0
        %539 = vmatprep.subr.mxu0 0.0
        %540 = vmatpush2.msra.mxu0 0.0
        %541 = vmatprep.subr.mxu0 0.0
        %542 = vmatpush2.msra.mxu0 0.0
        %543 = vmatprep.subr.mxu0 0.0
        %544 = vmatpush2.msra.mxu0 0.0
        %545 = vmatprep.subr.mxu0 0.0
        %546 = vmatpush2.msra.mxu0 0.0
        %547 = vmatprep.subr.mxu0 0.0
        %548 = vmatpush2.msra.mxu0 0.0
        %549 = vmatprep.subr.mxu0 0.0
        %550 = vmatpush2.msra.mxu0 0.0
        %551 = vmatprep.subr.mxu0 0.0
        %552 = vmatpush2.msra.mxu0 0.0
        %553 = vmatprep.subr.mxu0 0.0
        %554 = vmatpush2.msra.mxu0 0.0
        %555 = vmatprep.mubr.f32.mxu0 0.0
        %556 = vmatmul.mubr.f32.gmra.mxu0 %v300
        %v557 = vpop.f32.mrf.mxu0
        %v558 = vadd.f32 %v296, %v557
        %v559 = vpop.f32.mrf.mxu0
        %560 = vmatprep.mubr.f32.mxu0 0.0
        %561 = vmatmul.mubr.f32.gmra.mxu0 %v303
        %v562 = vpop.f32.mrf.mxu0
        %v563 = vadd.f32 %v296, %v562
        %v564 = vpop.f32.mrf.mxu0
        %565 = vmatprep.mubr.f32.mxu0 0.0
        %566 = vmatmul.mubr.f32.gmra.mxu0 %v306
        %v567 = vpop.f32.mrf.mxu0
        %v568 = vadd.f32 %v296, %v567
        %v569 = vpop.f32.mrf.mxu0
        %570 = vmatprep.mubr.f32.mxu0 0.0
        %571 = vmatmul.mubr.f32.gmra.mxu0 %v309
        %v572 = vpop.f32.mrf.mxu0
        %v573 = vadd.f32 %v296, %v572
        %v574 = vpop.f32.mrf.mxu0
        %575 = vmatprep.mubr.f32.mxu0 0.0
        %576 = vmatmul.mubr.f32.gmra.mxu0 %v312
        %v577 = vpop.f32.mrf.mxu0
        %v578 = vadd.f32 %v296, %v577
        %v579 = vpop.f32.mrf.mxu0
        %580 = vmatprep.mubr.f32.mxu0 0.0
        %581 = vmatmul.mubr.f32.gmra.mxu0 %v315
        %v582 = vpop.f32.mrf.mxu0
        %v583 = vadd.f32 %v296, %v582
        %v584 = vpop.f32.mrf.mxu0
        %585 = vmatprep.mubr.f32.mxu0 0.0
        %586 = vmatmul.mubr.f32.gmra.mxu0 %v318
        %v587 = vpop.f32.mrf.mxu0
        %v588 = vadd.f32 %v296, %v587
        %v589 = vpop.f32.mrf.mxu0
        %590 = vmatprep.mubr.f32.mxu0 0.0
        %591 = vmatmul.mubr.f32.gmra.mxu0 %v321
        %v592 = vpop.f32.mrf.mxu0
        %v593 = vadd.f32 %v296, %v592
        %v594 = vpop.f32.mrf.mxu0
        %595 = vmatprep.mubr.f32.mxu0 0.0
        %596 = vmatmul.mubr.f32.gmra.mxu0 %v324
        %v597 = vpop.f32.mrf.mxu0
        %v598 = vadd.f32 %v296, %v597
        %v599 = vpop.f32.mrf.mxu0
        %600 = vmatprep.mubr.f32.mxu0 0.0
        %601 = vmatmul.mubr.f32.gmra.mxu0 %v327
        %v602 = vpop.f32.mrf.mxu0
        %v603 = vadd.f32 %v296, %v602
        %v604 = vpop.f32.mrf.mxu0
        %605 = vmatprep.mubr.f32.mxu0 0.0
        %606 = vmatmul.mubr.f32.gmra.mxu0 %v330
        %v607 = vpop.f32.mrf.mxu0
        %v608 = vadd.f32 %v296, %v607
        %v609 = vpop.f32.mrf.mxu0
        %610 = vmatprep.mubr.f32.mxu0 0.0
        %611 = vmatmul.mubr.f32.gmra.mxu0 %v333
        %v612 = vpop.f32.mrf.mxu0
        %v613 = vadd.f32 %v296, %v612
        %v614 = vpop.f32.mrf.mxu0
        %615 = vmatprep.mubr.f32.mxu0 0.0
        %616 = vmatmul.mubr.f32.gmra.mxu0 %v336
        %v617 = vpop.f32.mrf.mxu0
        %v618 = vadd.f32 %v296, %v617
        %v619 = vpop.f32.mrf.mxu0
        %620 = vmatprep.mubr.f32.mxu0 0.0
        %621 = vmatmul.mubr.f32.gmra.mxu0 %v339
        %v622 = vpop.f32.mrf.mxu0
        %v623 = vadd.f32 %v296, %v622
        %v624 = vpop.f32.mrf.mxu0
        %625 = vmatprep.mubr.f32.mxu0 0.0
        %626 = vmatmul.mubr.f32.gmra.mxu0 %v342
        %v627 = vpop.f32.mrf.mxu0
        %v628 = vadd.f32 %v296, %v627
        %v629 = vpop.f32.mrf.mxu0
        %630 = vmatprep.mubr.f32.mxu0 0.0
        %631 = vmatmul.mubr.f32.gmra.mxu0 %v345
        %v632 = vpop.f32.mrf.mxu0
        %v633 = vadd.f32 %v296, %v632
        %v634 = vpop.f32.mrf.mxu0
        %635 = vmatprep.mubr.f32.mxu0 0.0
        %636 = vmatmul.mubr.f32.gmra.mxu0 %v348
        %v637 = vpop.f32.mrf.mxu0
        %v638 = vadd.f32 %v296, %v637
        %v639 = vpop.f32.mrf.mxu0
        %640 = vmatprep.mubr.f32.mxu0 0.0
        %641 = vmatmul.mubr.f32.gmra.mxu0 %v351
        %v642 = vpop.f32.mrf.mxu0
        %v643 = vadd.f32 %v296, %v642
        %v644 = vpop.f32.mrf.mxu0
        %645 = vmatprep.mubr.f32.mxu0 0.0
        %646 = vmatmul.mubr.f32.gmra.mxu0 %v354
        %v647 = vpop.f32.mrf.mxu0
        %v648 = vadd.f32 %v296, %v647
        %v649 = vpop.f32.mrf.mxu0
        %650 = vmatprep.mubr.f32.mxu0 0.0
        %651 = vmatmul.mubr.f32.gmra.mxu0 %v357
        %v652 = vpop.f32.mrf.mxu0
        %v653 = vadd.f32 %v296, %v652
        %v654 = vpop.f32.mrf.mxu0
        %655 = vmatprep.mubr.f32.mxu0 0.0
        %656 = vmatmul.mubr.f32.gmra.mxu0 %v360
        %v657 = vpop.f32.mrf.mxu0
        %v658 = vadd.f32 %v296, %v657
        %v659 = vpop.f32.mrf.mxu0
        %660 = vmatprep.mubr.f32.mxu0 0.0
        %661 = vmatmul.mubr.f32.gmra.mxu0 %v363
        %v662 = vpop.f32.mrf.mxu0
        %v663 = vadd.f32 %v296, %v662
        %v664 = vpop.f32.mrf.mxu0
        %665 = vmatprep.mubr.f32.mxu0 0.0
        %666 = vmatmul.mubr.f32.gmra.mxu0 %v366
        %v667 = vpop.f32.mrf.mxu0
        %v668 = vadd.f32 %v296, %v667
        %v669 = vpop.f32.mrf.mxu0
        %670 = vmatprep.mubr.f32.mxu0 0.0
        %671 = vmatmul.mubr.f32.gmra.mxu0 %v369
        %v672 = vpop.f32.mrf.mxu0
        %v673 = vadd.f32 %v296, %v672
        %v674 = vpop.f32.mrf.mxu0
        %675 = vmatprep.mubr.f32.mxu0 0.0
        %676 = vmatmul.mubr.f32.gmra.mxu0 %v372
        %v677 = vpop.f32.mrf.mxu0
        %v678 = vadd.f32 %v296, %v677
        %v679 = vpop.f32.mrf.mxu0
        %680 = vmatprep.mubr.f32.mxu0 0.0
        %681 = vmatmul.mubr.f32.gmra.mxu0 %v375
        %v682 = vpop.f32.mrf.mxu0
        %v683 = vadd.f32 %v296, %v682
        %v684 = vpop.f32.mrf.mxu0
        %685 = vmatprep.mubr.f32.mxu0 0.0
        %686 = vmatmul.mubr.f32.gmra.mxu0 %v378
        %v687 = vpop.f32.mrf.mxu0
        %v688 = vadd.f32 %v296, %v687
        %v689 = vpop.f32.mrf.mxu0
        %690 = vmatprep.mubr.f32.mxu0 0.0
        %691 = vmatmul.mubr.f32.gmra.mxu0 %v381
        %v692 = vpop.f32.mrf.mxu0
        %v693 = vadd.f32 %v296, %v692
        %v694 = vpop.f32.mrf.mxu0
        %695 = vmatprep.mubr.f32.mxu0 0.0
        %696 = vmatmul.mubr.f32.gmra.mxu0 %v384
        %v697 = vpop.f32.mrf.mxu0
        %v698 = vadd.f32 %v296, %v697
        %v699 = vpop.f32.mrf.mxu0
        %700 = vmatprep.mubr.f32.mxu0 0.0
        %701 = vmatmul.mubr.f32.gmra.mxu0 %v387
        %v702 = vpop.f32.mrf.mxu0
        %v703 = vadd.f32 %v296, %v702
        %v704 = vpop.f32.mrf.mxu0
        %705 = vmatprep.mubr.f32.mxu0 0.0
        %706 = vmatmul.mubr.f32.gmra.mxu0 %v390
        %v707 = vpop.f32.mrf.mxu0
        %v708 = vadd.f32 %v296, %v707
        %v709 = vpop.f32.mrf.mxu0
        %710 = vmatprep.mubr.f32.mxu0 0.0
        %711 = vmatmul.mubr.f32.gmra.mxu0 %v393
        %v712 = vpop.f32.mrf.mxu0
        %v713 = vadd.f32 %v296, %v712
        %v714 = vpop.f32.mrf.mxu0
        %715 = vmatprep.mubr.f32.mxu0 0.0
        %716 = vmatmul.mubr.f32.gmra.mxu0 %v396
        %v717 = vpop.f32.mrf.mxu0
        %v718 = vadd.f32 %v296, %v717
        %v719 = vpop.f32.mrf.mxu0
        %720 = vmatprep.mubr.f32.mxu0 0.0
        %721 = vmatmul.mubr.f32.gmra.mxu0 %v399
        %v722 = vpop.f32.mrf.mxu0
        %v723 = vadd.f32 %v296, %v722
        %v724 = vpop.f32.mrf.mxu0
        %725 = vmatprep.mubr.f32.mxu0 0.0
        %726 = vmatmul.mubr.f32.gmra.mxu0 %v402
        %v727 = vpop.f32.mrf.mxu0
        %v728 = vadd.f32 %v296, %v727
        %v729 = vpop.f32.mrf.mxu0
        %730 = vmatprep.mubr.f32.mxu0 0.0
        %731 = vmatmul.mubr.f32.gmra.mxu0 %v405
        %v732 = vpop.f32.mrf.mxu0
        %v733 = vadd.f32 %v296, %v732
        %v734 = vpop.f32.mrf.mxu0
        %735 = vmatprep.mubr.f32.mxu0 0.0
        %736 = vmatmul.mubr.f32.gmra.mxu0 %v408
        %v737 = vpop.f32.mrf.mxu0
        %v738 = vadd.f32 %v296, %v737
        %v739 = vpop.f32.mrf.mxu0
        %740 = vmatprep.mubr.f32.mxu0 0.0
        %741 = vmatmul.mubr.f32.gmra.mxu0 %v411
        %v742 = vpop.f32.mrf.mxu0
        %v743 = vadd.f32 %v296, %v742
        %v744 = vpop.f32.mrf.mxu0
        %745 = vmatprep.mubr.f32.mxu0 0.0
        %746 = vmatmul.mubr.f32.gmra.mxu0 %v414
        %v747 = vpop.f32.mrf.mxu0
        %v748 = vadd.f32 %v296, %v747
        %v749 = vpop.f32.mrf.mxu0
        %750 = vmatprep.mubr.f32.mxu0 0.0
        %751 = vmatmul.mubr.f32.gmra.mxu0 %v417
        %v752 = vpop.f32.mrf.mxu0
        %v753 = vadd.f32 %v296, %v752
        %v754 = vpop.f32.mrf.mxu0
        %755 = vmatprep.mubr.f32.mxu0 0.0
        %756 = vmatmul.mubr.f32.gmra.mxu0 %v420
        %v757 = vpop.f32.mrf.mxu0
        %v758 = vadd.f32 %v296, %v757
        %v759 = vpop.f32.mrf.mxu0
        %760 = vmatprep.mubr.f32.mxu0 0.0
        %761 = vmatmul.mubr.f32.gmra.mxu0 %v423
        %v762 = vpop.f32.mrf.mxu0
        %v763 = vadd.f32 %v296, %v762
        %v764 = vpop.f32.mrf.mxu0
        %765 = vmatprep.mubr.f32.mxu0 0.0
        %766 = vmatmul.mubr.f32.gmra.mxu0 %v426
        %v767 = vpop.f32.mrf.mxu0
        %v768 = vadd.f32 %v296, %v767
        %v769 = vpop.f32.mrf.mxu0
        %770 = vmatprep.mubr.f32.mxu0 0.0
        %771 = vmatmul.mubr.f32.gmra.mxu0 %v429
        %v772 = vpop.f32.mrf.mxu0
        %v773 = vadd.f32 %v296, %v772
        %v774 = vpop.f32.mrf.mxu0
        %775 = vmatprep.mubr.f32.mxu0 0.0
        %776 = vmatmul.mubr.f32.gmra.mxu0 %v432
        %v777 = vpop.f32.mrf.mxu0
        %v778 = vadd.f32 %v296, %v777
        %v779 = vpop.f32.mrf.mxu0
        %780 = vmatprep.mubr.f32.mxu0 0.0
        %781 = vmatmul.mubr.f32.gmra.mxu0 %v435
        %v782 = vpop.f32.mrf.mxu0
        %v783 = vadd.f32 %v296, %v782
        %v784 = vpop.f32.mrf.mxu0
        %785 = vmatprep.mubr.f32.mxu0 0.0
        %786 = vmatmul.mubr.f32.gmra.mxu0 %v438
        %v787 = vpop.f32.mrf.mxu0
        %v788 = vadd.f32 %v296, %v787
        %v789 = vpop.f32.mrf.mxu0
        %790 = vmatprep.mubr.f32.mxu0 0.0
        %791 = vmatmul.mubr.f32.gmra.mxu0 %v441
        %v792 = vpop.f32.mrf.mxu0
        %v793 = vadd.f32 %v296, %v792
        %v794 = vpop.f32.mrf.mxu0
        %795 = vmatprep.mubr.f32.mxu0 0.0
        %796 = vmatmul.mubr.f32.gmra.mxu0 %v444
        %v797 = vpop.f32.mrf.mxu0
        %v798 = vadd.f32 %v296, %v797
        %v799 = vpop.f32.mrf.mxu0
        %800 = vmatprep.mubr.f32.mxu0 0.0
        %801 = vmatmul.mubr.f32.gmra.mxu0 %v447
        %v802 = vpop.f32.mrf.mxu0
        %v803 = vadd.f32 %v296, %v802
        %v804 = vpop.f32.mrf.mxu0
        %805 = vmatprep.mubr.f32.mxu0 0.0
        %806 = vmatmul.mubr.f32.gmra.mxu0 %v450
        %v807 = vpop.f32.mrf.mxu0
        %v808 = vadd.f32 %v296, %v807
        %v809 = vpop.f32.mrf.mxu0
        %810 = vmatprep.mubr.f32.mxu0 0.0
        %811 = vmatmul.mubr.f32.gmra.mxu0 %v453
        %v812 = vpop.f32.mrf.mxu0
        %v813 = vadd.f32 %v296, %v812
        %v814 = vpop.f32.mrf.mxu0
        %815 = vmatprep.mubr.f32.mxu0 0.0
        %816 = vmatmul.mubr.f32.gmra.mxu0 %v456
        %v817 = vpop.f32.mrf.mxu0
        %v818 = vadd.f32 %v296, %v817
        %v819 = vpop.f32.mrf.mxu0
        %820 = vmatprep.mubr.f32.mxu0 0.0
        %821 = vmatmul.mubr.f32.gmra.mxu0 %v459
        %v822 = vpop.f32.mrf.mxu0
        %v823 = vadd.f32 %v296, %v822
        %v824 = vpop.f32.mrf.mxu0
        %825 = vmatprep.mubr.f32.mxu0 0.0
        %826 = vmatmul.mubr.f32.gmra.mxu0 %v462
        %v827 = vpop.f32.mrf.mxu0
        %v828 = vadd.f32 %v296, %v827
        %v829 = vpop.f32.mrf.mxu0
        %830 = vmatprep.mubr.f32.mxu0 0.0
        %831 = vmatmul.mubr.f32.gmra.mxu0 %v465
        %v832 = vpop.f32.mrf.mxu0
        %v833 = vadd.f32 %v296, %v832
        %v834 = vpop.f32.mrf.mxu0
        %835 = vmatprep.mubr.f32.mxu0 0.0
        %836 = vmatmul.mubr.f32.gmra.mxu0 %v468
        %v837 = vpop.f32.mrf.mxu0
        %v838 = vadd.f32 %v296, %v837
        %v839 = vpop.f32.mrf.mxu0
        %840 = vmatprep.mubr.f32.mxu0 0.0
        %841 = vmatmul.mubr.f32.gmra.mxu0 %v471
        %v842 = vpop.f32.mrf.mxu0
        %v843 = vadd.f32 %v296, %v842
        %v844 = vpop.f32.mrf.mxu0
        %845 = vmatprep.mubr.f32.mxu0 0.0
        %846 = vmatmul.mubr.f32.gmra.mxu0 %v474
        %v847 = vpop.f32.mrf.mxu0
        %v848 = vadd.f32 %v296, %v847
        %v849 = vpop.f32.mrf.mxu0
        %850 = vmatprep.mubr.f32.mxu0 0.0
        %851 = vmatmul.mubr.f32.gmra.mxu0 %v477
        %v852 = vpop.f32.mrf.mxu0
        %v853 = vadd.f32 %v296, %v852
        %v854 = vpop.f32.mrf.mxu0
        %855 = vmatprep.mubr.f32.mxu0 0.0
        %856 = vmatmul.mubr.f32.gmra.mxu0 %v480
        %v857 = vpop.f32.mrf.mxu0
        %v858 = vadd.f32 %v296, %v857
        %v859 = vpop.f32.mrf.mxu0
        %860 = vmatprep.mubr.f32.mxu0 0.0
        %861 = vmatmul.mubr.f32.gmra.mxu0 %v483
        %v862 = vpop.f32.mrf.mxu0
        %v863 = vadd.f32 %v296, %v862
        %v864 = vpop.f32.mrf.mxu0
        %865 = vmatprep.mubr.f32.mxu0 0.0
        %866 = vmatmul.mubr.f32.gmra.mxu0 %v486
        %v867 = vpop.f32.mrf.mxu0
        %v868 = vadd.f32 %v296, %v867
        %v869 = vpop.f32.mrf.mxu0
        %870 = vmatprep.mubr.f32.mxu0 0.0
        %871 = vmatmul.mubr.f32.gmra.mxu0 %v489
        %v872 = vpop.f32.mrf.mxu0
        %v873 = vadd.f32 %v296, %v872
        %v874 = vpop.f32.mrf.mxu0
        %875 = vdwg.mxu0
        %v876 = vxor.u32 %v558, 2147483648
        %v877 = vxor.u32 %v563, 2147483648
        %v878 = vxor.u32 %v568, 2147483648
        %v879 = vxor.u32 %v573, 2147483648
        %v880 = vxor.u32 %v578, 2147483648
        %v881 = vxor.u32 %v583, 2147483648
        %v882 = vxor.u32 %v588, 2147483648
        %v883 = vxor.u32 %v593, 2147483648
        %v884 = vxor.u32 %v598, 2147483648
        %v885 = vxor.u32 %v603, 2147483648
        %v886 = vxor.u32 %v608, 2147483648
        %v887 = vxor.u32 %v613, 2147483648
        %v888 = vxor.u32 %v618, 2147483648
        %v889 = vxor.u32 %v623, 2147483648
        %v890 = vxor.u32 %v628, 2147483648
        %v891 = vxor.u32 %v633, 2147483648
        %v892 = vxor.u32 %v638, 2147483648
        %v893 = vxor.u32 %v643, 2147483648
        %v894 = vxor.u32 %v648, 2147483648
        %v895 = vxor.u32 %v653, 2147483648
        %v896 = vxor.u32 %v658, 2147483648
        %v897 = vxor.u32 %v663, 2147483648
        %v898 = vxor.u32 %v668, 2147483648
        %v899 = vxor.u32 %v673, 2147483648
        %v900 = vxor.u32 %v678, 2147483648
        %v901 = vxor.u32 %v683, 2147483648
        %v902 = vxor.u32 %v688, 2147483648
        %v903 = vxor.u32 %v693, 2147483648
        %v904 = vxor.u32 %v698, 2147483648
        %v905 = vxor.u32 %v703, 2147483648
        %v906 = vxor.u32 %v708, 2147483648
        %v907 = vxor.u32 %v713, 2147483648
        %v908 = vxor.u32 %v718, 2147483648
        %v909 = vxor.u32 %v723, 2147483648
        %v910 = vxor.u32 %v728, 2147483648
        %v911 = vxor.u32 %v733, 2147483648
        %v912 = vxor.u32 %v738, 2147483648
        %v913 = vxor.u32 %v743, 2147483648
        %v914 = vxor.u32 %v748, 2147483648
        %v915 = vxor.u32 %v753, 2147483648
        %v916 = vxor.u32 %v758, 2147483648
        %v917 = vxor.u32 %v763, 2147483648
        %v918 = vxor.u32 %v768, 2147483648
        %v919 = vxor.u32 %v773, 2147483648
        %v920 = vxor.u32 %v778, 2147483648
        %v921 = vxor.u32 %v783, 2147483648
        %v922 = vxor.u32 %v788, 2147483648
        %v923 = vxor.u32 %v793, 2147483648
        %v924 = vxor.u32 %v798, 2147483648
        %v925 = vxor.u32 %v803, 2147483648
        %v926 = vxor.u32 %v808, 2147483648
        %v927 = vxor.u32 %v813, 2147483648
        %v928 = vxor.u32 %v818, 2147483648
        %v929 = vxor.u32 %v823, 2147483648
        %v930 = vxor.u32 %v828, 2147483648
        %v931 = vxor.u32 %v833, 2147483648
        %v932 = vxor.u32 %v838, 2147483648
        %v933 = vxor.u32 %v843, 2147483648
        %v934 = vxor.u32 %v848, 2147483648
        %v935 = vxor.u32 %v853, 2147483648
        %v936 = vxor.u32 %v858, 2147483648
        %v937 = vxor.u32 %v863, 2147483648
        %v938 = vxor.u32 %v868, 2147483648
        %v939 = vxor.u32 %v873, 2147483648
        %v940 = vmul.f32 %v876, 1.442695
        %v941 = vpow.pop %v940
        %v942 = vmul.f32 %v877, 1.442695
        %v943 = vpow.pop %v942
        %v944 = vmul.f32 %v878, 1.442695
        %v945 = vpow.pop %v944
        %v946 = vmul.f32 %v879, 1.442695
        %v947 = vpow.pop %v946
        %v948 = vmul.f32 %v880, 1.442695
        %v949 = vpow.pop %v948
        %v950 = vmul.f32 %v881, 1.442695
        %v951 = vpow.pop %v950
        %v952 = vmul.f32 %v882, 1.442695
        %v953 = vpow.pop %v952
        %v954 = vmul.f32 %v883, 1.442695
        %v955 = vpow.pop %v954
        %v956 = vmul.f32 %v884, 1.442695
        %v957 = vpow.pop %v956
        %v958 = vmul.f32 %v885, 1.442695
        %v959 = vpow.pop %v958
        %v960 = vmul.f32 %v886, 1.442695
        %v961 = vpow.pop %v960
        %v962 = vmul.f32 %v887, 1.442695
        %v963 = vpow.pop %v962
        %v964 = vmul.f32 %v888, 1.442695
        %v965 = vpow.pop %v964
        %v966 = vmul.f32 %v889, 1.442695
        %v967 = vpow.pop %v966
        %v968 = vmul.f32 %v890, 1.442695
        %v969 = vpow.pop %v968
        %v970 = vmul.f32 %v891, 1.442695
        %v971 = vpow.pop %v970
        %v972 = vmul.f32 %v892, 1.442695
        %v973 = vpow.pop %v972
        %v974 = vmul.f32 %v893, 1.442695
        %v975 = vpow.pop %v974
        %v976 = vmul.f32 %v894, 1.442695
        %v977 = vpow.pop %v976
        %v978 = vmul.f32 %v895, 1.442695
        %v979 = vpow.pop %v978
        %v980 = vmul.f32 %v896, 1.442695
        %v981 = vpow.pop %v980
        %v982 = vmul.f32 %v897, 1.442695
        %v983 = vpow.pop %v982
        %v984 = vmul.f32 %v898, 1.442695
        %v985 = vpow.pop %v984
        %v986 = vmul.f32 %v899, 1.442695
        %v987 = vpow.pop %v986
        %v988 = vmul.f32 %v900, 1.442695
        %v989 = vpow.pop %v988
        %v990 = vmul.f32 %v901, 1.442695
        %v991 = vpow.pop %v990
        %v992 = vmul.f32 %v902, 1.442695
        %v993 = vpow.pop %v992
        %v994 = vmul.f32 %v903, 1.442695
        %v995 = vpow.pop %v994
        %v996 = vmul.f32 %v904, 1.442695
        %v997 = vpow.pop %v996
        %v998 = vmul.f32 %v905, 1.442695
        %v999 = vpow.pop %v998
        %v1000 = vmul.f32 %v906, 1.442695
        %v1001 = vpow.pop %v1000
        %v1002 = vmul.f32 %v907, 1.442695
        %v1003 = vpow.pop %v1002
        %v1004 = vmul.f32 %v908, 1.442695
        %v1005 = vpow.pop %v1004
        %v1006 = vmul.f32 %v909, 1.442695
        %v1007 = vpow.pop %v1006
        %v1008 = vmul.f32 %v910, 1.442695
        %v1009 = vpow.pop %v1008
        %v1010 = vmul.f32 %v911, 1.442695
        %v1011 = vpow.pop %v1010
        %v1012 = vmul.f32 %v912, 1.442695
        %v1013 = vpow.pop %v1012
        %v1014 = vmul.f32 %v913, 1.442695
        %v1015 = vpow.pop %v1014
        %v1016 = vmul.f32 %v914, 1.442695
        %v1017 = vpow.pop %v1016
        %v1018 = vmul.f32 %v915, 1.442695
        %v1019 = vpow.pop %v1018
        %v1020 = vmul.f32 %v916, 1.442695
        %v1021 = vpow.pop %v1020
        %v1022 = vmul.f32 %v917, 1.442695
        %v1023 = vpow.pop %v1022
        %v1024 = vmul.f32 %v918, 1.442695
        %v1025 = vpow.pop %v1024
        %v1026 = vmul.f32 %v919, 1.442695
        %v1027 = vpow.pop %v1026
        %v1028 = vmul.f32 %v920, 1.442695
        %v1029 = vpow.pop %v1028
        %v1030 = vmul.f32 %v921, 1.442695
        %v1031 = vpow.pop %v1030
        %v1032 = vmul.f32 %v922, 1.442695
        %v1033 = vpow.pop %v1032
        %v1034 = vmul.f32 %v923, 1.442695
        %v1035 = vpow.pop %v1034
        %v1036 = vmul.f32 %v924, 1.442695
        %v1037 = vpow.pop %v1036
        %v1038 = vmul.f32 %v925, 1.442695
        %v1039 = vpow.pop %v1038
        %v1040 = vmul.f32 %v926, 1.442695
        %v1041 = vpow.pop %v1040
        %v1042 = vmul.f32 %v927, 1.442695
        %v1043 = vpow.pop %v1042
        %v1044 = vmul.f32 %v928, 1.442695
        %v1045 = vpow.pop %v1044
        %v1046 = vmul.f32 %v929, 1.442695
        %v1047 = vpow.pop %v1046
        %v1048 = vmul.f32 %v930, 1.442695
        %v1049 = vpow.pop %v1048
        %v1050 = vmul.f32 %v931, 1.442695
        %v1051 = vpow.pop %v1050
        %v1052 = vmul.f32 %v932, 1.442695
        %v1053 = vpow.pop %v1052
        %v1054 = vmul.f32 %v933, 1.442695
        %v1055 = vpow.pop %v1054
        %v1056 = vmul.f32 %v934, 1.442695
        %v1057 = vpow.pop %v1056
        %v1058 = vmul.f32 %v935, 1.442695
        %v1059 = vpow.pop %v1058
        %v1060 = vmul.f32 %v936, 1.442695
        %v1061 = vpow.pop %v1060
        %v1062 = vmul.f32 %v937, 1.442695
        %v1063 = vpow.pop %v1062
        %v1064 = vmul.f32 %v938, 1.442695
        %v1065 = vpow.pop %v1064
        %v1066 = vmul.f32 %v939, 1.442695
        %v1067 = vpow.pop %v1066
        %v1068 = vadd.f32 %v941, 1.0
        %v1069 = vadd.f32 %v943, 1.0
        %v1070 = vadd.f32 %v945, 1.0
        %v1071 = vadd.f32 %v947, 1.0
        %v1072 = vadd.f32 %v949, 1.0
        %v1073 = vadd.f32 %v951, 1.0
        %v1074 = vadd.f32 %v953, 1.0
        %v1075 = vadd.f32 %v955, 1.0
        %v1076 = vadd.f32 %v957, 1.0
        %v1077 = vadd.f32 %v959, 1.0
        %v1078 = vadd.f32 %v961, 1.0
        %v1079 = vadd.f32 %v963, 1.0
        %v1080 = vadd.f32 %v965, 1.0
        %v1081 = vadd.f32 %v967, 1.0
        %v1082 = vadd.f32 %v969, 1.0
        %v1083 = vadd.f32 %v971, 1.0
        %v1084 = vadd.f32 %v973, 1.0
        %v1085 = vadd.f32 %v975, 1.0
        %v1086 = vadd.f32 %v977, 1.0
        %v1087 = vadd.f32 %v979, 1.0
        %v1088 = vadd.f32 %v981, 1.0
        %v1089 = vadd.f32 %v983, 1.0
        %v1090 = vadd.f32 %v985, 1.0
        %v1091 = vadd.f32 %v987, 1.0
        %v1092 = vadd.f32 %v989, 1.0
        %v1093 = vadd.f32 %v991, 1.0
        %v1094 = vadd.f32 %v993, 1.0
        %v1095 = vadd.f32 %v995, 1.0
        %v1096 = vadd.f32 %v997, 1.0
        %v1097 = vadd.f32 %v999, 1.0
        %v1098 = vadd.f32 %v1001, 1.0
        %v1099 = vadd.f32 %v1003, 1.0
        %v1100 = vadd.f32 %v1005, 1.0
        %v1101 = vadd.f32 %v1007, 1.0
        %v1102 = vadd.f32 %v1009, 1.0
        %v1103 = vadd.f32 %v1011, 1.0
        %v1104 = vadd.f32 %v1013, 1.0
        %v1105 = vadd.f32 %v1015, 1.0
        %v1106 = vadd.f32 %v1017, 1.0
        %v1107 = vadd.f32 %v1019, 1.0
        %v1108 = vadd.f32 %v1021, 1.0
        %v1109 = vadd.f32 %v1023, 1.0
        %v1110 = vadd.f32 %v1025, 1.0
        %v1111 = vadd.f32 %v1027, 1.0
        %v1112 = vadd.f32 %v1029, 1.0
        %v1113 = vadd.f32 %v1031, 1.0
        %v1114 = vadd.f32 %v1033, 1.0
        %v1115 = vadd.f32 %v1035, 1.0
        %v1116 = vadd.f32 %v1037, 1.0
        %v1117 = vadd.f32 %v1039, 1.0
        %v1118 = vadd.f32 %v1041, 1.0
        %v1119 = vadd.f32 %v1043, 1.0
        %v1120 = vadd.f32 %v1045, 1.0
        %v1121 = vadd.f32 %v1047, 1.0
        %v1122 = vadd.f32 %v1049, 1.0
        %v1123 = vadd.f32 %v1051, 1.0
        %v1124 = vadd.f32 %v1053, 1.0
        %v1125 = vadd.f32 %v1055, 1.0
        %v1126 = vadd.f32 %v1057, 1.0
        %v1127 = vadd.f32 %v1059, 1.0
        %v1128 = vadd.f32 %v1061, 1.0
        %v1129 = vadd.f32 %v1063, 1.0
        %v1130 = vadd.f32 %v1065, 1.0
        %v1131 = vadd.f32 %v1067, 1.0
        %v1132 = vrcp.pop %v1068
        %v1133 = vmul.f32 1.0, %v1132
        %v1134 = vrcp.pop %v1069
        %v1135 = vmul.f32 1.0, %v1134
        %v1136 = vrcp.pop %v1070
        %v1137 = vmul.f32 1.0, %v1136
        %v1138 = vrcp.pop %v1071
        %v1139 = vmul.f32 1.0, %v1138
        %v1140 = vrcp.pop %v1072
        %v1141 = vmul.f32 1.0, %v1140
        %v1142 = vrcp.pop %v1073
        %v1143 = vmul.f32 1.0, %v1142
        %v1144 = vrcp.pop %v1074
        %v1145 = vmul.f32 1.0, %v1144
        %v1146 = vrcp.pop %v1075
        %v1147 = vmul.f32 1.0, %v1146
        %v1148 = vrcp.pop %v1076
        %v1149 = vmul.f32 1.0, %v1148
        %v1150 = vrcp.pop %v1077
        %v1151 = vmul.f32 1.0, %v1150
        %v1152 = vrcp.pop %v1078
        %v1153 = vmul.f32 1.0, %v1152
        %v1154 = vrcp.pop %v1079
        %v1155 = vmul.f32 1.0, %v1154
        %v1156 = vrcp.pop %v1080
        %v1157 = vmul.f32 1.0, %v1156
        %v1158 = vrcp.pop %v1081
        %v1159 = vmul.f32 1.0, %v1158
        %v1160 = vrcp.pop %v1082
        %v1161 = vmul.f32 1.0, %v1160
        %v1162 = vrcp.pop %v1083
        %v1163 = vmul.f32 1.0, %v1162
        %v1164 = vrcp.pop %v1084
        %v1165 = vmul.f32 1.0, %v1164
        %v1166 = vrcp.pop %v1085
        %v1167 = vmul.f32 1.0, %v1166
        %v1168 = vrcp.pop %v1086
        %v1169 = vmul.f32 1.0, %v1168
        %v1170 = vrcp.pop %v1087
        %v1171 = vmul.f32 1.0, %v1170
        %v1172 = vrcp.pop %v1088
        %v1173 = vmul.f32 1.0, %v1172
        %v1174 = vrcp.pop %v1089
        %v1175 = vmul.f32 1.0, %v1174
        %v1176 = vrcp.pop %v1090
        %v1177 = vmul.f32 1.0, %v1176
        %v1178 = vrcp.pop %v1091
        %v1179 = vmul.f32 1.0, %v1178
        %v1180 = vrcp.pop %v1092
        %v1181 = vmul.f32 1.0, %v1180
        %v1182 = vrcp.pop %v1093
        %v1183 = vmul.f32 1.0, %v1182
        %v1184 = vrcp.pop %v1094
        %v1185 = vmul.f32 1.0, %v1184
        %v1186 = vrcp.pop %v1095
        %v1187 = vmul.f32 1.0, %v1186
        %v1188 = vrcp.pop %v1096
        %v1189 = vmul.f32 1.0, %v1188
        %v1190 = vrcp.pop %v1097
        %v1191 = vmul.f32 1.0, %v1190
        %v1192 = vrcp.pop %v1098
        %v1193 = vmul.f32 1.0, %v1192
        %v1194 = vrcp.pop %v1099
        %v1195 = vmul.f32 1.0, %v1194
        %v1196 = vrcp.pop %v1100
        %v1197 = vmul.f32 1.0, %v1196
        %v1198 = vrcp.pop %v1101
        %v1199 = vmul.f32 1.0, %v1198
        %v1200 = vrcp.pop %v1102
        %v1201 = vmul.f32 1.0, %v1200
        %v1202 = vrcp.pop %v1103
        %v1203 = vmul.f32 1.0, %v1202
        %v1204 = vrcp.pop %v1104
        %v1205 = vmul.f32 1.0, %v1204
        %v1206 = vrcp.pop %v1105
        %v1207 = vmul.f32 1.0, %v1206
        %v1208 = vrcp.pop %v1106
        %v1209 = vmul.f32 1.0, %v1208
        %v1210 = vrcp.pop %v1107
        %v1211 = vmul.f32 1.0, %v1210
        %v1212 = vrcp.pop %v1108
        %v1213 = vmul.f32 1.0, %v1212
        %v1214 = vrcp.pop %v1109
        %v1215 = vmul.f32 1.0, %v1214
        %v1216 = vrcp.pop %v1110
        %v1217 = vmul.f32 1.0, %v1216
        %v1218 = vrcp.pop %v1111
        %v1219 = vmul.f32 1.0, %v1218
        %v1220 = vrcp.pop %v1112
        %v1221 = vmul.f32 1.0, %v1220
        %v1222 = vrcp.pop %v1113
        %v1223 = vmul.f32 1.0, %v1222
        %v1224 = vrcp.pop %v1114
        %v1225 = vmul.f32 1.0, %v1224
        %v1226 = vrcp.pop %v1115
        %v1227 = vmul.f32 1.0, %v1226
        %v1228 = vrcp.pop %v1116
        %v1229 = vmul.f32 1.0, %v1228
        %v1230 = vrcp.pop %v1117
        %v1231 = vmul.f32 1.0, %v1230
        %v1232 = vrcp.pop %v1118
        %v1233 = vmul.f32 1.0, %v1232
        %v1234 = vrcp.pop %v1119
        %v1235 = vmul.f32 1.0, %v1234
        %v1236 = vrcp.pop %v1120
        %v1237 = vmul.f32 1.0, %v1236
        %v1238 = vrcp.pop %v1121
        %v1239 = vmul.f32 1.0, %v1238
        %v1240 = vrcp.pop %v1122
        %v1241 = vmul.f32 1.0, %v1240
        %v1242 = vrcp.pop %v1123
        %v1243 = vmul.f32 1.0, %v1242
        %v1244 = vrcp.pop %v1124
        %v1245 = vmul.f32 1.0, %v1244
        %v1246 = vrcp.pop %v1125
        %v1247 = vmul.f32 1.0, %v1246
        %v1248 = vrcp.pop %v1126
        %v1249 = vmul.f32 1.0, %v1248
        %v1250 = vrcp.pop %v1127
        %v1251 = vmul.f32 1.0, %v1250
        %v1252 = vrcp.pop %v1128
        %v1253 = vmul.f32 1.0, %v1252
        %v1254 = vrcp.pop %v1129
        %v1255 = vmul.f32 1.0, %v1254
        %v1256 = vrcp.pop %v1130
        %v1257 = vmul.f32 1.0, %v1256
        %v1258 = vrcp.pop %v1131
        %v1259 = vmul.f32 1.0, %v1258
        %v1260 = vld [vmem:[%s4] sm:$0x1]
        %v1261 = vld [vmem:[%s3] sm:$0x1]
        %v1262 = vlaneseq
        %v1263 = vshrl.u32 %v1262, 7
        %v1264 = vsub.s32 0, %v1263
        %v1265 = vrot.slane %v1261, %v1264
        %v1266 = vmul.f32 %v1133, %v1265
        %v1267 = vmul.f32 %v1135, %v1265
        %v1268 = vmul.f32 %v1137, %v1265
        %v1269 = vmul.f32 %v1139, %v1265
        %v1270 = vmul.f32 %v1141, %v1265
        %v1271 = vmul.f32 %v1143, %v1265
        %v1272 = vmul.f32 %v1145, %v1265
        %v1273 = vmul.f32 %v1147, %v1265
        %v1274 = vmul.f32 %v1149, %v1265
        %v1275 = vmul.f32 %v1151, %v1265
        %v1276 = vmul.f32 %v1153, %v1265
        %v1277 = vmul.f32 %v1155, %v1265
        %v1278 = vmul.f32 %v1157, %v1265
        %v1279 = vmul.f32 %v1159, %v1265
        %v1280 = vmul.f32 %v1161, %v1265
        %v1281 = vmul.f32 %v1163, %v1265
        %v1282 = vmul.f32 %v1165, %v1265
        %v1283 = vmul.f32 %v1167, %v1265
        %v1284 = vmul.f32 %v1169, %v1265
        %v1285 = vmul.f32 %v1171, %v1265
        %v1286 = vmul.f32 %v1173, %v1265
        %v1287 = vmul.f32 %v1175, %v1265
        %v1288 = vmul.f32 %v1177, %v1265
        %v1289 = vmul.f32 %v1179, %v1265
        %v1290 = vmul.f32 %v1181, %v1265
        %v1291 = vmul.f32 %v1183, %v1265
        %v1292 = vmul.f32 %v1185, %v1265
        %v1293 = vmul.f32 %v1187, %v1265
        %v1294 = vmul.f32 %v1189, %v1265
        %v1295 = vmul.f32 %v1191, %v1265
        %v1296 = vmul.f32 %v1193, %v1265
        %v1297 = vmul.f32 %v1195, %v1265
        %v1298 = vmul.f32 %v1197, %v1265
        %v1299 = vmul.f32 %v1199, %v1265
        %v1300 = vmul.f32 %v1201, %v1265
        %v1301 = vmul.f32 %v1203, %v1265
        %v1302 = vmul.f32 %v1205, %v1265
        %v1303 = vmul.f32 %v1207, %v1265
        %v1304 = vmul.f32 %v1209, %v1265
        %v1305 = vmul.f32 %v1211, %v1265
        %v1306 = vmul.f32 %v1213, %v1265
        %v1307 = vmul.f32 %v1215, %v1265
        %v1308 = vmul.f32 %v1217, %v1265
        %v1309 = vmul.f32 %v1219, %v1265
        %v1310 = vmul.f32 %v1221, %v1265
        %v1311 = vmul.f32 %v1223, %v1265
        %v1312 = vmul.f32 %v1225, %v1265
        %v1313 = vmul.f32 %v1227, %v1265
        %v1314 = vmul.f32 %v1229, %v1265
        %v1315 = vmul.f32 %v1231, %v1265
        %v1316 = vmul.f32 %v1233, %v1265
        %v1317 = vmul.f32 %v1235, %v1265
        %v1318 = vmul.f32 %v1237, %v1265
        %v1319 = vmul.f32 %v1239, %v1265
        %v1320 = vmul.f32 %v1241, %v1265
        %v1321 = vmul.f32 %v1243, %v1265
        %v1322 = vmul.f32 %v1245, %v1265
        %v1323 = vmul.f32 %v1247, %v1265
        %v1324 = vmul.f32 %v1249, %v1265
        %v1325 = vmul.f32 %v1251, %v1265
        %v1326 = vmul.f32 %v1253, %v1265
        %v1327 = vmul.f32 %v1255, %v1265
        %v1328 = vmul.f32 %v1257, %v1265
        %v1329 = vmul.f32 %v1259, %v1265
        %v1331 = vlaneseq
        %v1332 = vshrl.u32 %v1331, 7
        %v1333 = vsub.s32 0, %v1332
        %v1334 = vrot.slane %v1260, %v1333
        %v1336 = vadd.f32 %v1334, %v1266
        %v1337 = vadd.f32 %v1334, %v1267
        %v1338 = vadd.f32 %v1334, %v1268
        %v1339 = vadd.f32 %v1334, %v1269
        %v1340 = vadd.f32 %v1334, %v1270
        %v1341 = vadd.f32 %v1334, %v1271
        %v1342 = vadd.f32 %v1334, %v1272
        %v1343 = vadd.f32 %v1334, %v1273
        %v1344 = vadd.f32 %v1334, %v1274
        %v1345 = vadd.f32 %v1334, %v1275
        %v1346 = vadd.f32 %v1334, %v1276
        %v1347 = vadd.f32 %v1334, %v1277
        %v1348 = vadd.f32 %v1334, %v1278
        %v1349 = vadd.f32 %v1334, %v1279
        %v1350 = vadd.f32 %v1334, %v1280
        %v1351 = vadd.f32 %v1334, %v1281
        %v1352 = vadd.f32 %v1334, %v1282
        %v1353 = vadd.f32 %v1334, %v1283
        %v1354 = vadd.f32 %v1334, %v1284
        %v1355 = vadd.f32 %v1334, %v1285
        %v1356 = vadd.f32 %v1334, %v1286
        %v1357 = vadd.f32 %v1334, %v1287
        %v1358 = vadd.f32 %v1334, %v1288
        %v1359 = vadd.f32 %v1334, %v1289
        %v1360 = vadd.f32 %v1334, %v1290
        %v1361 = vadd.f32 %v1334, %v1291
        %v1362 = vadd.f32 %v1334, %v1292
        %v1363 = vadd.f32 %v1334, %v1293
        %v1364 = vadd.f32 %v1334, %v1294
        %v1365 = vadd.f32 %v1334, %v1295
        %v1366 = vadd.f32 %v1334, %v1296
        %v1367 = vadd.f32 %v1334, %v1297
        %v1368 = vadd.f32 %v1334, %v1298
        %v1369 = vadd.f32 %v1334, %v1299
        %v1370 = vadd.f32 %v1334, %v1300
        %v1371 = vadd.f32 %v1334, %v1301
        %v1372 = vadd.f32 %v1334, %v1302
        %v1373 = vadd.f32 %v1334, %v1303
        %v1374 = vadd.f32 %v1334, %v1304
        %v1375 = vadd.f32 %v1334, %v1305
        %v1376 = vadd.f32 %v1334, %v1306
        %v1377 = vadd.f32 %v1334, %v1307
        %v1378 = vadd.f32 %v1334, %v1308
        %v1379 = vadd.f32 %v1334, %v1309
        %v1380 = vadd.f32 %v1334, %v1310
        %v1381 = vadd.f32 %v1334, %v1311
        %v1382 = vadd.f32 %v1334, %v1312
        %v1383 = vadd.f32 %v1334, %v1313
        %v1384 = vadd.f32 %v1334, %v1314
        %v1385 = vadd.f32 %v1334, %v1315
        %v1386 = vadd.f32 %v1334, %v1316
        %v1387 = vadd.f32 %v1334, %v1317
        %v1388 = vadd.f32 %v1334, %v1318
        %v1389 = vadd.f32 %v1334, %v1319
        %v1390 = vadd.f32 %v1334, %v1320
        %v1391 = vadd.f32 %v1334, %v1321
        %v1392 = vadd.f32 %v1334, %v1322
        %v1393 = vadd.f32 %v1334, %v1323
        %v1394 = vadd.f32 %v1334, %v1324
        %v1395 = vadd.f32 %v1334, %v1325
        %v1396 = vadd.f32 %v1334, %v1326
        %v1397 = vadd.f32 %v1334, %v1327
        %v1398 = vadd.f32 %v1334, %v1328
        %v1399 = vadd.f32 %v1334, %v1329
        %v1400 = vld [vmem:[%s3 + $0x1] sm:$0x1]
        %v1401 = vlaneseq
        %v1402 = vshrl.u32 %v1401, 7
        %v1403 = vsub.s32 0, %v1402
        %v1404 = vrot.slane %v1400, %v1403
        %1406 = vrot.lane.b32.xlu0 %v1404, 8
        %v1407 = vpop.permute.xlu0 %1406
        %v1409 = vmul.f32 %v1133, %v1407
        %v1410 = vmul.f32 %v1135, %v1407
        %v1411 = vmul.f32 %v1137, %v1407
        %v1412 = vmul.f32 %v1139, %v1407
        %v1413 = vmul.f32 %v1141, %v1407
        %v1414 = vmul.f32 %v1143, %v1407
        %v1415 = vmul.f32 %v1145, %v1407
        %v1416 = vmul.f32 %v1147, %v1407
        %v1417 = vmul.f32 %v1149, %v1407
        %v1418 = vmul.f32 %v1151, %v1407
        %v1419 = vmul.f32 %v1153, %v1407
        %v1420 = vmul.f32 %v1155, %v1407
        %v1421 = vmul.f32 %v1157, %v1407
        %v1422 = vmul.f32 %v1159, %v1407
        %v1423 = vmul.f32 %v1161, %v1407
        %v1424 = vmul.f32 %v1163, %v1407
        %v1425 = vmul.f32 %v1165, %v1407
        %v1426 = vmul.f32 %v1167, %v1407
        %v1427 = vmul.f32 %v1169, %v1407
        %v1428 = vmul.f32 %v1171, %v1407
        %v1429 = vmul.f32 %v1173, %v1407
        %v1430 = vmul.f32 %v1175, %v1407
        %v1431 = vmul.f32 %v1177, %v1407
        %v1432 = vmul.f32 %v1179, %v1407
        %v1433 = vmul.f32 %v1181, %v1407
        %v1434 = vmul.f32 %v1183, %v1407
        %v1435 = vmul.f32 %v1185, %v1407
        %v1436 = vmul.f32 %v1187, %v1407
        %v1437 = vmul.f32 %v1189, %v1407
        %v1438 = vmul.f32 %v1191, %v1407
        %v1439 = vmul.f32 %v1193, %v1407
        %v1440 = vmul.f32 %v1195, %v1407
        %v1441 = vmul.f32 %v1197, %v1407
        %v1442 = vmul.f32 %v1199, %v1407
        %v1443 = vmul.f32 %v1201, %v1407
        %v1444 = vmul.f32 %v1203, %v1407
        %v1445 = vmul.f32 %v1205, %v1407
        %v1446 = vmul.f32 %v1207, %v1407
        %v1447 = vmul.f32 %v1209, %v1407
        %v1448 = vmul.f32 %v1211, %v1407
        %v1449 = vmul.f32 %v1213, %v1407
        %v1450 = vmul.f32 %v1215, %v1407
        %v1451 = vmul.f32 %v1217, %v1407
        %v1452 = vmul.f32 %v1219, %v1407
        %v1453 = vmul.f32 %v1221, %v1407
        %v1454 = vmul.f32 %v1223, %v1407
        %v1455 = vmul.f32 %v1225, %v1407
        %v1456 = vmul.f32 %v1227, %v1407
        %v1457 = vmul.f32 %v1229, %v1407
        %v1458 = vmul.f32 %v1231, %v1407
        %v1459 = vmul.f32 %v1233, %v1407
        %v1460 = vmul.f32 %v1235, %v1407
        %v1461 = vmul.f32 %v1237, %v1407
        %v1462 = vmul.f32 %v1239, %v1407
        %v1463 = vmul.f32 %v1241, %v1407
        %v1464 = vmul.f32 %v1243, %v1407
        %v1465 = vmul.f32 %v1245, %v1407
        %v1466 = vmul.f32 %v1247, %v1407
        %v1467 = vmul.f32 %v1249, %v1407
        %v1468 = vmul.f32 %v1251, %v1407
        %v1469 = vmul.f32 %v1253, %v1407
        %v1470 = vmul.f32 %v1255, %v1407
        %v1471 = vmul.f32 %v1257, %v1407
        %v1472 = vmul.f32 %v1259, %v1407
        %1537 = vrot.lane.b32.xlu0 %v1409, 120
        %v1538 = vpop.permute.xlu0 %1537
        %1539 = vrot.lane.b32.xlu0 %v1410, 120
        %v1540 = vpop.permute.xlu0 %1539
        %1541 = vrot.lane.b32.xlu0 %v1411, 120
        %v1542 = vpop.permute.xlu0 %1541
        %1543 = vrot.lane.b32.xlu0 %v1412, 120
        %v1544 = vpop.permute.xlu0 %1543
        %1545 = vrot.lane.b32.xlu0 %v1413, 120
        %v1546 = vpop.permute.xlu0 %1545
        %1547 = vrot.lane.b32.xlu0 %v1414, 120
        %v1548 = vpop.permute.xlu0 %1547
        %1549 = vrot.lane.b32.xlu0 %v1415, 120
        %v1550 = vpop.permute.xlu0 %1549
        %1551 = vrot.lane.b32.xlu0 %v1416, 120
        %v1552 = vpop.permute.xlu0 %1551
        %1553 = vrot.lane.b32.xlu0 %v1417, 120
        %v1554 = vpop.permute.xlu0 %1553
        %1555 = vrot.lane.b32.xlu0 %v1418, 120
        %v1556 = vpop.permute.xlu0 %1555
        %1557 = vrot.lane.b32.xlu0 %v1419, 120
        %v1558 = vpop.permute.xlu0 %1557
        %1559 = vrot.lane.b32.xlu0 %v1420, 120
        %v1560 = vpop.permute.xlu0 %1559
        %1561 = vrot.lane.b32.xlu0 %v1421, 120
        %v1562 = vpop.permute.xlu0 %1561
        %1563 = vrot.lane.b32.xlu0 %v1422, 120
        %v1564 = vpop.permute.xlu0 %1563
        %1565 = vrot.lane.b32.xlu0 %v1423, 120
        %v1566 = vpop.permute.xlu0 %1565
        %1567 = vrot.lane.b32.xlu0 %v1424, 120
        %v1568 = vpop.permute.xlu0 %1567
        %1569 = vrot.lane.b32.xlu0 %v1425, 120
        %v1570 = vpop.permute.xlu0 %1569
        %1571 = vrot.lane.b32.xlu0 %v1426, 120
        %v1572 = vpop.permute.xlu0 %1571
        %1573 = vrot.lane.b32.xlu0 %v1427, 120
        %v1574 = vpop.permute.xlu0 %1573
        %1575 = vrot.lane.b32.xlu0 %v1428, 120
        %v1576 = vpop.permute.xlu0 %1575
        %1577 = vrot.lane.b32.xlu0 %v1429, 120
        %v1578 = vpop.permute.xlu0 %1577
        %1579 = vrot.lane.b32.xlu0 %v1430, 120
        %v1580 = vpop.permute.xlu0 %1579
        %1581 = vrot.lane.b32.xlu0 %v1431, 120
        %v1582 = vpop.permute.xlu0 %1581
        %1583 = vrot.lane.b32.xlu0 %v1432, 120
        %v1584 = vpop.permute.xlu0 %1583
        %1585 = vrot.lane.b32.xlu0 %v1433, 120
        %v1586 = vpop.permute.xlu0 %1585
        %1587 = vrot.lane.b32.xlu0 %v1434, 120
        %v1588 = vpop.permute.xlu0 %1587
        %1589 = vrot.lane.b32.xlu0 %v1435, 120
        %v1590 = vpop.permute.xlu0 %1589
        %1591 = vrot.lane.b32.xlu0 %v1436, 120
        %v1592 = vpop.permute.xlu0 %1591
        %1593 = vrot.lane.b32.xlu0 %v1437, 120
        %v1594 = vpop.permute.xlu0 %1593
        %1595 = vrot.lane.b32.xlu0 %v1438, 120
        %v1596 = vpop.permute.xlu0 %1595
        %1597 = vrot.lane.b32.xlu0 %v1439, 120
        %v1598 = vpop.permute.xlu0 %1597
        %1599 = vrot.lane.b32.xlu0 %v1440, 120
        %v1600 = vpop.permute.xlu0 %1599
        %1601 = vrot.lane.b32.xlu0 %v1441, 120
        %v1602 = vpop.permute.xlu0 %1601
        %1603 = vrot.lane.b32.xlu0 %v1442, 120
        %v1604 = vpop.permute.xlu0 %1603
        %1605 = vrot.lane.b32.xlu0 %v1443, 120
        %v1606 = vpop.permute.xlu0 %1605
        %1607 = vrot.lane.b32.xlu0 %v1444, 120
        %v1608 = vpop.permute.xlu0 %1607
        %1609 = vrot.lane.b32.xlu0 %v1445, 120
        %v1610 = vpop.permute.xlu0 %1609
        %1611 = vrot.lane.b32.xlu0 %v1446, 120
        %v1612 = vpop.permute.xlu0 %1611
        %1613 = vrot.lane.b32.xlu0 %v1447, 120
        %v1614 = vpop.permute.xlu0 %1613
        %1615 = vrot.lane.b32.xlu0 %v1448, 120
        %v1616 = vpop.permute.xlu0 %1615
        %1617 = vrot.lane.b32.xlu0 %v1449, 120
        %v1618 = vpop.permute.xlu0 %1617
        %1619 = vrot.lane.b32.xlu0 %v1450, 120
        %v1620 = vpop.permute.xlu0 %1619
        %1621 = vrot.lane.b32.xlu0 %v1451, 120
        %v1622 = vpop.permute.xlu0 %1621
        %1623 = vrot.lane.b32.xlu0 %v1452, 120
        %v1624 = vpop.permute.xlu0 %1623
        %1625 = vrot.lane.b32.xlu0 %v1453, 120
        %v1626 = vpop.permute.xlu0 %1625
        %1627 = vrot.lane.b32.xlu0 %v1454, 120
        %v1628 = vpop.permute.xlu0 %1627
        %1629 = vrot.lane.b32.xlu0 %v1455, 120
        %v1630 = vpop.permute.xlu0 %1629
        %1631 = vrot.lane.b32.xlu0 %v1456, 120
        %v1632 = vpop.permute.xlu0 %1631
        %1633 = vrot.lane.b32.xlu0 %v1457, 120
        %v1634 = vpop.permute.xlu0 %1633
        %1635 = vrot.lane.b32.xlu0 %v1458, 120
        %v1636 = vpop.permute.xlu0 %1635
        %1637 = vrot.lane.b32.xlu0 %v1459, 120
        %v1638 = vpop.permute.xlu0 %1637
        %1639 = vrot.lane.b32.xlu0 %v1460, 120
        %v1640 = vpop.permute.xlu0 %1639
        %1641 = vrot.lane.b32.xlu0 %v1461, 120
        %v1642 = vpop.permute.xlu0 %1641
        %1643 = vrot.lane.b32.xlu0 %v1462, 120
        %v1644 = vpop.permute.xlu0 %1643
        %1645 = vrot.lane.b32.xlu0 %v1463, 120
        %v1646 = vpop.permute.xlu0 %1645
        %1647 = vrot.lane.b32.xlu0 %v1464, 120
        %v1648 = vpop.permute.xlu0 %1647
        %1649 = vrot.lane.b32.xlu0 %v1465, 120
        %v1650 = vpop.permute.xlu0 %1649
        %1651 = vrot.lane.b32.xlu0 %v1466, 120
        %v1652 = vpop.permute.xlu0 %1651
        %1653 = vrot.lane.b32.xlu0 %v1467, 120
        %v1654 = vpop.permute.xlu0 %1653
        %1655 = vrot.lane.b32.xlu0 %v1468, 120
        %v1656 = vpop.permute.xlu0 %1655
        %1657 = vrot.lane.b32.xlu0 %v1469, 120
        %v1658 = vpop.permute.xlu0 %1657
        %1659 = vrot.lane.b32.xlu0 %v1470, 120
        %v1660 = vpop.permute.xlu0 %1659
        %1661 = vrot.lane.b32.xlu0 %v1471, 120
        %v1662 = vpop.permute.xlu0 %1661
        %1663 = vrot.lane.b32.xlu0 %v1472, 120
        %v1664 = vpop.permute.xlu0 %1663
        %v1729 = vadd.f32 %v1336, %v1538
        %v1730 = vadd.f32 %v1337, %v1540
        %v1731 = vadd.f32 %v1338, %v1542
        %v1732 = vadd.f32 %v1339, %v1544
        %v1733 = vadd.f32 %v1340, %v1546
        %v1734 = vadd.f32 %v1341, %v1548
        %v1735 = vadd.f32 %v1342, %v1550
        %v1736 = vadd.f32 %v1343, %v1552
        %v1737 = vadd.f32 %v1344, %v1554
        %v1738 = vadd.f32 %v1345, %v1556
        %v1739 = vadd.f32 %v1346, %v1558
        %v1740 = vadd.f32 %v1347, %v1560
        %v1741 = vadd.f32 %v1348, %v1562
        %v1742 = vadd.f32 %v1349, %v1564
        %v1743 = vadd.f32 %v1350, %v1566
        %v1744 = vadd.f32 %v1351, %v1568
        %v1745 = vadd.f32 %v1352, %v1570
        %v1746 = vadd.f32 %v1353, %v1572
        %v1747 = vadd.f32 %v1354, %v1574
        %v1748 = vadd.f32 %v1355, %v1576
        %v1749 = vadd.f32 %v1356, %v1578
        %v1750 = vadd.f32 %v1357, %v1580
        %v1751 = vadd.f32 %v1358, %v1582
        %v1752 = vadd.f32 %v1359, %v1584
        %v1753 = vadd.f32 %v1360, %v1586
        %v1754 = vadd.f32 %v1361, %v1588
        %v1755 = vadd.f32 %v1362, %v1590
        %v1756 = vadd.f32 %v1363, %v1592
        %v1757 = vadd.f32 %v1364, %v1594
        %v1758 = vadd.f32 %v1365, %v1596
        %v1759 = vadd.f32 %v1366, %v1598
        %v1760 = vadd.f32 %v1367, %v1600
        %v1761 = vadd.f32 %v1368, %v1602
        %v1762 = vadd.f32 %v1369, %v1604
        %v1763 = vadd.f32 %v1370, %v1606
        %v1764 = vadd.f32 %v1371, %v1608
        %v1765 = vadd.f32 %v1372, %v1610
        %v1766 = vadd.f32 %v1373, %v1612
        %v1767 = vadd.f32 %v1374, %v1614
        %v1768 = vadd.f32 %v1375, %v1616
        %v1769 = vadd.f32 %v1376, %v1618
        %v1770 = vadd.f32 %v1377, %v1620
        %v1771 = vadd.f32 %v1378, %v1622
        %v1772 = vadd.f32 %v1379, %v1624
        %v1773 = vadd.f32 %v1380, %v1626
        %v1774 = vadd.f32 %v1381, %v1628
        %v1775 = vadd.f32 %v1382, %v1630
        %v1776 = vadd.f32 %v1383, %v1632
        %v1777 = vadd.f32 %v1384, %v1634
        %v1778 = vadd.f32 %v1385, %v1636
        %v1779 = vadd.f32 %v1386, %v1638
        %v1780 = vadd.f32 %v1387, %v1640
        %v1781 = vadd.f32 %v1388, %v1642
        %v1782 = vadd.f32 %v1389, %v1644
        %v1783 = vadd.f32 %v1390, %v1646
        %v1784 = vadd.f32 %v1391, %v1648
        %v1785 = vadd.f32 %v1392, %v1650
        %v1786 = vadd.f32 %v1393, %v1652
        %v1787 = vadd.f32 %v1394, %v1654
        %v1788 = vadd.f32 %v1395, %v1656
        %v1789 = vadd.f32 %v1396, %v1658
        %v1790 = vadd.f32 %v1397, %v1660
        %v1791 = vadd.f32 %v1398, %v1662
        %v1792 = vadd.f32 %v1399, %v1664
        %v1793 = vld [vmem:[%s3 + $0x2] sm:$0x1]
        %v1794 = vlaneseq
        %v1795 = vshrl.u32 %v1794, 7
        %v1796 = vsub.s32 0, %v1795
        %v1797 = vrot.slane %v1793, %v1796
        %1799 = vrot.lane.b32.xlu0 %v1797, 16
        %v1800 = vpop.permute.xlu0 %1799
        %v1802 = vmul.f32 %v1133, %v1800
        %v1803 = vmul.f32 %v1135, %v1800
        %v1804 = vmul.f32 %v1137, %v1800
        %v1805 = vmul.f32 %v1139, %v1800
        %v1806 = vmul.f32 %v1141, %v1800
        %v1807 = vmul.f32 %v1143, %v1800
        %v1808 = vmul.f32 %v1145, %v1800
        %v1809 = vmul.f32 %v1147, %v1800
        %v1810 = vmul.f32 %v1149, %v1800
        %v1811 = vmul.f32 %v1151, %v1800
        %v1812 = vmul.f32 %v1153, %v1800
        %v1813 = vmul.f32 %v1155, %v1800
        %v1814 = vmul.f32 %v1157, %v1800
        %v1815 = vmul.f32 %v1159, %v1800
        %v1816 = vmul.f32 %v1161, %v1800
        %v1817 = vmul.f32 %v1163, %v1800
        %v1818 = vmul.f32 %v1165, %v1800
        %v1819 = vmul.f32 %v1167, %v1800
        %v1820 = vmul.f32 %v1169, %v1800
        %v1821 = vmul.f32 %v1171, %v1800
        %v1822 = vmul.f32 %v1173, %v1800
        %v1823 = vmul.f32 %v1175, %v1800
        %v1824 = vmul.f32 %v1177, %v1800
        %v1825 = vmul.f32 %v1179, %v1800
        %v1826 = vmul.f32 %v1181, %v1800
        %v1827 = vmul.f32 %v1183, %v1800
        %v1828 = vmul.f32 %v1185, %v1800
        %v1829 = vmul.f32 %v1187, %v1800
        %v1830 = vmul.f32 %v1189, %v1800
        %v1831 = vmul.f32 %v1191, %v1800
        %v1832 = vmul.f32 %v1193, %v1800
        %v1833 = vmul.f32 %v1195, %v1800
        %v1834 = vmul.f32 %v1197, %v1800
        %v1835 = vmul.f32 %v1199, %v1800
        %v1836 = vmul.f32 %v1201, %v1800
        %v1837 = vmul.f32 %v1203, %v1800
        %v1838 = vmul.f32 %v1205, %v1800
        %v1839 = vmul.f32 %v1207, %v1800
        %v1840 = vmul.f32 %v1209, %v1800
        %v1841 = vmul.f32 %v1211, %v1800
        %v1842 = vmul.f32 %v1213, %v1800
        %v1843 = vmul.f32 %v1215, %v1800
        %v1844 = vmul.f32 %v1217, %v1800
        %v1845 = vmul.f32 %v1219, %v1800
        %v1846 = vmul.f32 %v1221, %v1800
        %v1847 = vmul.f32 %v1223, %v1800
        %v1848 = vmul.f32 %v1225, %v1800
        %v1849 = vmul.f32 %v1227, %v1800
        %v1850 = vmul.f32 %v1229, %v1800
        %v1851 = vmul.f32 %v1231, %v1800
        %v1852 = vmul.f32 %v1233, %v1800
        %v1853 = vmul.f32 %v1235, %v1800
        %v1854 = vmul.f32 %v1237, %v1800
        %v1855 = vmul.f32 %v1239, %v1800
        %v1856 = vmul.f32 %v1241, %v1800
        %v1857 = vmul.f32 %v1243, %v1800
        %v1858 = vmul.f32 %v1245, %v1800
        %v1859 = vmul.f32 %v1247, %v1800
        %v1860 = vmul.f32 %v1249, %v1800
        %v1861 = vmul.f32 %v1251, %v1800
        %v1862 = vmul.f32 %v1253, %v1800
        %v1863 = vmul.f32 %v1255, %v1800
        %v1864 = vmul.f32 %v1257, %v1800
        %v1865 = vmul.f32 %v1259, %v1800
        %1930 = vrot.lane.b32.xlu0 %v1802, 112
        %v1931 = vpop.permute.xlu0 %1930
        %1932 = vrot.lane.b32.xlu0 %v1803, 112
        %v1933 = vpop.permute.xlu0 %1932
        %1934 = vrot.lane.b32.xlu0 %v1804, 112
        %v1935 = vpop.permute.xlu0 %1934
        %1936 = vrot.lane.b32.xlu0 %v1805, 112
        %v1937 = vpop.permute.xlu0 %1936
        %1938 = vrot.lane.b32.xlu0 %v1806, 112
        %v1939 = vpop.permute.xlu0 %1938
        %1940 = vrot.lane.b32.xlu0 %v1807, 112
        %v1941 = vpop.permute.xlu0 %1940
        %1942 = vrot.lane.b32.xlu0 %v1808, 112
        %v1943 = vpop.permute.xlu0 %1942
        %1944 = vrot.lane.b32.xlu0 %v1809, 112
        %v1945 = vpop.permute.xlu0 %1944
        %1946 = vrot.lane.b32.xlu0 %v1810, 112
        %v1947 = vpop.permute.xlu0 %1946
        %1948 = vrot.lane.b32.xlu0 %v1811, 112
        %v1949 = vpop.permute.xlu0 %1948
        %1950 = vrot.lane.b32.xlu0 %v1812, 112
        %v1951 = vpop.permute.xlu0 %1950
        %1952 = vrot.lane.b32.xlu0 %v1813, 112
        %v1953 = vpop.permute.xlu0 %1952
        %1954 = vrot.lane.b32.xlu0 %v1814, 112
        %v1955 = vpop.permute.xlu0 %1954
        %1956 = vrot.lane.b32.xlu0 %v1815, 112
        %v1957 = vpop.permute.xlu0 %1956
        %1958 = vrot.lane.b32.xlu0 %v1816, 112
        %v1959 = vpop.permute.xlu0 %1958
        %1960 = vrot.lane.b32.xlu0 %v1817, 112
        %v1961 = vpop.permute.xlu0 %1960
        %1962 = vrot.lane.b32.xlu0 %v1818, 112
        %v1963 = vpop.permute.xlu0 %1962
        %1964 = vrot.lane.b32.xlu0 %v1819, 112
        %v1965 = vpop.permute.xlu0 %1964
        %1966 = vrot.lane.b32.xlu0 %v1820, 112
        %v1967 = vpop.permute.xlu0 %1966
        %1968 = vrot.lane.b32.xlu0 %v1821, 112
        %v1969 = vpop.permute.xlu0 %1968
        %1970 = vrot.lane.b32.xlu0 %v1822, 112
        %v1971 = vpop.permute.xlu0 %1970
        %1972 = vrot.lane.b32.xlu0 %v1823, 112
        %v1973 = vpop.permute.xlu0 %1972
        %1974 = vrot.lane.b32.xlu0 %v1824, 112
        %v1975 = vpop.permute.xlu0 %1974
        %1976 = vrot.lane.b32.xlu0 %v1825, 112
        %v1977 = vpop.permute.xlu0 %1976
        %1978 = vrot.lane.b32.xlu0 %v1826, 112
        %v1979 = vpop.permute.xlu0 %1978
        %1980 = vrot.lane.b32.xlu0 %v1827, 112
        %v1981 = vpop.permute.xlu0 %1980
        %1982 = vrot.lane.b32.xlu0 %v1828, 112
        %v1983 = vpop.permute.xlu0 %1982
        %1984 = vrot.lane.b32.xlu0 %v1829, 112
        %v1985 = vpop.permute.xlu0 %1984
        %1986 = vrot.lane.b32.xlu0 %v1830, 112
        %v1987 = vpop.permute.xlu0 %1986
        %1988 = vrot.lane.b32.xlu0 %v1831, 112
        %v1989 = vpop.permute.xlu0 %1988
        %1990 = vrot.lane.b32.xlu0 %v1832, 112
        %v1991 = vpop.permute.xlu0 %1990
        %1992 = vrot.lane.b32.xlu0 %v1833, 112
        %v1993 = vpop.permute.xlu0 %1992
        %1994 = vrot.lane.b32.xlu0 %v1834, 112
        %v1995 = vpop.permute.xlu0 %1994
        %1996 = vrot.lane.b32.xlu0 %v1835, 112
        %v1997 = vpop.permute.xlu0 %1996
        %1998 = vrot.lane.b32.xlu0 %v1836, 112
        %v1999 = vpop.permute.xlu0 %1998
        %2000 = vrot.lane.b32.xlu0 %v1837, 112
        %v2001 = vpop.permute.xlu0 %2000
        %2002 = vrot.lane.b32.xlu0 %v1838, 112
        %v2003 = vpop.permute.xlu0 %2002
        %2004 = vrot.lane.b32.xlu0 %v1839, 112
        %v2005 = vpop.permute.xlu0 %2004
        %2006 = vrot.lane.b32.xlu0 %v1840, 112
        %v2007 = vpop.permute.xlu0 %2006
        %2008 = vrot.lane.b32.xlu0 %v1841, 112
        %v2009 = vpop.permute.xlu0 %2008
        %2010 = vrot.lane.b32.xlu0 %v1842, 112
        %v2011 = vpop.permute.xlu0 %2010
        %2012 = vrot.lane.b32.xlu0 %v1843, 112
        %v2013 = vpop.permute.xlu0 %2012
        %2014 = vrot.lane.b32.xlu0 %v1844, 112
        %v2015 = vpop.permute.xlu0 %2014
        %2016 = vrot.lane.b32.xlu0 %v1845, 112
        %v2017 = vpop.permute.xlu0 %2016
        %2018 = vrot.lane.b32.xlu0 %v1846, 112
        %v2019 = vpop.permute.xlu0 %2018
        %2020 = vrot.lane.b32.xlu0 %v1847, 112
        %v2021 = vpop.permute.xlu0 %2020
        %2022 = vrot.lane.b32.xlu0 %v1848, 112
        %v2023 = vpop.permute.xlu0 %2022
        %2024 = vrot.lane.b32.xlu0 %v1849, 112
        %v2025 = vpop.permute.xlu0 %2024
        %2026 = vrot.lane.b32.xlu0 %v1850, 112
        %v2027 = vpop.permute.xlu0 %2026
        %2028 = vrot.lane.b32.xlu0 %v1851, 112
        %v2029 = vpop.permute.xlu0 %2028
        %2030 = vrot.lane.b32.xlu0 %v1852, 112
        %v2031 = vpop.permute.xlu0 %2030
        %2032 = vrot.lane.b32.xlu0 %v1853, 112
        %v2033 = vpop.permute.xlu0 %2032
        %2034 = vrot.lane.b32.xlu0 %v1854, 112
        %v2035 = vpop.permute.xlu0 %2034
        %2036 = vrot.lane.b32.xlu0 %v1855, 112
        %v2037 = vpop.permute.xlu0 %2036
        %2038 = vrot.lane.b32.xlu0 %v1856, 112
        %v2039 = vpop.permute.xlu0 %2038
        %2040 = vrot.lane.b32.xlu0 %v1857, 112
        %v2041 = vpop.permute.xlu0 %2040
        %2042 = vrot.lane.b32.xlu0 %v1858, 112
        %v2043 = vpop.permute.xlu0 %2042
        %2044 = vrot.lane.b32.xlu0 %v1859, 112
        %v2045 = vpop.permute.xlu0 %2044
        %2046 = vrot.lane.b32.xlu0 %v1860, 112
        %v2047 = vpop.permute.xlu0 %2046
        %2048 = vrot.lane.b32.xlu0 %v1861, 112
        %v2049 = vpop.permute.xlu0 %2048
        %2050 = vrot.lane.b32.xlu0 %v1862, 112
        %v2051 = vpop.permute.xlu0 %2050
        %2052 = vrot.lane.b32.xlu0 %v1863, 112
        %v2053 = vpop.permute.xlu0 %2052
        %2054 = vrot.lane.b32.xlu0 %v1864, 112
        %v2055 = vpop.permute.xlu0 %2054
        %2056 = vrot.lane.b32.xlu0 %v1865, 112
        %v2057 = vpop.permute.xlu0 %2056
        %v2122 = vadd.f32 %v1729, %v1931
        %v2123 = vadd.f32 %v1730, %v1933
        %v2124 = vadd.f32 %v1731, %v1935
        %v2125 = vadd.f32 %v1732, %v1937
        %v2126 = vadd.f32 %v1733, %v1939
        %v2127 = vadd.f32 %v1734, %v1941
        %v2128 = vadd.f32 %v1735, %v1943
        %v2129 = vadd.f32 %v1736, %v1945
        %v2130 = vadd.f32 %v1737, %v1947
        %v2131 = vadd.f32 %v1738, %v1949
        %v2132 = vadd.f32 %v1739, %v1951
        %v2133 = vadd.f32 %v1740, %v1953
        %v2134 = vadd.f32 %v1741, %v1955
        %v2135 = vadd.f32 %v1742, %v1957
        %v2136 = vadd.f32 %v1743, %v1959
        %v2137 = vadd.f32 %v1744, %v1961
        %v2138 = vadd.f32 %v1745, %v1963
        %v2139 = vadd.f32 %v1746, %v1965
        %v2140 = vadd.f32 %v1747, %v1967
        %v2141 = vadd.f32 %v1748, %v1969
        %v2142 = vadd.f32 %v1749, %v1971
        %v2143 = vadd.f32 %v1750, %v1973
        %v2144 = vadd.f32 %v1751, %v1975
        %v2145 = vadd.f32 %v1752, %v1977
        %v2146 = vadd.f32 %v1753, %v1979
        %v2147 = vadd.f32 %v1754, %v1981
        %v2148 = vadd.f32 %v1755, %v1983
        %v2149 = vadd.f32 %v1756, %v1985
        %v2150 = vadd.f32 %v1757, %v1987
        %v2151 = vadd.f32 %v1758, %v1989
        %v2152 = vadd.f32 %v1759, %v1991
        %v2153 = vadd.f32 %v1760, %v1993
        %v2154 = vadd.f32 %v1761, %v1995
        %v2155 = vadd.f32 %v1762, %v1997
        %v2156 = vadd.f32 %v1763, %v1999
        %v2157 = vadd.f32 %v1764, %v2001
        %v2158 = vadd.f32 %v1765, %v2003
        %v2159 = vadd.f32 %v1766, %v2005
        %v2160 = vadd.f32 %v1767, %v2007
        %v2161 = vadd.f32 %v1768, %v2009
        %v2162 = vadd.f32 %v1769, %v2011
        %v2163 = vadd.f32 %v1770, %v2013
        %v2164 = vadd.f32 %v1771, %v2015
        %v2165 = vadd.f32 %v1772, %v2017
        %v2166 = vadd.f32 %v1773, %v2019
        %v2167 = vadd.f32 %v1774, %v2021
        %v2168 = vadd.f32 %v1775, %v2023
        %v2169 = vadd.f32 %v1776, %v2025
        %v2170 = vadd.f32 %v1777, %v2027
        %v2171 = vadd.f32 %v1778, %v2029
        %v2172 = vadd.f32 %v1779, %v2031
        %v2173 = vadd.f32 %v1780, %v2033
        %v2174 = vadd.f32 %v1781, %v2035
        %v2175 = vadd.f32 %v1782, %v2037
        %v2176 = vadd.f32 %v1783, %v2039
        %v2177 = vadd.f32 %v1784, %v2041
        %v2178 = vadd.f32 %v1785, %v2043
        %v2179 = vadd.f32 %v1786, %v2045
        %v2180 = vadd.f32 %v1787, %v2047
        %v2181 = vadd.f32 %v1788, %v2049
        %v2182 = vadd.f32 %v1789, %v2051
        %v2183 = vadd.f32 %v1790, %v2053
        %v2184 = vadd.f32 %v1791, %v2055
        %v2185 = vadd.f32 %v1792, %v2057
        %v2186 = vld [vmem:[%s3 + $0x3] sm:$0x1]
        %v2187 = vlaneseq
        %v2188 = vshrl.u32 %v2187, 7
        %v2189 = vsub.s32 0, %v2188
        %v2190 = vrot.slane %v2186, %v2189
        %2192 = vrot.lane.b32.xlu0 %v2190, 24
        %v2193 = vpop.permute.xlu0 %2192
        %v2195 = vmul.f32 %v1133, %v2193
        %v2196 = vmul.f32 %v1135, %v2193
        %v2197 = vmul.f32 %v1137, %v2193
        %v2198 = vmul.f32 %v1139, %v2193
        %v2199 = vmul.f32 %v1141, %v2193
        %v2200 = vmul.f32 %v1143, %v2193
        %v2201 = vmul.f32 %v1145, %v2193
        %v2202 = vmul.f32 %v1147, %v2193
        %v2203 = vmul.f32 %v1149, %v2193
        %v2204 = vmul.f32 %v1151, %v2193
        %v2205 = vmul.f32 %v1153, %v2193
        %v2206 = vmul.f32 %v1155, %v2193
        %v2207 = vmul.f32 %v1157, %v2193
        %v2208 = vmul.f32 %v1159, %v2193
        %v2209 = vmul.f32 %v1161, %v2193
        %v2210 = vmul.f32 %v1163, %v2193
        %v2211 = vmul.f32 %v1165, %v2193
        %v2212 = vmul.f32 %v1167, %v2193
        %v2213 = vmul.f32 %v1169, %v2193
        %v2214 = vmul.f32 %v1171, %v2193
        %v2215 = vmul.f32 %v1173, %v2193
        %v2216 = vmul.f32 %v1175, %v2193
        %v2217 = vmul.f32 %v1177, %v2193
        %v2218 = vmul.f32 %v1179, %v2193
        %v2219 = vmul.f32 %v1181, %v2193
        %v2220 = vmul.f32 %v1183, %v2193
        %v2221 = vmul.f32 %v1185, %v2193
        %v2222 = vmul.f32 %v1187, %v2193
        %v2223 = vmul.f32 %v1189, %v2193
        %v2224 = vmul.f32 %v1191, %v2193
        %v2225 = vmul.f32 %v1193, %v2193
        %v2226 = vmul.f32 %v1195, %v2193
        %v2227 = vmul.f32 %v1197, %v2193
        %v2228 = vmul.f32 %v1199, %v2193
        %v2229 = vmul.f32 %v1201, %v2193
        %v2230 = vmul.f32 %v1203, %v2193
        %v2231 = vmul.f32 %v1205, %v2193
        %v2232 = vmul.f32 %v1207, %v2193
        %v2233 = vmul.f32 %v1209, %v2193
        %v2234 = vmul.f32 %v1211, %v2193
        %v2235 = vmul.f32 %v1213, %v2193
        %v2236 = vmul.f32 %v1215, %v2193
        %v2237 = vmul.f32 %v1217, %v2193
        %v2238 = vmul.f32 %v1219, %v2193
        %v2239 = vmul.f32 %v1221, %v2193
        %v2240 = vmul.f32 %v1223, %v2193
        %v2241 = vmul.f32 %v1225, %v2193
        %v2242 = vmul.f32 %v1227, %v2193
        %v2243 = vmul.f32 %v1229, %v2193
        %v2244 = vmul.f32 %v1231, %v2193
        %v2245 = vmul.f32 %v1233, %v2193
        %v2246 = vmul.f32 %v1235, %v2193
        %v2247 = vmul.f32 %v1237, %v2193
        %v2248 = vmul.f32 %v1239, %v2193
        %v2249 = vmul.f32 %v1241, %v2193
        %v2250 = vmul.f32 %v1243, %v2193
        %v2251 = vmul.f32 %v1245, %v2193
        %v2252 = vmul.f32 %v1247, %v2193
        %v2253 = vmul.f32 %v1249, %v2193
        %v2254 = vmul.f32 %v1251, %v2193
        %v2255 = vmul.f32 %v1253, %v2193
        %v2256 = vmul.f32 %v1255, %v2193
        %v2257 = vmul.f32 %v1257, %v2193
        %v2258 = vmul.f32 %v1259, %v2193
        %2323 = vrot.lane.b32.xlu0 %v2195, 104
        %v2324 = vpop.permute.xlu0 %2323
        %2325 = vrot.lane.b32.xlu0 %v2196, 104
        %v2326 = vpop.permute.xlu0 %2325
        %2327 = vrot.lane.b32.xlu0 %v2197, 104
        %v2328 = vpop.permute.xlu0 %2327
        %2329 = vrot.lane.b32.xlu0 %v2198, 104
        %v2330 = vpop.permute.xlu0 %2329
        %2331 = vrot.lane.b32.xlu0 %v2199, 104
        %v2332 = vpop.permute.xlu0 %2331
        %2333 = vrot.lane.b32.xlu0 %v2200, 104
        %v2334 = vpop.permute.xlu0 %2333
        %2335 = vrot.lane.b32.xlu0 %v2201, 104
        %v2336 = vpop.permute.xlu0 %2335
        %2337 = vrot.lane.b32.xlu0 %v2202, 104
        %v2338 = vpop.permute.xlu0 %2337
        %2339 = vrot.lane.b32.xlu0 %v2203, 104
        %v2340 = vpop.permute.xlu0 %2339
        %2341 = vrot.lane.b32.xlu0 %v2204, 104
        %v2342 = vpop.permute.xlu0 %2341
        %2343 = vrot.lane.b32.xlu0 %v2205, 104
        %v2344 = vpop.permute.xlu0 %2343
        %2345 = vrot.lane.b32.xlu0 %v2206, 104
        %v2346 = vpop.permute.xlu0 %2345
        %2347 = vrot.lane.b32.xlu0 %v2207, 104
        %v2348 = vpop.permute.xlu0 %2347
        %2349 = vrot.lane.b32.xlu0 %v2208, 104
        %v2350 = vpop.permute.xlu0 %2349
        %2351 = vrot.lane.b32.xlu0 %v2209, 104
        %v2352 = vpop.permute.xlu0 %2351
        %2353 = vrot.lane.b32.xlu0 %v2210, 104
        %v2354 = vpop.permute.xlu0 %2353
        %2355 = vrot.lane.b32.xlu0 %v2211, 104
        %v2356 = vpop.permute.xlu0 %2355
        %2357 = vrot.lane.b32.xlu0 %v2212, 104
        %v2358 = vpop.permute.xlu0 %2357
        %2359 = vrot.lane.b32.xlu0 %v2213, 104
        %v2360 = vpop.permute.xlu0 %2359
        %2361 = vrot.lane.b32.xlu0 %v2214, 104
        %v2362 = vpop.permute.xlu0 %2361
        %2363 = vrot.lane.b32.xlu0 %v2215, 104
        %v2364 = vpop.permute.xlu0 %2363
        %2365 = vrot.lane.b32.xlu0 %v2216, 104
        %v2366 = vpop.permute.xlu0 %2365
        %2367 = vrot.lane.b32.xlu0 %v2217, 104
        %v2368 = vpop.permute.xlu0 %2367
        %2369 = vrot.lane.b32.xlu0 %v2218, 104
        %v2370 = vpop.permute.xlu0 %2369
        %2371 = vrot.lane.b32.xlu0 %v2219, 104
        %v2372 = vpop.permute.xlu0 %2371
        %2373 = vrot.lane.b32.xlu0 %v2220, 104
        %v2374 = vpop.permute.xlu0 %2373
        %2375 = vrot.lane.b32.xlu0 %v2221, 104
        %v2376 = vpop.permute.xlu0 %2375
        %2377 = vrot.lane.b32.xlu0 %v2222, 104
        %v2378 = vpop.permute.xlu0 %2377
        %2379 = vrot.lane.b32.xlu0 %v2223, 104
        %v2380 = vpop.permute.xlu0 %2379
        %2381 = vrot.lane.b32.xlu0 %v2224, 104
        %v2382 = vpop.permute.xlu0 %2381
        %2383 = vrot.lane.b32.xlu0 %v2225, 104
        %v2384 = vpop.permute.xlu0 %2383
        %2385 = vrot.lane.b32.xlu0 %v2226, 104
        %v2386 = vpop.permute.xlu0 %2385
        %2387 = vrot.lane.b32.xlu0 %v2227, 104
        %v2388 = vpop.permute.xlu0 %2387
        %2389 = vrot.lane.b32.xlu0 %v2228, 104
        %v2390 = vpop.permute.xlu0 %2389
        %2391 = vrot.lane.b32.xlu0 %v2229, 104
        %v2392 = vpop.permute.xlu0 %2391
        %2393 = vrot.lane.b32.xlu0 %v2230, 104
        %v2394 = vpop.permute.xlu0 %2393
        %2395 = vrot.lane.b32.xlu0 %v2231, 104
        %v2396 = vpop.permute.xlu0 %2395
        %2397 = vrot.lane.b32.xlu0 %v2232, 104
        %v2398 = vpop.permute.xlu0 %2397
        %2399 = vrot.lane.b32.xlu0 %v2233, 104
        %v2400 = vpop.permute.xlu0 %2399
        %2401 = vrot.lane.b32.xlu0 %v2234, 104
        %v2402 = vpop.permute.xlu0 %2401
        %2403 = vrot.lane.b32.xlu0 %v2235, 104
        %v2404 = vpop.permute.xlu0 %2403
        %2405 = vrot.lane.b32.xlu0 %v2236, 104
        %v2406 = vpop.permute.xlu0 %2405
        %2407 = vrot.lane.b32.xlu0 %v2237, 104
        %v2408 = vpop.permute.xlu0 %2407
        %2409 = vrot.lane.b32.xlu0 %v2238, 104
        %v2410 = vpop.permute.xlu0 %2409
        %2411 = vrot.lane.b32.xlu0 %v2239, 104
        %v2412 = vpop.permute.xlu0 %2411
        %2413 = vrot.lane.b32.xlu0 %v2240, 104
        %v2414 = vpop.permute.xlu0 %2413
        %2415 = vrot.lane.b32.xlu0 %v2241, 104
        %v2416 = vpop.permute.xlu0 %2415
        %2417 = vrot.lane.b32.xlu0 %v2242, 104
        %v2418 = vpop.permute.xlu0 %2417
        %2419 = vrot.lane.b32.xlu0 %v2243, 104
        %v2420 = vpop.permute.xlu0 %2419
        %2421 = vrot.lane.b32.xlu0 %v2244, 104
        %v2422 = vpop.permute.xlu0 %2421
        %2423 = vrot.lane.b32.xlu0 %v2245, 104
        %v2424 = vpop.permute.xlu0 %2423
        %2425 = vrot.lane.b32.xlu0 %v2246, 104
        %v2426 = vpop.permute.xlu0 %2425
        %2427 = vrot.lane.b32.xlu0 %v2247, 104
        %v2428 = vpop.permute.xlu0 %2427
        %2429 = vrot.lane.b32.xlu0 %v2248, 104
        %v2430 = vpop.permute.xlu0 %2429
        %2431 = vrot.lane.b32.xlu0 %v2249, 104
        %v2432 = vpop.permute.xlu0 %2431
        %2433 = vrot.lane.b32.xlu0 %v2250, 104
        %v2434 = vpop.permute.xlu0 %2433
        %2435 = vrot.lane.b32.xlu0 %v2251, 104
        %v2436 = vpop.permute.xlu0 %2435
        %2437 = vrot.lane.b32.xlu0 %v2252, 104
        %v2438 = vpop.permute.xlu0 %2437
        %2439 = vrot.lane.b32.xlu0 %v2253, 104
        %v2440 = vpop.permute.xlu0 %2439
        %2441 = vrot.lane.b32.xlu0 %v2254, 104
        %v2442 = vpop.permute.xlu0 %2441
        %2443 = vrot.lane.b32.xlu0 %v2255, 104
        %v2444 = vpop.permute.xlu0 %2443
        %2445 = vrot.lane.b32.xlu0 %v2256, 104
        %v2446 = vpop.permute.xlu0 %2445
        %2447 = vrot.lane.b32.xlu0 %v2257, 104
        %v2448 = vpop.permute.xlu0 %2447
        %2449 = vrot.lane.b32.xlu0 %v2258, 104
        %v2450 = vpop.permute.xlu0 %2449
        %v2515 = vadd.f32 %v2122, %v2324
        %v2516 = vadd.f32 %v2123, %v2326
        %v2517 = vadd.f32 %v2124, %v2328
        %v2518 = vadd.f32 %v2125, %v2330
        %v2519 = vadd.f32 %v2126, %v2332
        %v2520 = vadd.f32 %v2127, %v2334
        %v2521 = vadd.f32 %v2128, %v2336
        %v2522 = vadd.f32 %v2129, %v2338
        %v2523 = vadd.f32 %v2130, %v2340
        %v2524 = vadd.f32 %v2131, %v2342
        %v2525 = vadd.f32 %v2132, %v2344
        %v2526 = vadd.f32 %v2133, %v2346
        %v2527 = vadd.f32 %v2134, %v2348
        %v2528 = vadd.f32 %v2135, %v2350
        %v2529 = vadd.f32 %v2136, %v2352
        %v2530 = vadd.f32 %v2137, %v2354
        %v2531 = vadd.f32 %v2138, %v2356
        %v2532 = vadd.f32 %v2139, %v2358
        %v2533 = vadd.f32 %v2140, %v2360
        %v2534 = vadd.f32 %v2141, %v2362
        %v2535 = vadd.f32 %v2142, %v2364
        %v2536 = vadd.f32 %v2143, %v2366
        %v2537 = vadd.f32 %v2144, %v2368
        %v2538 = vadd.f32 %v2145, %v2370
        %v2539 = vadd.f32 %v2146, %v2372
        %v2540 = vadd.f32 %v2147, %v2374
        %v2541 = vadd.f32 %v2148, %v2376
        %v2542 = vadd.f32 %v2149, %v2378
        %v2543 = vadd.f32 %v2150, %v2380
        %v2544 = vadd.f32 %v2151, %v2382
        %v2545 = vadd.f32 %v2152, %v2384
        %v2546 = vadd.f32 %v2153, %v2386
        %v2547 = vadd.f32 %v2154, %v2388
        %v2548 = vadd.f32 %v2155, %v2390
        %v2549 = vadd.f32 %v2156, %v2392
        %v2550 = vadd.f32 %v2157, %v2394
        %v2551 = vadd.f32 %v2158, %v2396
        %v2552 = vadd.f32 %v2159, %v2398
        %v2553 = vadd.f32 %v2160, %v2400
        %v2554 = vadd.f32 %v2161, %v2402
        %v2555 = vadd.f32 %v2162, %v2404
        %v2556 = vadd.f32 %v2163, %v2406
        %v2557 = vadd.f32 %v2164, %v2408
        %v2558 = vadd.f32 %v2165, %v2410
        %v2559 = vadd.f32 %v2166, %v2412
        %v2560 = vadd.f32 %v2167, %v2414
        %v2561 = vadd.f32 %v2168, %v2416
        %v2562 = vadd.f32 %v2169, %v2418
        %v2563 = vadd.f32 %v2170, %v2420
        %v2564 = vadd.f32 %v2171, %v2422
        %v2565 = vadd.f32 %v2172, %v2424
        %v2566 = vadd.f32 %v2173, %v2426
        %v2567 = vadd.f32 %v2174, %v2428
        %v2568 = vadd.f32 %v2175, %v2430
        %v2569 = vadd.f32 %v2176, %v2432
        %v2570 = vadd.f32 %v2177, %v2434
        %v2571 = vadd.f32 %v2178, %v2436
        %v2572 = vadd.f32 %v2179, %v2438
        %v2573 = vadd.f32 %v2180, %v2440
        %v2574 = vadd.f32 %v2181, %v2442
        %v2575 = vadd.f32 %v2182, %v2444
        %v2576 = vadd.f32 %v2183, %v2446
        %v2577 = vadd.f32 %v2184, %v2448
        %v2578 = vadd.f32 %v2185, %v2450
        %v2579 = vld [vmem:[%s3 + $0x4] sm:$0x1]
        %v2580 = vlaneseq
        %v2581 = vshrl.u32 %v2580, 7
        %v2582 = vsub.s32 0, %v2581
        %v2583 = vrot.slane %v2579, %v2582
        %2585 = vrot.lane.b32.xlu0 %v2583, 32
        %v2586 = vpop.permute.xlu0 %2585
        %v2588 = vmul.f32 %v1133, %v2586
        %v2589 = vmul.f32 %v1135, %v2586
        %v2590 = vmul.f32 %v1137, %v2586
        %v2591 = vmul.f32 %v1139, %v2586
        %v2592 = vmul.f32 %v1141, %v2586
        %v2593 = vmul.f32 %v1143, %v2586
        %v2594 = vmul.f32 %v1145, %v2586
        %v2595 = vmul.f32 %v1147, %v2586
        %v2596 = vmul.f32 %v1149, %v2586
        %v2597 = vmul.f32 %v1151, %v2586
        %v2598 = vmul.f32 %v1153, %v2586
        %v2599 = vmul.f32 %v1155, %v2586
        %v2600 = vmul.f32 %v1157, %v2586
        %v2601 = vmul.f32 %v1159, %v2586
        %v2602 = vmul.f32 %v1161, %v2586
        %v2603 = vmul.f32 %v1163, %v2586
        %v2604 = vmul.f32 %v1165, %v2586
        %v2605 = vmul.f32 %v1167, %v2586
        %v2606 = vmul.f32 %v1169, %v2586
        %v2607 = vmul.f32 %v1171, %v2586
        %v2608 = vmul.f32 %v1173, %v2586
        %v2609 = vmul.f32 %v1175, %v2586
        %v2610 = vmul.f32 %v1177, %v2586
        %v2611 = vmul.f32 %v1179, %v2586
        %v2612 = vmul.f32 %v1181, %v2586
        %v2613 = vmul.f32 %v1183, %v2586
        %v2614 = vmul.f32 %v1185, %v2586
        %v2615 = vmul.f32 %v1187, %v2586
        %v2616 = vmul.f32 %v1189, %v2586
        %v2617 = vmul.f32 %v1191, %v2586
        %v2618 = vmul.f32 %v1193, %v2586
        %v2619 = vmul.f32 %v1195, %v2586
        %v2620 = vmul.f32 %v1197, %v2586
        %v2621 = vmul.f32 %v1199, %v2586
        %v2622 = vmul.f32 %v1201, %v2586
        %v2623 = vmul.f32 %v1203, %v2586
        %v2624 = vmul.f32 %v1205, %v2586
        %v2625 = vmul.f32 %v1207, %v2586
        %v2626 = vmul.f32 %v1209, %v2586
        %v2627 = vmul.f32 %v1211, %v2586
        %v2628 = vmul.f32 %v1213, %v2586
        %v2629 = vmul.f32 %v1215, %v2586
        %v2630 = vmul.f32 %v1217, %v2586
        %v2631 = vmul.f32 %v1219, %v2586
        %v2632 = vmul.f32 %v1221, %v2586
        %v2633 = vmul.f32 %v1223, %v2586
        %v2634 = vmul.f32 %v1225, %v2586
        %v2635 = vmul.f32 %v1227, %v2586
        %v2636 = vmul.f32 %v1229, %v2586
        %v2637 = vmul.f32 %v1231, %v2586
        %v2638 = vmul.f32 %v1233, %v2586
        %v2639 = vmul.f32 %v1235, %v2586
        %v2640 = vmul.f32 %v1237, %v2586
        %v2641 = vmul.f32 %v1239, %v2586
        %v2642 = vmul.f32 %v1241, %v2586
        %v2643 = vmul.f32 %v1243, %v2586
        %v2644 = vmul.f32 %v1245, %v2586
        %v2645 = vmul.f32 %v1247, %v2586
        %v2646 = vmul.f32 %v1249, %v2586
        %v2647 = vmul.f32 %v1251, %v2586
        %v2648 = vmul.f32 %v1253, %v2586
        %v2649 = vmul.f32 %v1255, %v2586
        %v2650 = vmul.f32 %v1257, %v2586
        %v2651 = vmul.f32 %v1259, %v2586
        %2716 = vrot.lane.b32.xlu0 %v2588, 96
        %v2717 = vpop.permute.xlu0 %2716
        %2718 = vrot.lane.b32.xlu0 %v2589, 96
        %v2719 = vpop.permute.xlu0 %2718
        %2720 = vrot.lane.b32.xlu0 %v2590, 96
        %v2721 = vpop.permute.xlu0 %2720
        %2722 = vrot.lane.b32.xlu0 %v2591, 96
        %v2723 = vpop.permute.xlu0 %2722
        %2724 = vrot.lane.b32.xlu0 %v2592, 96
        %v2725 = vpop.permute.xlu0 %2724
        %2726 = vrot.lane.b32.xlu0 %v2593, 96
        %v2727 = vpop.permute.xlu0 %2726
        %2728 = vrot.lane.b32.xlu0 %v2594, 96
        %v2729 = vpop.permute.xlu0 %2728
        %2730 = vrot.lane.b32.xlu0 %v2595, 96
        %v2731 = vpop.permute.xlu0 %2730
        %2732 = vrot.lane.b32.xlu0 %v2596, 96
        %v2733 = vpop.permute.xlu0 %2732
        %2734 = vrot.lane.b32.xlu0 %v2597, 96
        %v2735 = vpop.permute.xlu0 %2734
        %2736 = vrot.lane.b32.xlu0 %v2598, 96
        %v2737 = vpop.permute.xlu0 %2736
        %2738 = vrot.lane.b32.xlu0 %v2599, 96
        %v2739 = vpop.permute.xlu0 %2738
        %2740 = vrot.lane.b32.xlu0 %v2600, 96
        %v2741 = vpop.permute.xlu0 %2740
        %2742 = vrot.lane.b32.xlu0 %v2601, 96
        %v2743 = vpop.permute.xlu0 %2742
        %2744 = vrot.lane.b32.xlu0 %v2602, 96
        %v2745 = vpop.permute.xlu0 %2744
        %2746 = vrot.lane.b32.xlu0 %v2603, 96
        %v2747 = vpop.permute.xlu0 %2746
        %2748 = vrot.lane.b32.xlu0 %v2604, 96
        %v2749 = vpop.permute.xlu0 %2748
        %2750 = vrot.lane.b32.xlu0 %v2605, 96
        %v2751 = vpop.permute.xlu0 %2750
        %2752 = vrot.lane.b32.xlu0 %v2606, 96
        %v2753 = vpop.permute.xlu0 %2752
        %2754 = vrot.lane.b32.xlu0 %v2607, 96
        %v2755 = vpop.permute.xlu0 %2754
        %2756 = vrot.lane.b32.xlu0 %v2608, 96
        %v2757 = vpop.permute.xlu0 %2756
        %2758 = vrot.lane.b32.xlu0 %v2609, 96
        %v2759 = vpop.permute.xlu0 %2758
        %2760 = vrot.lane.b32.xlu0 %v2610, 96
        %v2761 = vpop.permute.xlu0 %2760
        %2762 = vrot.lane.b32.xlu0 %v2611, 96
        %v2763 = vpop.permute.xlu0 %2762
        %2764 = vrot.lane.b32.xlu0 %v2612, 96
        %v2765 = vpop.permute.xlu0 %2764
        %2766 = vrot.lane.b32.xlu0 %v2613, 96
        %v2767 = vpop.permute.xlu0 %2766
        %2768 = vrot.lane.b32.xlu0 %v2614, 96
        %v2769 = vpop.permute.xlu0 %2768
        %2770 = vrot.lane.b32.xlu0 %v2615, 96
        %v2771 = vpop.permute.xlu0 %2770
        %2772 = vrot.lane.b32.xlu0 %v2616, 96
        %v2773 = vpop.permute.xlu0 %2772
        %2774 = vrot.lane.b32.xlu0 %v2617, 96
        %v2775 = vpop.permute.xlu0 %2774
        %2776 = vrot.lane.b32.xlu0 %v2618, 96
        %v2777 = vpop.permute.xlu0 %2776
        %2778 = vrot.lane.b32.xlu0 %v2619, 96
        %v2779 = vpop.permute.xlu0 %2778
        %2780 = vrot.lane.b32.xlu0 %v2620, 96
        %v2781 = vpop.permute.xlu0 %2780
        %2782 = vrot.lane.b32.xlu0 %v2621, 96
        %v2783 = vpop.permute.xlu0 %2782
        %2784 = vrot.lane.b32.xlu0 %v2622, 96
        %v2785 = vpop.permute.xlu0 %2784
        %2786 = vrot.lane.b32.xlu0 %v2623, 96
        %v2787 = vpop.permute.xlu0 %2786
        %2788 = vrot.lane.b32.xlu0 %v2624, 96
        %v2789 = vpop.permute.xlu0 %2788
        %2790 = vrot.lane.b32.xlu0 %v2625, 96
        %v2791 = vpop.permute.xlu0 %2790
        %2792 = vrot.lane.b32.xlu0 %v2626, 96
        %v2793 = vpop.permute.xlu0 %2792
        %2794 = vrot.lane.b32.xlu0 %v2627, 96
        %v2795 = vpop.permute.xlu0 %2794
        %2796 = vrot.lane.b32.xlu0 %v2628, 96
        %v2797 = vpop.permute.xlu0 %2796
        %2798 = vrot.lane.b32.xlu0 %v2629, 96
        %v2799 = vpop.permute.xlu0 %2798
        %2800 = vrot.lane.b32.xlu0 %v2630, 96
        %v2801 = vpop.permute.xlu0 %2800
        %2802 = vrot.lane.b32.xlu0 %v2631, 96
        %v2803 = vpop.permute.xlu0 %2802
        %2804 = vrot.lane.b32.xlu0 %v2632, 96
        %v2805 = vpop.permute.xlu0 %2804
        %2806 = vrot.lane.b32.xlu0 %v2633, 96
        %v2807 = vpop.permute.xlu0 %2806
        %2808 = vrot.lane.b32.xlu0 %v2634, 96
        %v2809 = vpop.permute.xlu0 %2808
        %2810 = vrot.lane.b32.xlu0 %v2635, 96
        %v2811 = vpop.permute.xlu0 %2810
        %2812 = vrot.lane.b32.xlu0 %v2636, 96
        %v2813 = vpop.permute.xlu0 %2812
        %2814 = vrot.lane.b32.xlu0 %v2637, 96
        %v2815 = vpop.permute.xlu0 %2814
        %2816 = vrot.lane.b32.xlu0 %v2638, 96
        %v2817 = vpop.permute.xlu0 %2816
        %2818 = vrot.lane.b32.xlu0 %v2639, 96
        %v2819 = vpop.permute.xlu0 %2818
        %2820 = vrot.lane.b32.xlu0 %v2640, 96
        %v2821 = vpop.permute.xlu0 %2820
        %2822 = vrot.lane.b32.xlu0 %v2641, 96
        %v2823 = vpop.permute.xlu0 %2822
        %2824 = vrot.lane.b32.xlu0 %v2642, 96
        %v2825 = vpop.permute.xlu0 %2824
        %2826 = vrot.lane.b32.xlu0 %v2643, 96
        %v2827 = vpop.permute.xlu0 %2826
        %2828 = vrot.lane.b32.xlu0 %v2644, 96
        %v2829 = vpop.permute.xlu0 %2828
        %2830 = vrot.lane.b32.xlu0 %v2645, 96
        %v2831 = vpop.permute.xlu0 %2830
        %2832 = vrot.lane.b32.xlu0 %v2646, 96
        %v2833 = vpop.permute.xlu0 %2832
        %2834 = vrot.lane.b32.xlu0 %v2647, 96
        %v2835 = vpop.permute.xlu0 %2834
        %2836 = vrot.lane.b32.xlu0 %v2648, 96
        %v2837 = vpop.permute.xlu0 %2836
        %2838 = vrot.lane.b32.xlu0 %v2649, 96
        %v2839 = vpop.permute.xlu0 %2838
        %2840 = vrot.lane.b32.xlu0 %v2650, 96
        %v2841 = vpop.permute.xlu0 %2840
        %2842 = vrot.lane.b32.xlu0 %v2651, 96
        %v2843 = vpop.permute.xlu0 %2842
        %v2908 = vadd.f32 %v2515, %v2717
        %v2909 = vadd.f32 %v2516, %v2719
        %v2910 = vadd.f32 %v2517, %v2721
        %v2911 = vadd.f32 %v2518, %v2723
        %v2912 = vadd.f32 %v2519, %v2725
        %v2913 = vadd.f32 %v2520, %v2727
        %v2914 = vadd.f32 %v2521, %v2729
        %v2915 = vadd.f32 %v2522, %v2731
        %v2916 = vadd.f32 %v2523, %v2733
        %v2917 = vadd.f32 %v2524, %v2735
        %v2918 = vadd.f32 %v2525, %v2737
        %v2919 = vadd.f32 %v2526, %v2739
        %v2920 = vadd.f32 %v2527, %v2741
        %v2921 = vadd.f32 %v2528, %v2743
        %v2922 = vadd.f32 %v2529, %v2745
        %v2923 = vadd.f32 %v2530, %v2747
        %v2924 = vadd.f32 %v2531, %v2749
        %v2925 = vadd.f32 %v2532, %v2751
        %v2926 = vadd.f32 %v2533, %v2753
        %v2927 = vadd.f32 %v2534, %v2755
        %v2928 = vadd.f32 %v2535, %v2757
        %v2929 = vadd.f32 %v2536, %v2759
        %v2930 = vadd.f32 %v2537, %v2761
        %v2931 = vadd.f32 %v2538, %v2763
        %v2932 = vadd.f32 %v2539, %v2765
        %v2933 = vadd.f32 %v2540, %v2767
        %v2934 = vadd.f32 %v2541, %v2769
        %v2935 = vadd.f32 %v2542, %v2771
        %v2936 = vadd.f32 %v2543, %v2773
        %v2937 = vadd.f32 %v2544, %v2775
        %v2938 = vadd.f32 %v2545, %v2777
        %v2939 = vadd.f32 %v2546, %v2779
        %v2940 = vadd.f32 %v2547, %v2781
        %v2941 = vadd.f32 %v2548, %v2783
        %v2942 = vadd.f32 %v2549, %v2785
        %v2943 = vadd.f32 %v2550, %v2787
        %v2944 = vadd.f32 %v2551, %v2789
        %v2945 = vadd.f32 %v2552, %v2791
        %v2946 = vadd.f32 %v2553, %v2793
        %v2947 = vadd.f32 %v2554, %v2795
        %v2948 = vadd.f32 %v2555, %v2797
        %v2949 = vadd.f32 %v2556, %v2799
        %v2950 = vadd.f32 %v2557, %v2801
        %v2951 = vadd.f32 %v2558, %v2803
        %v2952 = vadd.f32 %v2559, %v2805
        %v2953 = vadd.f32 %v2560, %v2807
        %v2954 = vadd.f32 %v2561, %v2809
        %v2955 = vadd.f32 %v2562, %v2811
        %v2956 = vadd.f32 %v2563, %v2813
        %v2957 = vadd.f32 %v2564, %v2815
        %v2958 = vadd.f32 %v2565, %v2817
        %v2959 = vadd.f32 %v2566, %v2819
        %v2960 = vadd.f32 %v2567, %v2821
        %v2961 = vadd.f32 %v2568, %v2823
        %v2962 = vadd.f32 %v2569, %v2825
        %v2963 = vadd.f32 %v2570, %v2827
        %v2964 = vadd.f32 %v2571, %v2829
        %v2965 = vadd.f32 %v2572, %v2831
        %v2966 = vadd.f32 %v2573, %v2833
        %v2967 = vadd.f32 %v2574, %v2835
        %v2968 = vadd.f32 %v2575, %v2837
        %v2969 = vadd.f32 %v2576, %v2839
        %v2970 = vadd.f32 %v2577, %v2841
        %v2971 = vadd.f32 %v2578, %v2843
        %v2972 = vld [vmem:[%s3 + $0x5] sm:$0x1]
        %v2973 = vlaneseq
        %v2974 = vshrl.u32 %v2973, 7
        %v2975 = vsub.s32 0, %v2974
        %v2976 = vrot.slane %v2972, %v2975
        %2978 = vrot.lane.b32.xlu0 %v2976, 40
        %v2979 = vpop.permute.xlu0 %2978
        %v2981 = vmul.f32 %v1133, %v2979
        %v2982 = vmul.f32 %v1135, %v2979
        %v2983 = vmul.f32 %v1137, %v2979
        %v2984 = vmul.f32 %v1139, %v2979
        %v2985 = vmul.f32 %v1141, %v2979
        %v2986 = vmul.f32 %v1143, %v2979
        %v2987 = vmul.f32 %v1145, %v2979
        %v2988 = vmul.f32 %v1147, %v2979
        %v2989 = vmul.f32 %v1149, %v2979
        %v2990 = vmul.f32 %v1151, %v2979
        %v2991 = vmul.f32 %v1153, %v2979
        %v2992 = vmul.f32 %v1155, %v2979
        %v2993 = vmul.f32 %v1157, %v2979
        %v2994 = vmul.f32 %v1159, %v2979
        %v2995 = vmul.f32 %v1161, %v2979
        %v2996 = vmul.f32 %v1163, %v2979
        %v2997 = vmul.f32 %v1165, %v2979
        %v2998 = vmul.f32 %v1167, %v2979
        %v2999 = vmul.f32 %v1169, %v2979
        %v3000 = vmul.f32 %v1171, %v2979
        %v3001 = vmul.f32 %v1173, %v2979
        %v3002 = vmul.f32 %v1175, %v2979
        %v3003 = vmul.f32 %v1177, %v2979
        %v3004 = vmul.f32 %v1179, %v2979
        %v3005 = vmul.f32 %v1181, %v2979
        %v3006 = vmul.f32 %v1183, %v2979
        %v3007 = vmul.f32 %v1185, %v2979
        %v3008 = vmul.f32 %v1187, %v2979
        %v3009 = vmul.f32 %v1189, %v2979
        %v3010 = vmul.f32 %v1191, %v2979
        %v3011 = vmul.f32 %v1193, %v2979
        %v3012 = vmul.f32 %v1195, %v2979
        %v3013 = vmul.f32 %v1197, %v2979
        %v3014 = vmul.f32 %v1199, %v2979
        %v3015 = vmul.f32 %v1201, %v2979
        %v3016 = vmul.f32 %v1203, %v2979
        %v3017 = vmul.f32 %v1205, %v2979
        %v3018 = vmul.f32 %v1207, %v2979
        %v3019 = vmul.f32 %v1209, %v2979
        %v3020 = vmul.f32 %v1211, %v2979
        %v3021 = vmul.f32 %v1213, %v2979
        %v3022 = vmul.f32 %v1215, %v2979
        %v3023 = vmul.f32 %v1217, %v2979
        %v3024 = vmul.f32 %v1219, %v2979
        %v3025 = vmul.f32 %v1221, %v2979
        %v3026 = vmul.f32 %v1223, %v2979
        %v3027 = vmul.f32 %v1225, %v2979
        %v3028 = vmul.f32 %v1227, %v2979
        %v3029 = vmul.f32 %v1229, %v2979
        %v3030 = vmul.f32 %v1231, %v2979
        %v3031 = vmul.f32 %v1233, %v2979
        %v3032 = vmul.f32 %v1235, %v2979
        %v3033 = vmul.f32 %v1237, %v2979
        %v3034 = vmul.f32 %v1239, %v2979
        %v3035 = vmul.f32 %v1241, %v2979
        %v3036 = vmul.f32 %v1243, %v2979
        %v3037 = vmul.f32 %v1245, %v2979
        %v3038 = vmul.f32 %v1247, %v2979
        %v3039 = vmul.f32 %v1249, %v2979
        %v3040 = vmul.f32 %v1251, %v2979
        %v3041 = vmul.f32 %v1253, %v2979
        %v3042 = vmul.f32 %v1255, %v2979
        %v3043 = vmul.f32 %v1257, %v2979
        %v3044 = vmul.f32 %v1259, %v2979
        %3109 = vrot.lane.b32.xlu0 %v2981, 88
        %v3110 = vpop.permute.xlu0 %3109
        %3111 = vrot.lane.b32.xlu0 %v2982, 88
        %v3112 = vpop.permute.xlu0 %3111
        %3113 = vrot.lane.b32.xlu0 %v2983, 88
        %v3114 = vpop.permute.xlu0 %3113
        %3115 = vrot.lane.b32.xlu0 %v2984, 88
        %v3116 = vpop.permute.xlu0 %3115
        %3117 = vrot.lane.b32.xlu0 %v2985, 88
        %v3118 = vpop.permute.xlu0 %3117
        %3119 = vrot.lane.b32.xlu0 %v2986, 88
        %v3120 = vpop.permute.xlu0 %3119
        %3121 = vrot.lane.b32.xlu0 %v2987, 88
        %v3122 = vpop.permute.xlu0 %3121
        %3123 = vrot.lane.b32.xlu0 %v2988, 88
        %v3124 = vpop.permute.xlu0 %3123
        %3125 = vrot.lane.b32.xlu0 %v2989, 88
        %v3126 = vpop.permute.xlu0 %3125
        %3127 = vrot.lane.b32.xlu0 %v2990, 88
        %v3128 = vpop.permute.xlu0 %3127
        %3129 = vrot.lane.b32.xlu0 %v2991, 88
        %v3130 = vpop.permute.xlu0 %3129
        %3131 = vrot.lane.b32.xlu0 %v2992, 88
        %v3132 = vpop.permute.xlu0 %3131
        %3133 = vrot.lane.b32.xlu0 %v2993, 88
        %v3134 = vpop.permute.xlu0 %3133
        %3135 = vrot.lane.b32.xlu0 %v2994, 88
        %v3136 = vpop.permute.xlu0 %3135
        %3137 = vrot.lane.b32.xlu0 %v2995, 88
        %v3138 = vpop.permute.xlu0 %3137
        %3139 = vrot.lane.b32.xlu0 %v2996, 88
        %v3140 = vpop.permute.xlu0 %3139
        %3141 = vrot.lane.b32.xlu0 %v2997, 88
        %v3142 = vpop.permute.xlu0 %3141
        %3143 = vrot.lane.b32.xlu0 %v2998, 88
        %v3144 = vpop.permute.xlu0 %3143
        %3145 = vrot.lane.b32.xlu0 %v2999, 88
        %v3146 = vpop.permute.xlu0 %3145
        %3147 = vrot.lane.b32.xlu0 %v3000, 88
        %v3148 = vpop.permute.xlu0 %3147
        %3149 = vrot.lane.b32.xlu0 %v3001, 88
        %v3150 = vpop.permute.xlu0 %3149
        %3151 = vrot.lane.b32.xlu0 %v3002, 88
        %v3152 = vpop.permute.xlu0 %3151
        %3153 = vrot.lane.b32.xlu0 %v3003, 88
        %v3154 = vpop.permute.xlu0 %3153
        %3155 = vrot.lane.b32.xlu0 %v3004, 88
        %v3156 = vpop.permute.xlu0 %3155
        %3157 = vrot.lane.b32.xlu0 %v3005, 88
        %v3158 = vpop.permute.xlu0 %3157
        %3159 = vrot.lane.b32.xlu0 %v3006, 88
        %v3160 = vpop.permute.xlu0 %3159
        %3161 = vrot.lane.b32.xlu0 %v3007, 88
        %v3162 = vpop.permute.xlu0 %3161
        %3163 = vrot.lane.b32.xlu0 %v3008, 88
        %v3164 = vpop.permute.xlu0 %3163
        %3165 = vrot.lane.b32.xlu0 %v3009, 88
        %v3166 = vpop.permute.xlu0 %3165
        %3167 = vrot.lane.b32.xlu0 %v3010, 88
        %v3168 = vpop.permute.xlu0 %3167
        %3169 = vrot.lane.b32.xlu0 %v3011, 88
        %v3170 = vpop.permute.xlu0 %3169
        %3171 = vrot.lane.b32.xlu0 %v3012, 88
        %v3172 = vpop.permute.xlu0 %3171
        %3173 = vrot.lane.b32.xlu0 %v3013, 88
        %v3174 = vpop.permute.xlu0 %3173
        %3175 = vrot.lane.b32.xlu0 %v3014, 88
        %v3176 = vpop.permute.xlu0 %3175
        %3177 = vrot.lane.b32.xlu0 %v3015, 88
        %v3178 = vpop.permute.xlu0 %3177
        %3179 = vrot.lane.b32.xlu0 %v3016, 88
        %v3180 = vpop.permute.xlu0 %3179
        %3181 = vrot.lane.b32.xlu0 %v3017, 88
        %v3182 = vpop.permute.xlu0 %3181
        %3183 = vrot.lane.b32.xlu0 %v3018, 88
        %v3184 = vpop.permute.xlu0 %3183
        %3185 = vrot.lane.b32.xlu0 %v3019, 88
        %v3186 = vpop.permute.xlu0 %3185
        %3187 = vrot.lane.b32.xlu0 %v3020, 88
        %v3188 = vpop.permute.xlu0 %3187
        %3189 = vrot.lane.b32.xlu0 %v3021, 88
        %v3190 = vpop.permute.xlu0 %3189
        %3191 = vrot.lane.b32.xlu0 %v3022, 88
        %v3192 = vpop.permute.xlu0 %3191
        %3193 = vrot.lane.b32.xlu0 %v3023, 88
        %v3194 = vpop.permute.xlu0 %3193
        %3195 = vrot.lane.b32.xlu0 %v3024, 88
        %v3196 = vpop.permute.xlu0 %3195
        %3197 = vrot.lane.b32.xlu0 %v3025, 88
        %v3198 = vpop.permute.xlu0 %3197
        %3199 = vrot.lane.b32.xlu0 %v3026, 88
        %v3200 = vpop.permute.xlu0 %3199
        %3201 = vrot.lane.b32.xlu0 %v3027, 88
        %v3202 = vpop.permute.xlu0 %3201
        %3203 = vrot.lane.b32.xlu0 %v3028, 88
        %v3204 = vpop.permute.xlu0 %3203
        %3205 = vrot.lane.b32.xlu0 %v3029, 88
        %v3206 = vpop.permute.xlu0 %3205
        %3207 = vrot.lane.b32.xlu0 %v3030, 88
        %v3208 = vpop.permute.xlu0 %3207
        %3209 = vrot.lane.b32.xlu0 %v3031, 88
        %v3210 = vpop.permute.xlu0 %3209
        %3211 = vrot.lane.b32.xlu0 %v3032, 88
        %v3212 = vpop.permute.xlu0 %3211
        %3213 = vrot.lane.b32.xlu0 %v3033, 88
        %v3214 = vpop.permute.xlu0 %3213
        %3215 = vrot.lane.b32.xlu0 %v3034, 88
        %v3216 = vpop.permute.xlu0 %3215
        %3217 = vrot.lane.b32.xlu0 %v3035, 88
        %v3218 = vpop.permute.xlu0 %3217
        %3219 = vrot.lane.b32.xlu0 %v3036, 88
        %v3220 = vpop.permute.xlu0 %3219
        %3221 = vrot.lane.b32.xlu0 %v3037, 88
        %v3222 = vpop.permute.xlu0 %3221
        %3223 = vrot.lane.b32.xlu0 %v3038, 88
        %v3224 = vpop.permute.xlu0 %3223
        %3225 = vrot.lane.b32.xlu0 %v3039, 88
        %v3226 = vpop.permute.xlu0 %3225
        %3227 = vrot.lane.b32.xlu0 %v3040, 88
        %v3228 = vpop.permute.xlu0 %3227
        %3229 = vrot.lane.b32.xlu0 %v3041, 88
        %v3230 = vpop.permute.xlu0 %3229
        %3231 = vrot.lane.b32.xlu0 %v3042, 88
        %v3232 = vpop.permute.xlu0 %3231
        %3233 = vrot.lane.b32.xlu0 %v3043, 88
        %v3234 = vpop.permute.xlu0 %3233
        %3235 = vrot.lane.b32.xlu0 %v3044, 88
        %v3236 = vpop.permute.xlu0 %3235
        %v3301 = vadd.f32 %v2908, %v3110
        %v3302 = vadd.f32 %v2909, %v3112
        %v3303 = vadd.f32 %v2910, %v3114
        %v3304 = vadd.f32 %v2911, %v3116
        %v3305 = vadd.f32 %v2912, %v3118
        %v3306 = vadd.f32 %v2913, %v3120
        %v3307 = vadd.f32 %v2914, %v3122
        %v3308 = vadd.f32 %v2915, %v3124
        %v3309 = vadd.f32 %v2916, %v3126
        %v3310 = vadd.f32 %v2917, %v3128
        %v3311 = vadd.f32 %v2918, %v3130
        %v3312 = vadd.f32 %v2919, %v3132
        %v3313 = vadd.f32 %v2920, %v3134
        %v3314 = vadd.f32 %v2921, %v3136
        %v3315 = vadd.f32 %v2922, %v3138
        %v3316 = vadd.f32 %v2923, %v3140
        %v3317 = vadd.f32 %v2924, %v3142
        %v3318 = vadd.f32 %v2925, %v3144
        %v3319 = vadd.f32 %v2926, %v3146
        %v3320 = vadd.f32 %v2927, %v3148
        %v3321 = vadd.f32 %v2928, %v3150
        %v3322 = vadd.f32 %v2929, %v3152
        %v3323 = vadd.f32 %v2930, %v3154
        %v3324 = vadd.f32 %v2931, %v3156
        %v3325 = vadd.f32 %v2932, %v3158
        %v3326 = vadd.f32 %v2933, %v3160
        %v3327 = vadd.f32 %v2934, %v3162
        %v3328 = vadd.f32 %v2935, %v3164
        %v3329 = vadd.f32 %v2936, %v3166
        %v3330 = vadd.f32 %v2937, %v3168
        %v3331 = vadd.f32 %v2938, %v3170
        %v3332 = vadd.f32 %v2939, %v3172
        %v3333 = vadd.f32 %v2940, %v3174
        %v3334 = vadd.f32 %v2941, %v3176
        %v3335 = vadd.f32 %v2942, %v3178
        %v3336 = vadd.f32 %v2943, %v3180
        %v3337 = vadd.f32 %v2944, %v3182
        %v3338 = vadd.f32 %v2945, %v3184
        %v3339 = vadd.f32 %v2946, %v3186
        %v3340 = vadd.f32 %v2947, %v3188
        %v3341 = vadd.f32 %v2948, %v3190
        %v3342 = vadd.f32 %v2949, %v3192
        %v3343 = vadd.f32 %v2950, %v3194
        %v3344 = vadd.f32 %v2951, %v3196
        %v3345 = vadd.f32 %v2952, %v3198
        %v3346 = vadd.f32 %v2953, %v3200
        %v3347 = vadd.f32 %v2954, %v3202
        %v3348 = vadd.f32 %v2955, %v3204
        %v3349 = vadd.f32 %v2956, %v3206
        %v3350 = vadd.f32 %v2957, %v3208
        %v3351 = vadd.f32 %v2958, %v3210
        %v3352 = vadd.f32 %v2959, %v3212
        %v3353 = vadd.f32 %v2960, %v3214
        %v3354 = vadd.f32 %v2961, %v3216
        %v3355 = vadd.f32 %v2962, %v3218
        %v3356 = vadd.f32 %v2963, %v3220
        %v3357 = vadd.f32 %v2964, %v3222
        %v3358 = vadd.f32 %v2965, %v3224
        %v3359 = vadd.f32 %v2966, %v3226
        %v3360 = vadd.f32 %v2967, %v3228
        %v3361 = vadd.f32 %v2968, %v3230
        %v3362 = vadd.f32 %v2969, %v3232
        %v3363 = vadd.f32 %v2970, %v3234
        %v3364 = vadd.f32 %v2971, %v3236
        %v3365 = vld [vmem:[%s3 + $0x6] sm:$0x1]
        %v3366 = vlaneseq
        %v3367 = vshrl.u32 %v3366, 7
        %v3368 = vsub.s32 0, %v3367
        %v3369 = vrot.slane %v3365, %v3368
        %3371 = vrot.lane.b32.xlu0 %v3369, 48
        %v3372 = vpop.permute.xlu0 %3371
        %v3374 = vmul.f32 %v1133, %v3372
        %v3375 = vmul.f32 %v1135, %v3372
        %v3376 = vmul.f32 %v1137, %v3372
        %v3377 = vmul.f32 %v1139, %v3372
        %v3378 = vmul.f32 %v1141, %v3372
        %v3379 = vmul.f32 %v1143, %v3372
        %v3380 = vmul.f32 %v1145, %v3372
        %v3381 = vmul.f32 %v1147, %v3372
        %v3382 = vmul.f32 %v1149, %v3372
        %v3383 = vmul.f32 %v1151, %v3372
        %v3384 = vmul.f32 %v1153, %v3372
        %v3385 = vmul.f32 %v1155, %v3372
        %v3386 = vmul.f32 %v1157, %v3372
        %v3387 = vmul.f32 %v1159, %v3372
        %v3388 = vmul.f32 %v1161, %v3372
        %v3389 = vmul.f32 %v1163, %v3372
        %v3390 = vmul.f32 %v1165, %v3372
        %v3391 = vmul.f32 %v1167, %v3372
        %v3392 = vmul.f32 %v1169, %v3372
        %v3393 = vmul.f32 %v1171, %v3372
        %v3394 = vmul.f32 %v1173, %v3372
        %v3395 = vmul.f32 %v1175, %v3372
        %v3396 = vmul.f32 %v1177, %v3372
        %v3397 = vmul.f32 %v1179, %v3372
        %v3398 = vmul.f32 %v1181, %v3372
        %v3399 = vmul.f32 %v1183, %v3372
        %v3400 = vmul.f32 %v1185, %v3372
        %v3401 = vmul.f32 %v1187, %v3372
        %v3402 = vmul.f32 %v1189, %v3372
        %v3403 = vmul.f32 %v1191, %v3372
        %v3404 = vmul.f32 %v1193, %v3372
        %v3405 = vmul.f32 %v1195, %v3372
        %v3406 = vmul.f32 %v1197, %v3372
        %v3407 = vmul.f32 %v1199, %v3372
        %v3408 = vmul.f32 %v1201, %v3372
        %v3409 = vmul.f32 %v1203, %v3372
        %v3410 = vmul.f32 %v1205, %v3372
        %v3411 = vmul.f32 %v1207, %v3372
        %v3412 = vmul.f32 %v1209, %v3372
        %v3413 = vmul.f32 %v1211, %v3372
        %v3414 = vmul.f32 %v1213, %v3372
        %v3415 = vmul.f32 %v1215, %v3372
        %v3416 = vmul.f32 %v1217, %v3372
        %v3417 = vmul.f32 %v1219, %v3372
        %v3418 = vmul.f32 %v1221, %v3372
        %v3419 = vmul.f32 %v1223, %v3372
        %v3420 = vmul.f32 %v1225, %v3372
        %v3421 = vmul.f32 %v1227, %v3372
        %v3422 = vmul.f32 %v1229, %v3372
        %v3423 = vmul.f32 %v1231, %v3372
        %v3424 = vmul.f32 %v1233, %v3372
        %v3425 = vmul.f32 %v1235, %v3372
        %v3426 = vmul.f32 %v1237, %v3372
        %v3427 = vmul.f32 %v1239, %v3372
        %v3428 = vmul.f32 %v1241, %v3372
        %v3429 = vmul.f32 %v1243, %v3372
        %v3430 = vmul.f32 %v1245, %v3372
        %v3431 = vmul.f32 %v1247, %v3372
        %v3432 = vmul.f32 %v1249, %v3372
        %v3433 = vmul.f32 %v1251, %v3372
        %v3434 = vmul.f32 %v1253, %v3372
        %v3435 = vmul.f32 %v1255, %v3372
        %v3436 = vmul.f32 %v1257, %v3372
        %v3437 = vmul.f32 %v1259, %v3372
        %3502 = vrot.lane.b32.xlu0 %v3374, 80
        %v3503 = vpop.permute.xlu0 %3502
        %3504 = vrot.lane.b32.xlu0 %v3375, 80
        %v3505 = vpop.permute.xlu0 %3504
        %3506 = vrot.lane.b32.xlu0 %v3376, 80
        %v3507 = vpop.permute.xlu0 %3506
        %3508 = vrot.lane.b32.xlu0 %v3377, 80
        %v3509 = vpop.permute.xlu0 %3508
        %3510 = vrot.lane.b32.xlu0 %v3378, 80
        %v3511 = vpop.permute.xlu0 %3510
        %3512 = vrot.lane.b32.xlu0 %v3379, 80
        %v3513 = vpop.permute.xlu0 %3512
        %3514 = vrot.lane.b32.xlu0 %v3380, 80
        %v3515 = vpop.permute.xlu0 %3514
        %3516 = vrot.lane.b32.xlu0 %v3381, 80
        %v3517 = vpop.permute.xlu0 %3516
        %3518 = vrot.lane.b32.xlu0 %v3382, 80
        %v3519 = vpop.permute.xlu0 %3518
        %3520 = vrot.lane.b32.xlu0 %v3383, 80
        %v3521 = vpop.permute.xlu0 %3520
        %3522 = vrot.lane.b32.xlu0 %v3384, 80
        %v3523 = vpop.permute.xlu0 %3522
        %3524 = vrot.lane.b32.xlu0 %v3385, 80
        %v3525 = vpop.permute.xlu0 %3524
        %3526 = vrot.lane.b32.xlu0 %v3386, 80
        %v3527 = vpop.permute.xlu0 %3526
        %3528 = vrot.lane.b32.xlu0 %v3387, 80
        %v3529 = vpop.permute.xlu0 %3528
        %3530 = vrot.lane.b32.xlu0 %v3388, 80
        %v3531 = vpop.permute.xlu0 %3530
        %3532 = vrot.lane.b32.xlu0 %v3389, 80
        %v3533 = vpop.permute.xlu0 %3532
        %3534 = vrot.lane.b32.xlu0 %v3390, 80
        %v3535 = vpop.permute.xlu0 %3534
        %3536 = vrot.lane.b32.xlu0 %v3391, 80
        %v3537 = vpop.permute.xlu0 %3536
        %3538 = vrot.lane.b32.xlu0 %v3392, 80
        %v3539 = vpop.permute.xlu0 %3538
        %3540 = vrot.lane.b32.xlu0 %v3393, 80
        %v3541 = vpop.permute.xlu0 %3540
        %3542 = vrot.lane.b32.xlu0 %v3394, 80
        %v3543 = vpop.permute.xlu0 %3542
        %3544 = vrot.lane.b32.xlu0 %v3395, 80
        %v3545 = vpop.permute.xlu0 %3544
        %3546 = vrot.lane.b32.xlu0 %v3396, 80
        %v3547 = vpop.permute.xlu0 %3546
        %3548 = vrot.lane.b32.xlu0 %v3397, 80
        %v3549 = vpop.permute.xlu0 %3548
        %3550 = vrot.lane.b32.xlu0 %v3398, 80
        %v3551 = vpop.permute.xlu0 %3550
        %3552 = vrot.lane.b32.xlu0 %v3399, 80
        %v3553 = vpop.permute.xlu0 %3552
        %3554 = vrot.lane.b32.xlu0 %v3400, 80
        %v3555 = vpop.permute.xlu0 %3554
        %3556 = vrot.lane.b32.xlu0 %v3401, 80
        %v3557 = vpop.permute.xlu0 %3556
        %3558 = vrot.lane.b32.xlu0 %v3402, 80
        %v3559 = vpop.permute.xlu0 %3558
        %3560 = vrot.lane.b32.xlu0 %v3403, 80
        %v3561 = vpop.permute.xlu0 %3560
        %3562 = vrot.lane.b32.xlu0 %v3404, 80
        %v3563 = vpop.permute.xlu0 %3562
        %3564 = vrot.lane.b32.xlu0 %v3405, 80
        %v3565 = vpop.permute.xlu0 %3564
        %3566 = vrot.lane.b32.xlu0 %v3406, 80
        %v3567 = vpop.permute.xlu0 %3566
        %3568 = vrot.lane.b32.xlu0 %v3407, 80
        %v3569 = vpop.permute.xlu0 %3568
        %3570 = vrot.lane.b32.xlu0 %v3408, 80
        %v3571 = vpop.permute.xlu0 %3570
        %3572 = vrot.lane.b32.xlu0 %v3409, 80
        %v3573 = vpop.permute.xlu0 %3572
        %3574 = vrot.lane.b32.xlu0 %v3410, 80
        %v3575 = vpop.permute.xlu0 %3574
        %3576 = vrot.lane.b32.xlu0 %v3411, 80
        %v3577 = vpop.permute.xlu0 %3576
        %3578 = vrot.lane.b32.xlu0 %v3412, 80
        %v3579 = vpop.permute.xlu0 %3578
        %3580 = vrot.lane.b32.xlu0 %v3413, 80
        %v3581 = vpop.permute.xlu0 %3580
        %3582 = vrot.lane.b32.xlu0 %v3414, 80
        %v3583 = vpop.permute.xlu0 %3582
        %3584 = vrot.lane.b32.xlu0 %v3415, 80
        %v3585 = vpop.permute.xlu0 %3584
        %3586 = vrot.lane.b32.xlu0 %v3416, 80
        %v3587 = vpop.permute.xlu0 %3586
        %3588 = vrot.lane.b32.xlu0 %v3417, 80
        %v3589 = vpop.permute.xlu0 %3588
        %3590 = vrot.lane.b32.xlu0 %v3418, 80
        %v3591 = vpop.permute.xlu0 %3590
        %3592 = vrot.lane.b32.xlu0 %v3419, 80
        %v3593 = vpop.permute.xlu0 %3592
        %3594 = vrot.lane.b32.xlu0 %v3420, 80
        %v3595 = vpop.permute.xlu0 %3594
        %3596 = vrot.lane.b32.xlu0 %v3421, 80
        %v3597 = vpop.permute.xlu0 %3596
        %3598 = vrot.lane.b32.xlu0 %v3422, 80
        %v3599 = vpop.permute.xlu0 %3598
        %3600 = vrot.lane.b32.xlu0 %v3423, 80
        %v3601 = vpop.permute.xlu0 %3600
        %3602 = vrot.lane.b32.xlu0 %v3424, 80
        %v3603 = vpop.permute.xlu0 %3602
        %3604 = vrot.lane.b32.xlu0 %v3425, 80
        %v3605 = vpop.permute.xlu0 %3604
        %3606 = vrot.lane.b32.xlu0 %v3426, 80
        %v3607 = vpop.permute.xlu0 %3606
        %3608 = vrot.lane.b32.xlu0 %v3427, 80
        %v3609 = vpop.permute.xlu0 %3608
        %3610 = vrot.lane.b32.xlu0 %v3428, 80
        %v3611 = vpop.permute.xlu0 %3610
        %3612 = vrot.lane.b32.xlu0 %v3429, 80
        %v3613 = vpop.permute.xlu0 %3612
        %3614 = vrot.lane.b32.xlu0 %v3430, 80
        %v3615 = vpop.permute.xlu0 %3614
        %3616 = vrot.lane.b32.xlu0 %v3431, 80
        %v3617 = vpop.permute.xlu0 %3616
        %3618 = vrot.lane.b32.xlu0 %v3432, 80
        %v3619 = vpop.permute.xlu0 %3618
        %3620 = vrot.lane.b32.xlu0 %v3433, 80
        %v3621 = vpop.permute.xlu0 %3620
        %3622 = vrot.lane.b32.xlu0 %v3434, 80
        %v3623 = vpop.permute.xlu0 %3622
        %3624 = vrot.lane.b32.xlu0 %v3435, 80
        %v3625 = vpop.permute.xlu0 %3624
        %3626 = vrot.lane.b32.xlu0 %v3436, 80
        %v3627 = vpop.permute.xlu0 %3626
        %3628 = vrot.lane.b32.xlu0 %v3437, 80
        %v3629 = vpop.permute.xlu0 %3628
        %v3694 = vadd.f32 %v3301, %v3503
        %v3695 = vadd.f32 %v3302, %v3505
        %v3696 = vadd.f32 %v3303, %v3507
        %v3697 = vadd.f32 %v3304, %v3509
        %v3698 = vadd.f32 %v3305, %v3511
        %v3699 = vadd.f32 %v3306, %v3513
        %v3700 = vadd.f32 %v3307, %v3515
        %v3701 = vadd.f32 %v3308, %v3517
        %v3702 = vadd.f32 %v3309, %v3519
        %v3703 = vadd.f32 %v3310, %v3521
        %v3704 = vadd.f32 %v3311, %v3523
        %v3705 = vadd.f32 %v3312, %v3525
        %v3706 = vadd.f32 %v3313, %v3527
        %v3707 = vadd.f32 %v3314, %v3529
        %v3708 = vadd.f32 %v3315, %v3531
        %v3709 = vadd.f32 %v3316, %v3533
        %v3710 = vadd.f32 %v3317, %v3535
        %v3711 = vadd.f32 %v3318, %v3537
        %v3712 = vadd.f32 %v3319, %v3539
        %v3713 = vadd.f32 %v3320, %v3541
        %v3714 = vadd.f32 %v3321, %v3543
        %v3715 = vadd.f32 %v3322, %v3545
        %v3716 = vadd.f32 %v3323, %v3547
        %v3717 = vadd.f32 %v3324, %v3549
        %v3718 = vadd.f32 %v3325, %v3551
        %v3719 = vadd.f32 %v3326, %v3553
        %v3720 = vadd.f32 %v3327, %v3555
        %v3721 = vadd.f32 %v3328, %v3557
        %v3722 = vadd.f32 %v3329, %v3559
        %v3723 = vadd.f32 %v3330, %v3561
        %v3724 = vadd.f32 %v3331, %v3563
        %v3725 = vadd.f32 %v3332, %v3565
        %v3726 = vadd.f32 %v3333, %v3567
        %v3727 = vadd.f32 %v3334, %v3569
        %v3728 = vadd.f32 %v3335, %v3571
        %v3729 = vadd.f32 %v3336, %v3573
        %v3730 = vadd.f32 %v3337, %v3575
        %v3731 = vadd.f32 %v3338, %v3577
        %v3732 = vadd.f32 %v3339, %v3579
        %v3733 = vadd.f32 %v3340, %v3581
        %v3734 = vadd.f32 %v3341, %v3583
        %v3735 = vadd.f32 %v3342, %v3585
        %v3736 = vadd.f32 %v3343, %v3587
        %v3737 = vadd.f32 %v3344, %v3589
        %v3738 = vadd.f32 %v3345, %v3591
        %v3739 = vadd.f32 %v3346, %v3593
        %v3740 = vadd.f32 %v3347, %v3595
        %v3741 = vadd.f32 %v3348, %v3597
        %v3742 = vadd.f32 %v3349, %v3599
        %v3743 = vadd.f32 %v3350, %v3601
        %v3744 = vadd.f32 %v3351, %v3603
        %v3745 = vadd.f32 %v3352, %v3605
        %v3746 = vadd.f32 %v3353, %v3607
        %v3747 = vadd.f32 %v3354, %v3609
        %v3748 = vadd.f32 %v3355, %v3611
        %v3749 = vadd.f32 %v3356, %v3613
        %v3750 = vadd.f32 %v3357, %v3615
        %v3751 = vadd.f32 %v3358, %v3617
        %v3752 = vadd.f32 %v3359, %v3619
        %v3753 = vadd.f32 %v3360, %v3621
        %v3754 = vadd.f32 %v3361, %v3623
        %v3755 = vadd.f32 %v3362, %v3625
        %v3756 = vadd.f32 %v3363, %v3627
        %v3757 = vadd.f32 %v3364, %v3629
        %v3758 = vld [vmem:[%s3 + $0x7] sm:$0x1]
        %v3759 = vlaneseq
        %v3760 = vshrl.u32 %v3759, 7
        %v3761 = vsub.s32 0, %v3760
        %v3762 = vrot.slane %v3758, %v3761
        %3764 = vrot.lane.b32.xlu0 %v3762, 56
        %v3765 = vpop.permute.xlu0 %3764
        %v3767 = vmul.f32 %v1133, %v3765
        %v3768 = vmul.f32 %v1135, %v3765
        %v3769 = vmul.f32 %v1137, %v3765
        %v3770 = vmul.f32 %v1139, %v3765
        %v3771 = vmul.f32 %v1141, %v3765
        %v3772 = vmul.f32 %v1143, %v3765
        %v3773 = vmul.f32 %v1145, %v3765
        %v3774 = vmul.f32 %v1147, %v3765
        %v3775 = vmul.f32 %v1149, %v3765
        %v3776 = vmul.f32 %v1151, %v3765
        %v3777 = vmul.f32 %v1153, %v3765
        %v3778 = vmul.f32 %v1155, %v3765
        %v3779 = vmul.f32 %v1157, %v3765
        %v3780 = vmul.f32 %v1159, %v3765
        %v3781 = vmul.f32 %v1161, %v3765
        %v3782 = vmul.f32 %v1163, %v3765
        %v3783 = vmul.f32 %v1165, %v3765
        %v3784 = vmul.f32 %v1167, %v3765
        %v3785 = vmul.f32 %v1169, %v3765
        %v3786 = vmul.f32 %v1171, %v3765
        %v3787 = vmul.f32 %v1173, %v3765
        %v3788 = vmul.f32 %v1175, %v3765
        %v3789 = vmul.f32 %v1177, %v3765
        %v3790 = vmul.f32 %v1179, %v3765
        %v3791 = vmul.f32 %v1181, %v3765
        %v3792 = vmul.f32 %v1183, %v3765
        %v3793 = vmul.f32 %v1185, %v3765
        %v3794 = vmul.f32 %v1187, %v3765
        %v3795 = vmul.f32 %v1189, %v3765
        %v3796 = vmul.f32 %v1191, %v3765
        %v3797 = vmul.f32 %v1193, %v3765
        %v3798 = vmul.f32 %v1195, %v3765
        %v3799 = vmul.f32 %v1197, %v3765
        %v3800 = vmul.f32 %v1199, %v3765
        %v3801 = vmul.f32 %v1201, %v3765
        %v3802 = vmul.f32 %v1203, %v3765
        %v3803 = vmul.f32 %v1205, %v3765
        %v3804 = vmul.f32 %v1207, %v3765
        %v3805 = vmul.f32 %v1209, %v3765
        %v3806 = vmul.f32 %v1211, %v3765
        %v3807 = vmul.f32 %v1213, %v3765
        %v3808 = vmul.f32 %v1215, %v3765
        %v3809 = vmul.f32 %v1217, %v3765
        %v3810 = vmul.f32 %v1219, %v3765
        %v3811 = vmul.f32 %v1221, %v3765
        %v3812 = vmul.f32 %v1223, %v3765
        %v3813 = vmul.f32 %v1225, %v3765
        %v3814 = vmul.f32 %v1227, %v3765
        %v3815 = vmul.f32 %v1229, %v3765
        %v3816 = vmul.f32 %v1231, %v3765
        %v3817 = vmul.f32 %v1233, %v3765
        %v3818 = vmul.f32 %v1235, %v3765
        %v3819 = vmul.f32 %v1237, %v3765
        %v3820 = vmul.f32 %v1239, %v3765
        %v3821 = vmul.f32 %v1241, %v3765
        %v3822 = vmul.f32 %v1243, %v3765
        %v3823 = vmul.f32 %v1245, %v3765
        %v3824 = vmul.f32 %v1247, %v3765
        %v3825 = vmul.f32 %v1249, %v3765
        %v3826 = vmul.f32 %v1251, %v3765
        %v3827 = vmul.f32 %v1253, %v3765
        %v3828 = vmul.f32 %v1255, %v3765
        %v3829 = vmul.f32 %v1257, %v3765
        %v3830 = vmul.f32 %v1259, %v3765
        %3895 = vrot.lane.b32.xlu0 %v3767, 72
        %v3896 = vpop.permute.xlu0 %3895
        %3897 = vrot.lane.b32.xlu0 %v3768, 72
        %v3898 = vpop.permute.xlu0 %3897
        %3899 = vrot.lane.b32.xlu0 %v3769, 72
        %v3900 = vpop.permute.xlu0 %3899
        %3901 = vrot.lane.b32.xlu0 %v3770, 72
        %v3902 = vpop.permute.xlu0 %3901
        %3903 = vrot.lane.b32.xlu0 %v3771, 72
        %v3904 = vpop.permute.xlu0 %3903
        %3905 = vrot.lane.b32.xlu0 %v3772, 72
        %v3906 = vpop.permute.xlu0 %3905
        %3907 = vrot.lane.b32.xlu0 %v3773, 72
        %v3908 = vpop.permute.xlu0 %3907
        %3909 = vrot.lane.b32.xlu0 %v3774, 72
        %v3910 = vpop.permute.xlu0 %3909
        %3911 = vrot.lane.b32.xlu0 %v3775, 72
        %v3912 = vpop.permute.xlu0 %3911
        %3913 = vrot.lane.b32.xlu0 %v3776, 72
        %v3914 = vpop.permute.xlu0 %3913
        %3915 = vrot.lane.b32.xlu0 %v3777, 72
        %v3916 = vpop.permute.xlu0 %3915
        %3917 = vrot.lane.b32.xlu0 %v3778, 72
        %v3918 = vpop.permute.xlu0 %3917
        %3919 = vrot.lane.b32.xlu0 %v3779, 72
        %v3920 = vpop.permute.xlu0 %3919
        %3921 = vrot.lane.b32.xlu0 %v3780, 72
        %v3922 = vpop.permute.xlu0 %3921
        %3923 = vrot.lane.b32.xlu0 %v3781, 72
        %v3924 = vpop.permute.xlu0 %3923
        %3925 = vrot.lane.b32.xlu0 %v3782, 72
        %v3926 = vpop.permute.xlu0 %3925
        %3927 = vrot.lane.b32.xlu0 %v3783, 72
        %v3928 = vpop.permute.xlu0 %3927
        %3929 = vrot.lane.b32.xlu0 %v3784, 72
        %v3930 = vpop.permute.xlu0 %3929
        %3931 = vrot.lane.b32.xlu0 %v3785, 72
        %v3932 = vpop.permute.xlu0 %3931
        %3933 = vrot.lane.b32.xlu0 %v3786, 72
        %v3934 = vpop.permute.xlu0 %3933
        %3935 = vrot.lane.b32.xlu0 %v3787, 72
        %v3936 = vpop.permute.xlu0 %3935
        %3937 = vrot.lane.b32.xlu0 %v3788, 72
        %v3938 = vpop.permute.xlu0 %3937
        %3939 = vrot.lane.b32.xlu0 %v3789, 72
        %v3940 = vpop.permute.xlu0 %3939
        %3941 = vrot.lane.b32.xlu0 %v3790, 72
        %v3942 = vpop.permute.xlu0 %3941
        %3943 = vrot.lane.b32.xlu0 %v3791, 72
        %v3944 = vpop.permute.xlu0 %3943
        %3945 = vrot.lane.b32.xlu0 %v3792, 72
        %v3946 = vpop.permute.xlu0 %3945
        %3947 = vrot.lane.b32.xlu0 %v3793, 72
        %v3948 = vpop.permute.xlu0 %3947
        %3949 = vrot.lane.b32.xlu0 %v3794, 72
        %v3950 = vpop.permute.xlu0 %3949
        %3951 = vrot.lane.b32.xlu0 %v3795, 72
        %v3952 = vpop.permute.xlu0 %3951
        %3953 = vrot.lane.b32.xlu0 %v3796, 72
        %v3954 = vpop.permute.xlu0 %3953
        %3955 = vrot.lane.b32.xlu0 %v3797, 72
        %v3956 = vpop.permute.xlu0 %3955
        %3957 = vrot.lane.b32.xlu0 %v3798, 72
        %v3958 = vpop.permute.xlu0 %3957
        %3959 = vrot.lane.b32.xlu0 %v3799, 72
        %v3960 = vpop.permute.xlu0 %3959
        %3961 = vrot.lane.b32.xlu0 %v3800, 72
        %v3962 = vpop.permute.xlu0 %3961
        %3963 = vrot.lane.b32.xlu0 %v3801, 72
        %v3964 = vpop.permute.xlu0 %3963
        %3965 = vrot.lane.b32.xlu0 %v3802, 72
        %v3966 = vpop.permute.xlu0 %3965
        %3967 = vrot.lane.b32.xlu0 %v3803, 72
        %v3968 = vpop.permute.xlu0 %3967
        %3969 = vrot.lane.b32.xlu0 %v3804, 72
        %v3970 = vpop.permute.xlu0 %3969
        %3971 = vrot.lane.b32.xlu0 %v3805, 72
        %v3972 = vpop.permute.xlu0 %3971
        %3973 = vrot.lane.b32.xlu0 %v3806, 72
        %v3974 = vpop.permute.xlu0 %3973
        %3975 = vrot.lane.b32.xlu0 %v3807, 72
        %v3976 = vpop.permute.xlu0 %3975
        %3977 = vrot.lane.b32.xlu0 %v3808, 72
        %v3978 = vpop.permute.xlu0 %3977
        %3979 = vrot.lane.b32.xlu0 %v3809, 72
        %v3980 = vpop.permute.xlu0 %3979
        %3981 = vrot.lane.b32.xlu0 %v3810, 72
        %v3982 = vpop.permute.xlu0 %3981
        %3983 = vrot.lane.b32.xlu0 %v3811, 72
        %v3984 = vpop.permute.xlu0 %3983
        %3985 = vrot.lane.b32.xlu0 %v3812, 72
        %v3986 = vpop.permute.xlu0 %3985
        %3987 = vrot.lane.b32.xlu0 %v3813, 72
        %v3988 = vpop.permute.xlu0 %3987
        %3989 = vrot.lane.b32.xlu0 %v3814, 72
        %v3990 = vpop.permute.xlu0 %3989
        %3991 = vrot.lane.b32.xlu0 %v3815, 72
        %v3992 = vpop.permute.xlu0 %3991
        %3993 = vrot.lane.b32.xlu0 %v3816, 72
        %v3994 = vpop.permute.xlu0 %3993
        %3995 = vrot.lane.b32.xlu0 %v3817, 72
        %v3996 = vpop.permute.xlu0 %3995
        %3997 = vrot.lane.b32.xlu0 %v3818, 72
        %v3998 = vpop.permute.xlu0 %3997
        %3999 = vrot.lane.b32.xlu0 %v3819, 72
        %v4000 = vpop.permute.xlu0 %3999
        %4001 = vrot.lane.b32.xlu0 %v3820, 72
        %v4002 = vpop.permute.xlu0 %4001
        %4003 = vrot.lane.b32.xlu0 %v3821, 72
        %v4004 = vpop.permute.xlu0 %4003
        %4005 = vrot.lane.b32.xlu0 %v3822, 72
        %v4006 = vpop.permute.xlu0 %4005
        %4007 = vrot.lane.b32.xlu0 %v3823, 72
        %v4008 = vpop.permute.xlu0 %4007
        %4009 = vrot.lane.b32.xlu0 %v3824, 72
        %v4010 = vpop.permute.xlu0 %4009
        %4011 = vrot.lane.b32.xlu0 %v3825, 72
        %v4012 = vpop.permute.xlu0 %4011
        %4013 = vrot.lane.b32.xlu0 %v3826, 72
        %v4014 = vpop.permute.xlu0 %4013
        %4015 = vrot.lane.b32.xlu0 %v3827, 72
        %v4016 = vpop.permute.xlu0 %4015
        %4017 = vrot.lane.b32.xlu0 %v3828, 72
        %v4018 = vpop.permute.xlu0 %4017
        %4019 = vrot.lane.b32.xlu0 %v3829, 72
        %v4020 = vpop.permute.xlu0 %4019
        %4021 = vrot.lane.b32.xlu0 %v3830, 72
        %v4022 = vpop.permute.xlu0 %4021
        %v4087 = vadd.f32 %v3694, %v3896
        %v4088 = vadd.f32 %v3695, %v3898
        %v4089 = vadd.f32 %v3696, %v3900
        %v4090 = vadd.f32 %v3697, %v3902
        %v4091 = vadd.f32 %v3698, %v3904
        %v4092 = vadd.f32 %v3699, %v3906
        %v4093 = vadd.f32 %v3700, %v3908
        %v4094 = vadd.f32 %v3701, %v3910
        %v4095 = vadd.f32 %v3702, %v3912
        %v4096 = vadd.f32 %v3703, %v3914
        %v4097 = vadd.f32 %v3704, %v3916
        %v4098 = vadd.f32 %v3705, %v3918
        %v4099 = vadd.f32 %v3706, %v3920
        %v4100 = vadd.f32 %v3707, %v3922
        %v4101 = vadd.f32 %v3708, %v3924
        %v4102 = vadd.f32 %v3709, %v3926
        %v4103 = vadd.f32 %v3710, %v3928
        %v4104 = vadd.f32 %v3711, %v3930
        %v4105 = vadd.f32 %v3712, %v3932
        %v4106 = vadd.f32 %v3713, %v3934
        %v4107 = vadd.f32 %v3714, %v3936
        %v4108 = vadd.f32 %v3715, %v3938
        %v4109 = vadd.f32 %v3716, %v3940
        %v4110 = vadd.f32 %v3717, %v3942
        %v4111 = vadd.f32 %v3718, %v3944
        %v4112 = vadd.f32 %v3719, %v3946
        %v4113 = vadd.f32 %v3720, %v3948
        %v4114 = vadd.f32 %v3721, %v3950
        %v4115 = vadd.f32 %v3722, %v3952
        %v4116 = vadd.f32 %v3723, %v3954
        %v4117 = vadd.f32 %v3724, %v3956
        %v4118 = vadd.f32 %v3725, %v3958
        %v4119 = vadd.f32 %v3726, %v3960
        %v4120 = vadd.f32 %v3727, %v3962
        %v4121 = vadd.f32 %v3728, %v3964
        %v4122 = vadd.f32 %v3729, %v3966
        %v4123 = vadd.f32 %v3730, %v3968
        %v4124 = vadd.f32 %v3731, %v3970
        %v4125 = vadd.f32 %v3732, %v3972
        %v4126 = vadd.f32 %v3733, %v3974
        %v4127 = vadd.f32 %v3734, %v3976
        %v4128 = vadd.f32 %v3735, %v3978
        %v4129 = vadd.f32 %v3736, %v3980
        %v4130 = vadd.f32 %v3737, %v3982
        %v4131 = vadd.f32 %v3738, %v3984
        %v4132 = vadd.f32 %v3739, %v3986
        %v4133 = vadd.f32 %v3740, %v3988
        %v4134 = vadd.f32 %v3741, %v3990
        %v4135 = vadd.f32 %v3742, %v3992
        %v4136 = vadd.f32 %v3743, %v3994
        %v4137 = vadd.f32 %v3744, %v3996
        %v4138 = vadd.f32 %v3745, %v3998
        %v4139 = vadd.f32 %v3746, %v4000
        %v4140 = vadd.f32 %v3747, %v4002
        %v4141 = vadd.f32 %v3748, %v4004
        %v4142 = vadd.f32 %v3749, %v4006
        %v4143 = vadd.f32 %v3750, %v4008
        %v4144 = vadd.f32 %v3751, %v4010
        %v4145 = vadd.f32 %v3752, %v4012
        %v4146 = vadd.f32 %v3753, %v4014
        %v4147 = vadd.f32 %v3754, %v4016
        %v4148 = vadd.f32 %v3755, %v4018
        %v4149 = vadd.f32 %v3756, %v4020
        %v4150 = vadd.f32 %v3757, %v4022
        %v4151 = vld [vmem:[%s3 + $0x8] sm:$0x1]
        %v4152 = vlaneseq
        %v4153 = vshrl.u32 %v4152, 7
        %v4154 = vsub.s32 0, %v4153
        %v4155 = vrot.slane %v4151, %v4154
        %4157 = vrot.lane.b32.xlu0 %v4155, 64
        %v4158 = vpop.permute.xlu0 %4157
        %v4160 = vmul.f32 %v1133, %v4158
        %v4161 = vmul.f32 %v1135, %v4158
        %v4162 = vmul.f32 %v1137, %v4158
        %v4163 = vmul.f32 %v1139, %v4158
        %v4164 = vmul.f32 %v1141, %v4158
        %v4165 = vmul.f32 %v1143, %v4158
        %v4166 = vmul.f32 %v1145, %v4158
        %v4167 = vmul.f32 %v1147, %v4158
        %v4168 = vmul.f32 %v1149, %v4158
        %v4169 = vmul.f32 %v1151, %v4158
        %v4170 = vmul.f32 %v1153, %v4158
        %v4171 = vmul.f32 %v1155, %v4158
        %v4172 = vmul.f32 %v1157, %v4158
        %v4173 = vmul.f32 %v1159, %v4158
        %v4174 = vmul.f32 %v1161, %v4158
        %v4175 = vmul.f32 %v1163, %v4158
        %v4176 = vmul.f32 %v1165, %v4158
        %v4177 = vmul.f32 %v1167, %v4158
        %v4178 = vmul.f32 %v1169, %v4158
        %v4179 = vmul.f32 %v1171, %v4158
        %v4180 = vmul.f32 %v1173, %v4158
        %v4181 = vmul.f32 %v1175, %v4158
        %v4182 = vmul.f32 %v1177, %v4158
        %v4183 = vmul.f32 %v1179, %v4158
        %v4184 = vmul.f32 %v1181, %v4158
        %v4185 = vmul.f32 %v1183, %v4158
        %v4186 = vmul.f32 %v1185, %v4158
        %v4187 = vmul.f32 %v1187, %v4158
        %v4188 = vmul.f32 %v1189, %v4158
        %v4189 = vmul.f32 %v1191, %v4158
        %v4190 = vmul.f32 %v1193, %v4158
        %v4191 = vmul.f32 %v1195, %v4158
        %v4192 = vmul.f32 %v1197, %v4158
        %v4193 = vmul.f32 %v1199, %v4158
        %v4194 = vmul.f32 %v1201, %v4158
        %v4195 = vmul.f32 %v1203, %v4158
        %v4196 = vmul.f32 %v1205, %v4158
        %v4197 = vmul.f32 %v1207, %v4158
        %v4198 = vmul.f32 %v1209, %v4158
        %v4199 = vmul.f32 %v1211, %v4158
        %v4200 = vmul.f32 %v1213, %v4158
        %v4201 = vmul.f32 %v1215, %v4158
        %v4202 = vmul.f32 %v1217, %v4158
        %v4203 = vmul.f32 %v1219, %v4158
        %v4204 = vmul.f32 %v1221, %v4158
        %v4205 = vmul.f32 %v1223, %v4158
        %v4206 = vmul.f32 %v1225, %v4158
        %v4207 = vmul.f32 %v1227, %v4158
        %v4208 = vmul.f32 %v1229, %v4158
        %v4209 = vmul.f32 %v1231, %v4158
        %v4210 = vmul.f32 %v1233, %v4158
        %v4211 = vmul.f32 %v1235, %v4158
        %v4212 = vmul.f32 %v1237, %v4158
        %v4213 = vmul.f32 %v1239, %v4158
        %v4214 = vmul.f32 %v1241, %v4158
        %v4215 = vmul.f32 %v1243, %v4158
        %v4216 = vmul.f32 %v1245, %v4158
        %v4217 = vmul.f32 %v1247, %v4158
        %v4218 = vmul.f32 %v1249, %v4158
        %v4219 = vmul.f32 %v1251, %v4158
        %v4220 = vmul.f32 %v1253, %v4158
        %v4221 = vmul.f32 %v1255, %v4158
        %v4222 = vmul.f32 %v1257, %v4158
        %v4223 = vmul.f32 %v1259, %v4158
        %4288 = vrot.lane.b32.xlu0 %v4160, 64
        %v4289 = vpop.permute.xlu0 %4288
        %4290 = vrot.lane.b32.xlu0 %v4161, 64
        %v4291 = vpop.permute.xlu0 %4290
        %4292 = vrot.lane.b32.xlu0 %v4162, 64
        %v4293 = vpop.permute.xlu0 %4292
        %4294 = vrot.lane.b32.xlu0 %v4163, 64
        %v4295 = vpop.permute.xlu0 %4294
        %4296 = vrot.lane.b32.xlu0 %v4164, 64
        %v4297 = vpop.permute.xlu0 %4296
        %4298 = vrot.lane.b32.xlu0 %v4165, 64
        %v4299 = vpop.permute.xlu0 %4298
        %4300 = vrot.lane.b32.xlu0 %v4166, 64
        %v4301 = vpop.permute.xlu0 %4300
        %4302 = vrot.lane.b32.xlu0 %v4167, 64
        %v4303 = vpop.permute.xlu0 %4302
        %4304 = vrot.lane.b32.xlu0 %v4168, 64
        %v4305 = vpop.permute.xlu0 %4304
        %4306 = vrot.lane.b32.xlu0 %v4169, 64
        %v4307 = vpop.permute.xlu0 %4306
        %4308 = vrot.lane.b32.xlu0 %v4170, 64
        %v4309 = vpop.permute.xlu0 %4308
        %4310 = vrot.lane.b32.xlu0 %v4171, 64
        %v4311 = vpop.permute.xlu0 %4310
        %4312 = vrot.lane.b32.xlu0 %v4172, 64
        %v4313 = vpop.permute.xlu0 %4312
        %4314 = vrot.lane.b32.xlu0 %v4173, 64
        %v4315 = vpop.permute.xlu0 %4314
        %4316 = vrot.lane.b32.xlu0 %v4174, 64
        %v4317 = vpop.permute.xlu0 %4316
        %4318 = vrot.lane.b32.xlu0 %v4175, 64
        %v4319 = vpop.permute.xlu0 %4318
        %4320 = vrot.lane.b32.xlu0 %v4176, 64
        %v4321 = vpop.permute.xlu0 %4320
        %4322 = vrot.lane.b32.xlu0 %v4177, 64
        %v4323 = vpop.permute.xlu0 %4322
        %4324 = vrot.lane.b32.xlu0 %v4178, 64
        %v4325 = vpop.permute.xlu0 %4324
        %4326 = vrot.lane.b32.xlu0 %v4179, 64
        %v4327 = vpop.permute.xlu0 %4326
        %4328 = vrot.lane.b32.xlu0 %v4180, 64
        %v4329 = vpop.permute.xlu0 %4328
        %4330 = vrot.lane.b32.xlu0 %v4181, 64
        %v4331 = vpop.permute.xlu0 %4330
        %4332 = vrot.lane.b32.xlu0 %v4182, 64
        %v4333 = vpop.permute.xlu0 %4332
        %4334 = vrot.lane.b32.xlu0 %v4183, 64
        %v4335 = vpop.permute.xlu0 %4334
        %4336 = vrot.lane.b32.xlu0 %v4184, 64
        %v4337 = vpop.permute.xlu0 %4336
        %4338 = vrot.lane.b32.xlu0 %v4185, 64
        %v4339 = vpop.permute.xlu0 %4338
        %4340 = vrot.lane.b32.xlu0 %v4186, 64
        %v4341 = vpop.permute.xlu0 %4340
        %4342 = vrot.lane.b32.xlu0 %v4187, 64
        %v4343 = vpop.permute.xlu0 %4342
        %4344 = vrot.lane.b32.xlu0 %v4188, 64
        %v4345 = vpop.permute.xlu0 %4344
        %4346 = vrot.lane.b32.xlu0 %v4189, 64
        %v4347 = vpop.permute.xlu0 %4346
        %4348 = vrot.lane.b32.xlu0 %v4190, 64
        %v4349 = vpop.permute.xlu0 %4348
        %4350 = vrot.lane.b32.xlu0 %v4191, 64
        %v4351 = vpop.permute.xlu0 %4350
        %4352 = vrot.lane.b32.xlu0 %v4192, 64
        %v4353 = vpop.permute.xlu0 %4352
        %4354 = vrot.lane.b32.xlu0 %v4193, 64
        %v4355 = vpop.permute.xlu0 %4354
        %4356 = vrot.lane.b32.xlu0 %v4194, 64
        %v4357 = vpop.permute.xlu0 %4356
        %4358 = vrot.lane.b32.xlu0 %v4195, 64
        %v4359 = vpop.permute.xlu0 %4358
        %4360 = vrot.lane.b32.xlu0 %v4196, 64
        %v4361 = vpop.permute.xlu0 %4360
        %4362 = vrot.lane.b32.xlu0 %v4197, 64
        %v4363 = vpop.permute.xlu0 %4362
        %4364 = vrot.lane.b32.xlu0 %v4198, 64
        %v4365 = vpop.permute.xlu0 %4364
        %4366 = vrot.lane.b32.xlu0 %v4199, 64
        %v4367 = vpop.permute.xlu0 %4366
        %4368 = vrot.lane.b32.xlu0 %v4200, 64
        %v4369 = vpop.permute.xlu0 %4368
        %4370 = vrot.lane.b32.xlu0 %v4201, 64
        %v4371 = vpop.permute.xlu0 %4370
        %4372 = vrot.lane.b32.xlu0 %v4202, 64
        %v4373 = vpop.permute.xlu0 %4372
        %4374 = vrot.lane.b32.xlu0 %v4203, 64
        %v4375 = vpop.permute.xlu0 %4374
        %4376 = vrot.lane.b32.xlu0 %v4204, 64
        %v4377 = vpop.permute.xlu0 %4376
        %4378 = vrot.lane.b32.xlu0 %v4205, 64
        %v4379 = vpop.permute.xlu0 %4378
        %4380 = vrot.lane.b32.xlu0 %v4206, 64
        %v4381 = vpop.permute.xlu0 %4380
        %4382 = vrot.lane.b32.xlu0 %v4207, 64
        %v4383 = vpop.permute.xlu0 %4382
        %4384 = vrot.lane.b32.xlu0 %v4208, 64
        %v4385 = vpop.permute.xlu0 %4384
        %4386 = vrot.lane.b32.xlu0 %v4209, 64
        %v4387 = vpop.permute.xlu0 %4386
        %4388 = vrot.lane.b32.xlu0 %v4210, 64
        %v4389 = vpop.permute.xlu0 %4388
        %4390 = vrot.lane.b32.xlu0 %v4211, 64
        %v4391 = vpop.permute.xlu0 %4390
        %4392 = vrot.lane.b32.xlu0 %v4212, 64
        %v4393 = vpop.permute.xlu0 %4392
        %4394 = vrot.lane.b32.xlu0 %v4213, 64
        %v4395 = vpop.permute.xlu0 %4394
        %4396 = vrot.lane.b32.xlu0 %v4214, 64
        %v4397 = vpop.permute.xlu0 %4396
        %4398 = vrot.lane.b32.xlu0 %v4215, 64
        %v4399 = vpop.permute.xlu0 %4398
        %4400 = vrot.lane.b32.xlu0 %v4216, 64
        %v4401 = vpop.permute.xlu0 %4400
        %4402 = vrot.lane.b32.xlu0 %v4217, 64
        %v4403 = vpop.permute.xlu0 %4402
        %4404 = vrot.lane.b32.xlu0 %v4218, 64
        %v4405 = vpop.permute.xlu0 %4404
        %4406 = vrot.lane.b32.xlu0 %v4219, 64
        %v4407 = vpop.permute.xlu0 %4406
        %4408 = vrot.lane.b32.xlu0 %v4220, 64
        %v4409 = vpop.permute.xlu0 %4408
        %4410 = vrot.lane.b32.xlu0 %v4221, 64
        %v4411 = vpop.permute.xlu0 %4410
        %4412 = vrot.lane.b32.xlu0 %v4222, 64
        %v4413 = vpop.permute.xlu0 %4412
        %4414 = vrot.lane.b32.xlu0 %v4223, 64
        %v4415 = vpop.permute.xlu0 %4414
        %v4480 = vadd.f32 %v4087, %v4289
        %v4481 = vadd.f32 %v4088, %v4291
        %v4482 = vadd.f32 %v4089, %v4293
        %v4483 = vadd.f32 %v4090, %v4295
        %v4484 = vadd.f32 %v4091, %v4297
        %v4485 = vadd.f32 %v4092, %v4299
        %v4486 = vadd.f32 %v4093, %v4301
        %v4487 = vadd.f32 %v4094, %v4303
        %v4488 = vadd.f32 %v4095, %v4305
        %v4489 = vadd.f32 %v4096, %v4307
        %v4490 = vadd.f32 %v4097, %v4309
        %v4491 = vadd.f32 %v4098, %v4311
        %v4492 = vadd.f32 %v4099, %v4313
        %v4493 = vadd.f32 %v4100, %v4315
        %v4494 = vadd.f32 %v4101, %v4317
        %v4495 = vadd.f32 %v4102, %v4319
        %v4496 = vadd.f32 %v4103, %v4321
        %v4497 = vadd.f32 %v4104, %v4323
        %v4498 = vadd.f32 %v4105, %v4325
        %v4499 = vadd.f32 %v4106, %v4327
        %v4500 = vadd.f32 %v4107, %v4329
        %v4501 = vadd.f32 %v4108, %v4331
        %v4502 = vadd.f32 %v4109, %v4333
        %v4503 = vadd.f32 %v4110, %v4335
        %v4504 = vadd.f32 %v4111, %v4337
        %v4505 = vadd.f32 %v4112, %v4339
        %v4506 = vadd.f32 %v4113, %v4341
        %v4507 = vadd.f32 %v4114, %v4343
        %v4508 = vadd.f32 %v4115, %v4345
        %v4509 = vadd.f32 %v4116, %v4347
        %v4510 = vadd.f32 %v4117, %v4349
        %v4511 = vadd.f32 %v4118, %v4351
        %v4512 = vadd.f32 %v4119, %v4353
        %v4513 = vadd.f32 %v4120, %v4355
        %v4514 = vadd.f32 %v4121, %v4357
        %v4515 = vadd.f32 %v4122, %v4359
        %v4516 = vadd.f32 %v4123, %v4361
        %v4517 = vadd.f32 %v4124, %v4363
        %v4518 = vadd.f32 %v4125, %v4365
        %v4519 = vadd.f32 %v4126, %v4367
        %v4520 = vadd.f32 %v4127, %v4369
        %v4521 = vadd.f32 %v4128, %v4371
        %v4522 = vadd.f32 %v4129, %v4373
        %v4523 = vadd.f32 %v4130, %v4375
        %v4524 = vadd.f32 %v4131, %v4377
        %v4525 = vadd.f32 %v4132, %v4379
        %v4526 = vadd.f32 %v4133, %v4381
        %v4527 = vadd.f32 %v4134, %v4383
        %v4528 = vadd.f32 %v4135, %v4385
        %v4529 = vadd.f32 %v4136, %v4387
        %v4530 = vadd.f32 %v4137, %v4389
        %v4531 = vadd.f32 %v4138, %v4391
        %v4532 = vadd.f32 %v4139, %v4393
        %v4533 = vadd.f32 %v4140, %v4395
        %v4534 = vadd.f32 %v4141, %v4397
        %v4535 = vadd.f32 %v4142, %v4399
        %v4536 = vadd.f32 %v4143, %v4401
        %v4537 = vadd.f32 %v4144, %v4403
        %v4538 = vadd.f32 %v4145, %v4405
        %v4539 = vadd.f32 %v4146, %v4407
        %v4540 = vadd.f32 %v4147, %v4409
        %v4541 = vadd.f32 %v4148, %v4411
        %v4542 = vadd.f32 %v4149, %v4413
        %v4543 = vadd.f32 %v4150, %v4415
        %v4544 = vld [vmem:[%s3 + $0x9] sm:$0x1]
        %v4545 = vlaneseq
        %v4546 = vshrl.u32 %v4545, 7
        %v4547 = vsub.s32 0, %v4546
        %v4548 = vrot.slane %v4544, %v4547
        %4550 = vrot.lane.b32.xlu0 %v4548, 72
        %v4551 = vpop.permute.xlu0 %4550
        %v4553 = vmul.f32 %v1133, %v4551
        %v4554 = vmul.f32 %v1135, %v4551
        %v4555 = vmul.f32 %v1137, %v4551
        %v4556 = vmul.f32 %v1139, %v4551
        %v4557 = vmul.f32 %v1141, %v4551
        %v4558 = vmul.f32 %v1143, %v4551
        %v4559 = vmul.f32 %v1145, %v4551
        %v4560 = vmul.f32 %v1147, %v4551
        %v4561 = vmul.f32 %v1149, %v4551
        %v4562 = vmul.f32 %v1151, %v4551
        %v4563 = vmul.f32 %v1153, %v4551
        %v4564 = vmul.f32 %v1155, %v4551
        %v4565 = vmul.f32 %v1157, %v4551
        %v4566 = vmul.f32 %v1159, %v4551
        %v4567 = vmul.f32 %v1161, %v4551
        %v4568 = vmul.f32 %v1163, %v4551
        %v4569 = vmul.f32 %v1165, %v4551
        %v4570 = vmul.f32 %v1167, %v4551
        %v4571 = vmul.f32 %v1169, %v4551
        %v4572 = vmul.f32 %v1171, %v4551
        %v4573 = vmul.f32 %v1173, %v4551
        %v4574 = vmul.f32 %v1175, %v4551
        %v4575 = vmul.f32 %v1177, %v4551
        %v4576 = vmul.f32 %v1179, %v4551
        %v4577 = vmul.f32 %v1181, %v4551
        %v4578 = vmul.f32 %v1183, %v4551
        %v4579 = vmul.f32 %v1185, %v4551
        %v4580 = vmul.f32 %v1187, %v4551
        %v4581 = vmul.f32 %v1189, %v4551
        %v4582 = vmul.f32 %v1191, %v4551
        %v4583 = vmul.f32 %v1193, %v4551
        %v4584 = vmul.f32 %v1195, %v4551
        %v4585 = vmul.f32 %v1197, %v4551
        %v4586 = vmul.f32 %v1199, %v4551
        %v4587 = vmul.f32 %v1201, %v4551
        %v4588 = vmul.f32 %v1203, %v4551
        %v4589 = vmul.f32 %v1205, %v4551
        %v4590 = vmul.f32 %v1207, %v4551
        %v4591 = vmul.f32 %v1209, %v4551
        %v4592 = vmul.f32 %v1211, %v4551
        %v4593 = vmul.f32 %v1213, %v4551
        %v4594 = vmul.f32 %v1215, %v4551
        %v4595 = vmul.f32 %v1217, %v4551
        %v4596 = vmul.f32 %v1219, %v4551
        %v4597 = vmul.f32 %v1221, %v4551
        %v4598 = vmul.f32 %v1223, %v4551
        %v4599 = vmul.f32 %v1225, %v4551
        %v4600 = vmul.f32 %v1227, %v4551
        %v4601 = vmul.f32 %v1229, %v4551
        %v4602 = vmul.f32 %v1231, %v4551
        %v4603 = vmul.f32 %v1233, %v4551
        %v4604 = vmul.f32 %v1235, %v4551
        %v4605 = vmul.f32 %v1237, %v4551
        %v4606 = vmul.f32 %v1239, %v4551
        %v4607 = vmul.f32 %v1241, %v4551
        %v4608 = vmul.f32 %v1243, %v4551
        %v4609 = vmul.f32 %v1245, %v4551
        %v4610 = vmul.f32 %v1247, %v4551
        %v4611 = vmul.f32 %v1249, %v4551
        %v4612 = vmul.f32 %v1251, %v4551
        %v4613 = vmul.f32 %v1253, %v4551
        %v4614 = vmul.f32 %v1255, %v4551
        %v4615 = vmul.f32 %v1257, %v4551
        %v4616 = vmul.f32 %v1259, %v4551
        %4681 = vrot.lane.b32.xlu0 %v4553, 56
        %v4682 = vpop.permute.xlu0 %4681
        %4683 = vrot.lane.b32.xlu0 %v4554, 56
        %v4684 = vpop.permute.xlu0 %4683
        %4685 = vrot.lane.b32.xlu0 %v4555, 56
        %v4686 = vpop.permute.xlu0 %4685
        %4687 = vrot.lane.b32.xlu0 %v4556, 56
        %v4688 = vpop.permute.xlu0 %4687
        %4689 = vrot.lane.b32.xlu0 %v4557, 56
        %v4690 = vpop.permute.xlu0 %4689
        %4691 = vrot.lane.b32.xlu0 %v4558, 56
        %v4692 = vpop.permute.xlu0 %4691
        %4693 = vrot.lane.b32.xlu0 %v4559, 56
        %v4694 = vpop.permute.xlu0 %4693
        %4695 = vrot.lane.b32.xlu0 %v4560, 56
        %v4696 = vpop.permute.xlu0 %4695
        %4697 = vrot.lane.b32.xlu0 %v4561, 56
        %v4698 = vpop.permute.xlu0 %4697
        %4699 = vrot.lane.b32.xlu0 %v4562, 56
        %v4700 = vpop.permute.xlu0 %4699
        %4701 = vrot.lane.b32.xlu0 %v4563, 56
        %v4702 = vpop.permute.xlu0 %4701
        %4703 = vrot.lane.b32.xlu0 %v4564, 56
        %v4704 = vpop.permute.xlu0 %4703
        %4705 = vrot.lane.b32.xlu0 %v4565, 56
        %v4706 = vpop.permute.xlu0 %4705
        %4707 = vrot.lane.b32.xlu0 %v4566, 56
        %v4708 = vpop.permute.xlu0 %4707
        %4709 = vrot.lane.b32.xlu0 %v4567, 56
        %v4710 = vpop.permute.xlu0 %4709
        %4711 = vrot.lane.b32.xlu0 %v4568, 56
        %v4712 = vpop.permute.xlu0 %4711
        %4713 = vrot.lane.b32.xlu0 %v4569, 56
        %v4714 = vpop.permute.xlu0 %4713
        %4715 = vrot.lane.b32.xlu0 %v4570, 56
        %v4716 = vpop.permute.xlu0 %4715
        %4717 = vrot.lane.b32.xlu0 %v4571, 56
        %v4718 = vpop.permute.xlu0 %4717
        %4719 = vrot.lane.b32.xlu0 %v4572, 56
        %v4720 = vpop.permute.xlu0 %4719
        %4721 = vrot.lane.b32.xlu0 %v4573, 56
        %v4722 = vpop.permute.xlu0 %4721
        %4723 = vrot.lane.b32.xlu0 %v4574, 56
        %v4724 = vpop.permute.xlu0 %4723
        %4725 = vrot.lane.b32.xlu0 %v4575, 56
        %v4726 = vpop.permute.xlu0 %4725
        %4727 = vrot.lane.b32.xlu0 %v4576, 56
        %v4728 = vpop.permute.xlu0 %4727
        %4729 = vrot.lane.b32.xlu0 %v4577, 56
        %v4730 = vpop.permute.xlu0 %4729
        %4731 = vrot.lane.b32.xlu0 %v4578, 56
        %v4732 = vpop.permute.xlu0 %4731
        %4733 = vrot.lane.b32.xlu0 %v4579, 56
        %v4734 = vpop.permute.xlu0 %4733
        %4735 = vrot.lane.b32.xlu0 %v4580, 56
        %v4736 = vpop.permute.xlu0 %4735
        %4737 = vrot.lane.b32.xlu0 %v4581, 56
        %v4738 = vpop.permute.xlu0 %4737
        %4739 = vrot.lane.b32.xlu0 %v4582, 56
        %v4740 = vpop.permute.xlu0 %4739
        %4741 = vrot.lane.b32.xlu0 %v4583, 56
        %v4742 = vpop.permute.xlu0 %4741
        %4743 = vrot.lane.b32.xlu0 %v4584, 56
        %v4744 = vpop.permute.xlu0 %4743
        %4745 = vrot.lane.b32.xlu0 %v4585, 56
        %v4746 = vpop.permute.xlu0 %4745
        %4747 = vrot.lane.b32.xlu0 %v4586, 56
        %v4748 = vpop.permute.xlu0 %4747
        %4749 = vrot.lane.b32.xlu0 %v4587, 56
        %v4750 = vpop.permute.xlu0 %4749
        %4751 = vrot.lane.b32.xlu0 %v4588, 56
        %v4752 = vpop.permute.xlu0 %4751
        %4753 = vrot.lane.b32.xlu0 %v4589, 56
        %v4754 = vpop.permute.xlu0 %4753
        %4755 = vrot.lane.b32.xlu0 %v4590, 56
        %v4756 = vpop.permute.xlu0 %4755
        %4757 = vrot.lane.b32.xlu0 %v4591, 56
        %v4758 = vpop.permute.xlu0 %4757
        %4759 = vrot.lane.b32.xlu0 %v4592, 56
        %v4760 = vpop.permute.xlu0 %4759
        %4761 = vrot.lane.b32.xlu0 %v4593, 56
        %v4762 = vpop.permute.xlu0 %4761
        %4763 = vrot.lane.b32.xlu0 %v4594, 56
        %v4764 = vpop.permute.xlu0 %4763
        %4765 = vrot.lane.b32.xlu0 %v4595, 56
        %v4766 = vpop.permute.xlu0 %4765
        %4767 = vrot.lane.b32.xlu0 %v4596, 56
        %v4768 = vpop.permute.xlu0 %4767
        %4769 = vrot.lane.b32.xlu0 %v4597, 56
        %v4770 = vpop.permute.xlu0 %4769
        %4771 = vrot.lane.b32.xlu0 %v4598, 56
        %v4772 = vpop.permute.xlu0 %4771
        %4773 = vrot.lane.b32.xlu0 %v4599, 56
        %v4774 = vpop.permute.xlu0 %4773
        %4775 = vrot.lane.b32.xlu0 %v4600, 56
        %v4776 = vpop.permute.xlu0 %4775
        %4777 = vrot.lane.b32.xlu0 %v4601, 56
        %v4778 = vpop.permute.xlu0 %4777
        %4779 = vrot.lane.b32.xlu0 %v4602, 56
        %v4780 = vpop.permute.xlu0 %4779
        %4781 = vrot.lane.b32.xlu0 %v4603, 56
        %v4782 = vpop.permute.xlu0 %4781
        %4783 = vrot.lane.b32.xlu0 %v4604, 56
        %v4784 = vpop.permute.xlu0 %4783
        %4785 = vrot.lane.b32.xlu0 %v4605, 56
        %v4786 = vpop.permute.xlu0 %4785
        %4787 = vrot.lane.b32.xlu0 %v4606, 56
        %v4788 = vpop.permute.xlu0 %4787
        %4789 = vrot.lane.b32.xlu0 %v4607, 56
        %v4790 = vpop.permute.xlu0 %4789
        %4791 = vrot.lane.b32.xlu0 %v4608, 56
        %v4792 = vpop.permute.xlu0 %4791
        %4793 = vrot.lane.b32.xlu0 %v4609, 56
        %v4794 = vpop.permute.xlu0 %4793
        %4795 = vrot.lane.b32.xlu0 %v4610, 56
        %v4796 = vpop.permute.xlu0 %4795
        %4797 = vrot.lane.b32.xlu0 %v4611, 56
        %v4798 = vpop.permute.xlu0 %4797
        %4799 = vrot.lane.b32.xlu0 %v4612, 56
        %v4800 = vpop.permute.xlu0 %4799
        %4801 = vrot.lane.b32.xlu0 %v4613, 56
        %v4802 = vpop.permute.xlu0 %4801
        %4803 = vrot.lane.b32.xlu0 %v4614, 56
        %v4804 = vpop.permute.xlu0 %4803
        %4805 = vrot.lane.b32.xlu0 %v4615, 56
        %v4806 = vpop.permute.xlu0 %4805
        %4807 = vrot.lane.b32.xlu0 %v4616, 56
        %v4808 = vpop.permute.xlu0 %4807
        %v4873 = vadd.f32 %v4480, %v4682
        %v4874 = vadd.f32 %v4481, %v4684
        %v4875 = vadd.f32 %v4482, %v4686
        %v4876 = vadd.f32 %v4483, %v4688
        %v4877 = vadd.f32 %v4484, %v4690
        %v4878 = vadd.f32 %v4485, %v4692
        %v4879 = vadd.f32 %v4486, %v4694
        %v4880 = vadd.f32 %v4487, %v4696
        %v4881 = vadd.f32 %v4488, %v4698
        %v4882 = vadd.f32 %v4489, %v4700
        %v4883 = vadd.f32 %v4490, %v4702
        %v4884 = vadd.f32 %v4491, %v4704
        %v4885 = vadd.f32 %v4492, %v4706
        %v4886 = vadd.f32 %v4493, %v4708
        %v4887 = vadd.f32 %v4494, %v4710
        %v4888 = vadd.f32 %v4495, %v4712
        %v4889 = vadd.f32 %v4496, %v4714
        %v4890 = vadd.f32 %v4497, %v4716
        %v4891 = vadd.f32 %v4498, %v4718
        %v4892 = vadd.f32 %v4499, %v4720
        %v4893 = vadd.f32 %v4500, %v4722
        %v4894 = vadd.f32 %v4501, %v4724
        %v4895 = vadd.f32 %v4502, %v4726
        %v4896 = vadd.f32 %v4503, %v4728
        %v4897 = vadd.f32 %v4504, %v4730
        %v4898 = vadd.f32 %v4505, %v4732
        %v4899 = vadd.f32 %v4506, %v4734
        %v4900 = vadd.f32 %v4507, %v4736
        %v4901 = vadd.f32 %v4508, %v4738
        %v4902 = vadd.f32 %v4509, %v4740
        %v4903 = vadd.f32 %v4510, %v4742
        %v4904 = vadd.f32 %v4511, %v4744
        %v4905 = vadd.f32 %v4512, %v4746
        %v4906 = vadd.f32 %v4513, %v4748
        %v4907 = vadd.f32 %v4514, %v4750
        %v4908 = vadd.f32 %v4515, %v4752
        %v4909 = vadd.f32 %v4516, %v4754
        %v4910 = vadd.f32 %v4517, %v4756
        %v4911 = vadd.f32 %v4518, %v4758
        %v4912 = vadd.f32 %v4519, %v4760
        %v4913 = vadd.f32 %v4520, %v4762
        %v4914 = vadd.f32 %v4521, %v4764
        %v4915 = vadd.f32 %v4522, %v4766
        %v4916 = vadd.f32 %v4523, %v4768
        %v4917 = vadd.f32 %v4524, %v4770
        %v4918 = vadd.f32 %v4525, %v4772
        %v4919 = vadd.f32 %v4526, %v4774
        %v4920 = vadd.f32 %v4527, %v4776
        %v4921 = vadd.f32 %v4528, %v4778
        %v4922 = vadd.f32 %v4529, %v4780
        %v4923 = vadd.f32 %v4530, %v4782
        %v4924 = vadd.f32 %v4531, %v4784
        %v4925 = vadd.f32 %v4532, %v4786
        %v4926 = vadd.f32 %v4533, %v4788
        %v4927 = vadd.f32 %v4534, %v4790
        %v4928 = vadd.f32 %v4535, %v4792
        %v4929 = vadd.f32 %v4536, %v4794
        %v4930 = vadd.f32 %v4537, %v4796
        %v4931 = vadd.f32 %v4538, %v4798
        %v4932 = vadd.f32 %v4539, %v4800
        %v4933 = vadd.f32 %v4540, %v4802
        %v4934 = vadd.f32 %v4541, %v4804
        %v4935 = vadd.f32 %v4542, %v4806
        %v4936 = vadd.f32 %v4543, %v4808
        %v4937 = vld [vmem:[%s3 + $0xa] sm:$0x1]
        %v4938 = vlaneseq
        %v4939 = vshrl.u32 %v4938, 7
        %v4940 = vsub.s32 0, %v4939
        %v4941 = vrot.slane %v4937, %v4940
        %4943 = vrot.lane.b32.xlu0 %v4941, 80
        %v4944 = vpop.permute.xlu0 %4943
        %v4946 = vmul.f32 %v1133, %v4944
        %v4947 = vmul.f32 %v1135, %v4944
        %v4948 = vmul.f32 %v1137, %v4944
        %v4949 = vmul.f32 %v1139, %v4944
        %v4950 = vmul.f32 %v1141, %v4944
        %v4951 = vmul.f32 %v1143, %v4944
        %v4952 = vmul.f32 %v1145, %v4944
        %v4953 = vmul.f32 %v1147, %v4944
        %v4954 = vmul.f32 %v1149, %v4944
        %v4955 = vmul.f32 %v1151, %v4944
        %v4956 = vmul.f32 %v1153, %v4944
        %v4957 = vmul.f32 %v1155, %v4944
        %v4958 = vmul.f32 %v1157, %v4944
        %v4959 = vmul.f32 %v1159, %v4944
        %v4960 = vmul.f32 %v1161, %v4944
        %v4961 = vmul.f32 %v1163, %v4944
        %v4962 = vmul.f32 %v1165, %v4944
        %v4963 = vmul.f32 %v1167, %v4944
        %v4964 = vmul.f32 %v1169, %v4944
        %v4965 = vmul.f32 %v1171, %v4944
        %v4966 = vmul.f32 %v1173, %v4944
        %v4967 = vmul.f32 %v1175, %v4944
        %v4968 = vmul.f32 %v1177, %v4944
        %v4969 = vmul.f32 %v1179, %v4944
        %v4970 = vmul.f32 %v1181, %v4944
        %v4971 = vmul.f32 %v1183, %v4944
        %v4972 = vmul.f32 %v1185, %v4944
        %v4973 = vmul.f32 %v1187, %v4944
        %v4974 = vmul.f32 %v1189, %v4944
        %v4975 = vmul.f32 %v1191, %v4944
        %v4976 = vmul.f32 %v1193, %v4944
        %v4977 = vmul.f32 %v1195, %v4944
        %v4978 = vmul.f32 %v1197, %v4944
        %v4979 = vmul.f32 %v1199, %v4944
        %v4980 = vmul.f32 %v1201, %v4944
        %v4981 = vmul.f32 %v1203, %v4944
        %v4982 = vmul.f32 %v1205, %v4944
        %v4983 = vmul.f32 %v1207, %v4944
        %v4984 = vmul.f32 %v1209, %v4944
        %v4985 = vmul.f32 %v1211, %v4944
        %v4986 = vmul.f32 %v1213, %v4944
        %v4987 = vmul.f32 %v1215, %v4944
        %v4988 = vmul.f32 %v1217, %v4944
        %v4989 = vmul.f32 %v1219, %v4944
        %v4990 = vmul.f32 %v1221, %v4944
        %v4991 = vmul.f32 %v1223, %v4944
        %v4992 = vmul.f32 %v1225, %v4944
        %v4993 = vmul.f32 %v1227, %v4944
        %v4994 = vmul.f32 %v1229, %v4944
        %v4995 = vmul.f32 %v1231, %v4944
        %v4996 = vmul.f32 %v1233, %v4944
        %v4997 = vmul.f32 %v1235, %v4944
        %v4998 = vmul.f32 %v1237, %v4944
        %v4999 = vmul.f32 %v1239, %v4944
        %v5000 = vmul.f32 %v1241, %v4944
        %v5001 = vmul.f32 %v1243, %v4944
        %v5002 = vmul.f32 %v1245, %v4944
        %v5003 = vmul.f32 %v1247, %v4944
        %v5004 = vmul.f32 %v1249, %v4944
        %v5005 = vmul.f32 %v1251, %v4944
        %v5006 = vmul.f32 %v1253, %v4944
        %v5007 = vmul.f32 %v1255, %v4944
        %v5008 = vmul.f32 %v1257, %v4944
        %v5009 = vmul.f32 %v1259, %v4944
        %5074 = vrot.lane.b32.xlu0 %v4946, 48
        %v5075 = vpop.permute.xlu0 %5074
        %5076 = vrot.lane.b32.xlu0 %v4947, 48
        %v5077 = vpop.permute.xlu0 %5076
        %5078 = vrot.lane.b32.xlu0 %v4948, 48
        %v5079 = vpop.permute.xlu0 %5078
        %5080 = vrot.lane.b32.xlu0 %v4949, 48
        %v5081 = vpop.permute.xlu0 %5080
        %5082 = vrot.lane.b32.xlu0 %v4950, 48
        %v5083 = vpop.permute.xlu0 %5082
        %5084 = vrot.lane.b32.xlu0 %v4951, 48
        %v5085 = vpop.permute.xlu0 %5084
        %5086 = vrot.lane.b32.xlu0 %v4952, 48
        %v5087 = vpop.permute.xlu0 %5086
        %5088 = vrot.lane.b32.xlu0 %v4953, 48
        %v5089 = vpop.permute.xlu0 %5088
        %5090 = vrot.lane.b32.xlu0 %v4954, 48
        %v5091 = vpop.permute.xlu0 %5090
        %5092 = vrot.lane.b32.xlu0 %v4955, 48
        %v5093 = vpop.permute.xlu0 %5092
        %5094 = vrot.lane.b32.xlu0 %v4956, 48
        %v5095 = vpop.permute.xlu0 %5094
        %5096 = vrot.lane.b32.xlu0 %v4957, 48
        %v5097 = vpop.permute.xlu0 %5096
        %5098 = vrot.lane.b32.xlu0 %v4958, 48
        %v5099 = vpop.permute.xlu0 %5098
        %5100 = vrot.lane.b32.xlu0 %v4959, 48
        %v5101 = vpop.permute.xlu0 %5100
        %5102 = vrot.lane.b32.xlu0 %v4960, 48
        %v5103 = vpop.permute.xlu0 %5102
        %5104 = vrot.lane.b32.xlu0 %v4961, 48
        %v5105 = vpop.permute.xlu0 %5104
        %5106 = vrot.lane.b32.xlu0 %v4962, 48
        %v5107 = vpop.permute.xlu0 %5106
        %5108 = vrot.lane.b32.xlu0 %v4963, 48
        %v5109 = vpop.permute.xlu0 %5108
        %5110 = vrot.lane.b32.xlu0 %v4964, 48
        %v5111 = vpop.permute.xlu0 %5110
        %5112 = vrot.lane.b32.xlu0 %v4965, 48
        %v5113 = vpop.permute.xlu0 %5112
        %5114 = vrot.lane.b32.xlu0 %v4966, 48
        %v5115 = vpop.permute.xlu0 %5114
        %5116 = vrot.lane.b32.xlu0 %v4967, 48
        %v5117 = vpop.permute.xlu0 %5116
        %5118 = vrot.lane.b32.xlu0 %v4968, 48
        %v5119 = vpop.permute.xlu0 %5118
        %5120 = vrot.lane.b32.xlu0 %v4969, 48
        %v5121 = vpop.permute.xlu0 %5120
        %5122 = vrot.lane.b32.xlu0 %v4970, 48
        %v5123 = vpop.permute.xlu0 %5122
        %5124 = vrot.lane.b32.xlu0 %v4971, 48
        %v5125 = vpop.permute.xlu0 %5124
        %5126 = vrot.lane.b32.xlu0 %v4972, 48
        %v5127 = vpop.permute.xlu0 %5126
        %5128 = vrot.lane.b32.xlu0 %v4973, 48
        %v5129 = vpop.permute.xlu0 %5128
        %5130 = vrot.lane.b32.xlu0 %v4974, 48
        %v5131 = vpop.permute.xlu0 %5130
        %5132 = vrot.lane.b32.xlu0 %v4975, 48
        %v5133 = vpop.permute.xlu0 %5132
        %5134 = vrot.lane.b32.xlu0 %v4976, 48
        %v5135 = vpop.permute.xlu0 %5134
        %5136 = vrot.lane.b32.xlu0 %v4977, 48
        %v5137 = vpop.permute.xlu0 %5136
        %5138 = vrot.lane.b32.xlu0 %v4978, 48
        %v5139 = vpop.permute.xlu0 %5138
        %5140 = vrot.lane.b32.xlu0 %v4979, 48
        %v5141 = vpop.permute.xlu0 %5140
        %5142 = vrot.lane.b32.xlu0 %v4980, 48
        %v5143 = vpop.permute.xlu0 %5142
        %5144 = vrot.lane.b32.xlu0 %v4981, 48
        %v5145 = vpop.permute.xlu0 %5144
        %5146 = vrot.lane.b32.xlu0 %v4982, 48
        %v5147 = vpop.permute.xlu0 %5146
        %5148 = vrot.lane.b32.xlu0 %v4983, 48
        %v5149 = vpop.permute.xlu0 %5148
        %5150 = vrot.lane.b32.xlu0 %v4984, 48
        %v5151 = vpop.permute.xlu0 %5150
        %5152 = vrot.lane.b32.xlu0 %v4985, 48
        %v5153 = vpop.permute.xlu0 %5152
        %5154 = vrot.lane.b32.xlu0 %v4986, 48
        %v5155 = vpop.permute.xlu0 %5154
        %5156 = vrot.lane.b32.xlu0 %v4987, 48
        %v5157 = vpop.permute.xlu0 %5156
        %5158 = vrot.lane.b32.xlu0 %v4988, 48
        %v5159 = vpop.permute.xlu0 %5158
        %5160 = vrot.lane.b32.xlu0 %v4989, 48
        %v5161 = vpop.permute.xlu0 %5160
        %5162 = vrot.lane.b32.xlu0 %v4990, 48
        %v5163 = vpop.permute.xlu0 %5162
        %5164 = vrot.lane.b32.xlu0 %v4991, 48
        %v5165 = vpop.permute.xlu0 %5164
        %5166 = vrot.lane.b32.xlu0 %v4992, 48
        %v5167 = vpop.permute.xlu0 %5166
        %5168 = vrot.lane.b32.xlu0 %v4993, 48
        %v5169 = vpop.permute.xlu0 %5168
        %5170 = vrot.lane.b32.xlu0 %v4994, 48
        %v5171 = vpop.permute.xlu0 %5170
        %5172 = vrot.lane.b32.xlu0 %v4995, 48
        %v5173 = vpop.permute.xlu0 %5172
        %5174 = vrot.lane.b32.xlu0 %v4996, 48
        %v5175 = vpop.permute.xlu0 %5174
        %5176 = vrot.lane.b32.xlu0 %v4997, 48
        %v5177 = vpop.permute.xlu0 %5176
        %5178 = vrot.lane.b32.xlu0 %v4998, 48
        %v5179 = vpop.permute.xlu0 %5178
        %5180 = vrot.lane.b32.xlu0 %v4999, 48
        %v5181 = vpop.permute.xlu0 %5180
        %5182 = vrot.lane.b32.xlu0 %v5000, 48
        %v5183 = vpop.permute.xlu0 %5182
        %5184 = vrot.lane.b32.xlu0 %v5001, 48
        %v5185 = vpop.permute.xlu0 %5184
        %5186 = vrot.lane.b32.xlu0 %v5002, 48
        %v5187 = vpop.permute.xlu0 %5186
        %5188 = vrot.lane.b32.xlu0 %v5003, 48
        %v5189 = vpop.permute.xlu0 %5188
        %5190 = vrot.lane.b32.xlu0 %v5004, 48
        %v5191 = vpop.permute.xlu0 %5190
        %5192 = vrot.lane.b32.xlu0 %v5005, 48
        %v5193 = vpop.permute.xlu0 %5192
        %5194 = vrot.lane.b32.xlu0 %v5006, 48
        %v5195 = vpop.permute.xlu0 %5194
        %5196 = vrot.lane.b32.xlu0 %v5007, 48
        %v5197 = vpop.permute.xlu0 %5196
        %5198 = vrot.lane.b32.xlu0 %v5008, 48
        %v5199 = vpop.permute.xlu0 %5198
        %5200 = vrot.lane.b32.xlu0 %v5009, 48
        %v5201 = vpop.permute.xlu0 %5200
        %v5266 = vadd.f32 %v4873, %v5075
        %v5267 = vadd.f32 %v4874, %v5077
        %v5268 = vadd.f32 %v4875, %v5079
        %v5269 = vadd.f32 %v4876, %v5081
        %v5270 = vadd.f32 %v4877, %v5083
        %v5271 = vadd.f32 %v4878, %v5085
        %v5272 = vadd.f32 %v4879, %v5087
        %v5273 = vadd.f32 %v4880, %v5089
        %v5274 = vadd.f32 %v4881, %v5091
        %v5275 = vadd.f32 %v4882, %v5093
        %v5276 = vadd.f32 %v4883, %v5095
        %v5277 = vadd.f32 %v4884, %v5097
        %v5278 = vadd.f32 %v4885, %v5099
        %v5279 = vadd.f32 %v4886, %v5101
        %v5280 = vadd.f32 %v4887, %v5103
        %v5281 = vadd.f32 %v4888, %v5105
        %v5282 = vadd.f32 %v4889, %v5107
        %v5283 = vadd.f32 %v4890, %v5109
        %v5284 = vadd.f32 %v4891, %v5111
        %v5285 = vadd.f32 %v4892, %v5113
        %v5286 = vadd.f32 %v4893, %v5115
        %v5287 = vadd.f32 %v4894, %v5117
        %v5288 = vadd.f32 %v4895, %v5119
        %v5289 = vadd.f32 %v4896, %v5121
        %v5290 = vadd.f32 %v4897, %v5123
        %v5291 = vadd.f32 %v4898, %v5125
        %v5292 = vadd.f32 %v4899, %v5127
        %v5293 = vadd.f32 %v4900, %v5129
        %v5294 = vadd.f32 %v4901, %v5131
        %v5295 = vadd.f32 %v4902, %v5133
        %v5296 = vadd.f32 %v4903, %v5135
        %v5297 = vadd.f32 %v4904, %v5137
        %v5298 = vadd.f32 %v4905, %v5139
        %v5299 = vadd.f32 %v4906, %v5141
        %v5300 = vadd.f32 %v4907, %v5143
        %v5301 = vadd.f32 %v4908, %v5145
        %v5302 = vadd.f32 %v4909, %v5147
        %v5303 = vadd.f32 %v4910, %v5149
        %v5304 = vadd.f32 %v4911, %v5151
        %v5305 = vadd.f32 %v4912, %v5153
        %v5306 = vadd.f32 %v4913, %v5155
        %v5307 = vadd.f32 %v4914, %v5157
        %v5308 = vadd.f32 %v4915, %v5159
        %v5309 = vadd.f32 %v4916, %v5161
        %v5310 = vadd.f32 %v4917, %v5163
        %v5311 = vadd.f32 %v4918, %v5165
        %v5312 = vadd.f32 %v4919, %v5167
        %v5313 = vadd.f32 %v4920, %v5169
        %v5314 = vadd.f32 %v4921, %v5171
        %v5315 = vadd.f32 %v4922, %v5173
        %v5316 = vadd.f32 %v4923, %v5175
        %v5317 = vadd.f32 %v4924, %v5177
        %v5318 = vadd.f32 %v4925, %v5179
        %v5319 = vadd.f32 %v4926, %v5181
        %v5320 = vadd.f32 %v4927, %v5183
        %v5321 = vadd.f32 %v4928, %v5185
        %v5322 = vadd.f32 %v4929, %v5187
        %v5323 = vadd.f32 %v4930, %v5189
        %v5324 = vadd.f32 %v4931, %v5191
        %v5325 = vadd.f32 %v4932, %v5193
        %v5326 = vadd.f32 %v4933, %v5195
        %v5327 = vadd.f32 %v4934, %v5197
        %v5328 = vadd.f32 %v4935, %v5199
        %v5329 = vadd.f32 %v4936, %v5201
        %v5330 = vld [vmem:[%s3 + $0xb] sm:$0x1]
        %v5331 = vlaneseq
        %v5332 = vshrl.u32 %v5331, 7
        %v5333 = vsub.s32 0, %v5332
        %v5334 = vrot.slane %v5330, %v5333
        %5336 = vrot.lane.b32.xlu0 %v5334, 88
        %v5337 = vpop.permute.xlu0 %5336
        %v5339 = vmul.f32 %v1133, %v5337
        %v5340 = vmul.f32 %v1135, %v5337
        %v5341 = vmul.f32 %v1137, %v5337
        %v5342 = vmul.f32 %v1139, %v5337
        %v5343 = vmul.f32 %v1141, %v5337
        %v5344 = vmul.f32 %v1143, %v5337
        %v5345 = vmul.f32 %v1145, %v5337
        %v5346 = vmul.f32 %v1147, %v5337
        %v5347 = vmul.f32 %v1149, %v5337
        %v5348 = vmul.f32 %v1151, %v5337
        %v5349 = vmul.f32 %v1153, %v5337
        %v5350 = vmul.f32 %v1155, %v5337
        %v5351 = vmul.f32 %v1157, %v5337
        %v5352 = vmul.f32 %v1159, %v5337
        %v5353 = vmul.f32 %v1161, %v5337
        %v5354 = vmul.f32 %v1163, %v5337
        %v5355 = vmul.f32 %v1165, %v5337
        %v5356 = vmul.f32 %v1167, %v5337
        %v5357 = vmul.f32 %v1169, %v5337
        %v5358 = vmul.f32 %v1171, %v5337
        %v5359 = vmul.f32 %v1173, %v5337
        %v5360 = vmul.f32 %v1175, %v5337
        %v5361 = vmul.f32 %v1177, %v5337
        %v5362 = vmul.f32 %v1179, %v5337
        %v5363 = vmul.f32 %v1181, %v5337
        %v5364 = vmul.f32 %v1183, %v5337
        %v5365 = vmul.f32 %v1185, %v5337
        %v5366 = vmul.f32 %v1187, %v5337
        %v5367 = vmul.f32 %v1189, %v5337
        %v5368 = vmul.f32 %v1191, %v5337
        %v5369 = vmul.f32 %v1193, %v5337
        %v5370 = vmul.f32 %v1195, %v5337
        %v5371 = vmul.f32 %v1197, %v5337
        %v5372 = vmul.f32 %v1199, %v5337
        %v5373 = vmul.f32 %v1201, %v5337
        %v5374 = vmul.f32 %v1203, %v5337
        %v5375 = vmul.f32 %v1205, %v5337
        %v5376 = vmul.f32 %v1207, %v5337
        %v5377 = vmul.f32 %v1209, %v5337
        %v5378 = vmul.f32 %v1211, %v5337
        %v5379 = vmul.f32 %v1213, %v5337
        %v5380 = vmul.f32 %v1215, %v5337
        %v5381 = vmul.f32 %v1217, %v5337
        %v5382 = vmul.f32 %v1219, %v5337
        %v5383 = vmul.f32 %v1221, %v5337
        %v5384 = vmul.f32 %v1223, %v5337
        %v5385 = vmul.f32 %v1225, %v5337
        %v5386 = vmul.f32 %v1227, %v5337
        %v5387 = vmul.f32 %v1229, %v5337
        %v5388 = vmul.f32 %v1231, %v5337
        %v5389 = vmul.f32 %v1233, %v5337
        %v5390 = vmul.f32 %v1235, %v5337
        %v5391 = vmul.f32 %v1237, %v5337
        %v5392 = vmul.f32 %v1239, %v5337
        %v5393 = vmul.f32 %v1241, %v5337
        %v5394 = vmul.f32 %v1243, %v5337
        %v5395 = vmul.f32 %v1245, %v5337
        %v5396 = vmul.f32 %v1247, %v5337
        %v5397 = vmul.f32 %v1249, %v5337
        %v5398 = vmul.f32 %v1251, %v5337
        %v5399 = vmul.f32 %v1253, %v5337
        %v5400 = vmul.f32 %v1255, %v5337
        %v5401 = vmul.f32 %v1257, %v5337
        %v5402 = vmul.f32 %v1259, %v5337
        %5467 = vrot.lane.b32.xlu0 %v5339, 40
        %v5468 = vpop.permute.xlu0 %5467
        %5469 = vrot.lane.b32.xlu0 %v5340, 40
        %v5470 = vpop.permute.xlu0 %5469
        %5471 = vrot.lane.b32.xlu0 %v5341, 40
        %v5472 = vpop.permute.xlu0 %5471
        %5473 = vrot.lane.b32.xlu0 %v5342, 40
        %v5474 = vpop.permute.xlu0 %5473
        %5475 = vrot.lane.b32.xlu0 %v5343, 40
        %v5476 = vpop.permute.xlu0 %5475
        %5477 = vrot.lane.b32.xlu0 %v5344, 40
        %v5478 = vpop.permute.xlu0 %5477
        %5479 = vrot.lane.b32.xlu0 %v5345, 40
        %v5480 = vpop.permute.xlu0 %5479
        %5481 = vrot.lane.b32.xlu0 %v5346, 40
        %v5482 = vpop.permute.xlu0 %5481
        %5483 = vrot.lane.b32.xlu0 %v5347, 40
        %v5484 = vpop.permute.xlu0 %5483
        %5485 = vrot.lane.b32.xlu0 %v5348, 40
        %v5486 = vpop.permute.xlu0 %5485
        %5487 = vrot.lane.b32.xlu0 %v5349, 40
        %v5488 = vpop.permute.xlu0 %5487
        %5489 = vrot.lane.b32.xlu0 %v5350, 40
        %v5490 = vpop.permute.xlu0 %5489
        %5491 = vrot.lane.b32.xlu0 %v5351, 40
        %v5492 = vpop.permute.xlu0 %5491
        %5493 = vrot.lane.b32.xlu0 %v5352, 40
        %v5494 = vpop.permute.xlu0 %5493
        %5495 = vrot.lane.b32.xlu0 %v5353, 40
        %v5496 = vpop.permute.xlu0 %5495
        %5497 = vrot.lane.b32.xlu0 %v5354, 40
        %v5498 = vpop.permute.xlu0 %5497
        %5499 = vrot.lane.b32.xlu0 %v5355, 40
        %v5500 = vpop.permute.xlu0 %5499
        %5501 = vrot.lane.b32.xlu0 %v5356, 40
        %v5502 = vpop.permute.xlu0 %5501
        %5503 = vrot.lane.b32.xlu0 %v5357, 40
        %v5504 = vpop.permute.xlu0 %5503
        %5505 = vrot.lane.b32.xlu0 %v5358, 40
        %v5506 = vpop.permute.xlu0 %5505
        %5507 = vrot.lane.b32.xlu0 %v5359, 40
        %v5508 = vpop.permute.xlu0 %5507
        %5509 = vrot.lane.b32.xlu0 %v5360, 40
        %v5510 = vpop.permute.xlu0 %5509
        %5511 = vrot.lane.b32.xlu0 %v5361, 40
        %v5512 = vpop.permute.xlu0 %5511
        %5513 = vrot.lane.b32.xlu0 %v5362, 40
        %v5514 = vpop.permute.xlu0 %5513
        %5515 = vrot.lane.b32.xlu0 %v5363, 40
        %v5516 = vpop.permute.xlu0 %5515
        %5517 = vrot.lane.b32.xlu0 %v5364, 40
        %v5518 = vpop.permute.xlu0 %5517
        %5519 = vrot.lane.b32.xlu0 %v5365, 40
        %v5520 = vpop.permute.xlu0 %5519
        %5521 = vrot.lane.b32.xlu0 %v5366, 40
        %v5522 = vpop.permute.xlu0 %5521
        %5523 = vrot.lane.b32.xlu0 %v5367, 40
        %v5524 = vpop.permute.xlu0 %5523
        %5525 = vrot.lane.b32.xlu0 %v5368, 40
        %v5526 = vpop.permute.xlu0 %5525
        %5527 = vrot.lane.b32.xlu0 %v5369, 40
        %v5528 = vpop.permute.xlu0 %5527
        %5529 = vrot.lane.b32.xlu0 %v5370, 40
        %v5530 = vpop.permute.xlu0 %5529
        %5531 = vrot.lane.b32.xlu0 %v5371, 40
        %v5532 = vpop.permute.xlu0 %5531
        %5533 = vrot.lane.b32.xlu0 %v5372, 40
        %v5534 = vpop.permute.xlu0 %5533
        %5535 = vrot.lane.b32.xlu0 %v5373, 40
        %v5536 = vpop.permute.xlu0 %5535
        %5537 = vrot.lane.b32.xlu0 %v5374, 40
        %v5538 = vpop.permute.xlu0 %5537
        %5539 = vrot.lane.b32.xlu0 %v5375, 40
        %v5540 = vpop.permute.xlu0 %5539
        %5541 = vrot.lane.b32.xlu0 %v5376, 40
        %v5542 = vpop.permute.xlu0 %5541
        %5543 = vrot.lane.b32.xlu0 %v5377, 40
        %v5544 = vpop.permute.xlu0 %5543
        %5545 = vrot.lane.b32.xlu0 %v5378, 40
        %v5546 = vpop.permute.xlu0 %5545
        %5547 = vrot.lane.b32.xlu0 %v5379, 40
        %v5548 = vpop.permute.xlu0 %5547
        %5549 = vrot.lane.b32.xlu0 %v5380, 40
        %v5550 = vpop.permute.xlu0 %5549
        %5551 = vrot.lane.b32.xlu0 %v5381, 40
        %v5552 = vpop.permute.xlu0 %5551
        %5553 = vrot.lane.b32.xlu0 %v5382, 40
        %v5554 = vpop.permute.xlu0 %5553
        %5555 = vrot.lane.b32.xlu0 %v5383, 40
        %v5556 = vpop.permute.xlu0 %5555
        %5557 = vrot.lane.b32.xlu0 %v5384, 40
        %v5558 = vpop.permute.xlu0 %5557
        %5559 = vrot.lane.b32.xlu0 %v5385, 40
        %v5560 = vpop.permute.xlu0 %5559
        %5561 = vrot.lane.b32.xlu0 %v5386, 40
        %v5562 = vpop.permute.xlu0 %5561
        %5563 = vrot.lane.b32.xlu0 %v5387, 40
        %v5564 = vpop.permute.xlu0 %5563
        %5565 = vrot.lane.b32.xlu0 %v5388, 40
        %v5566 = vpop.permute.xlu0 %5565
        %5567 = vrot.lane.b32.xlu0 %v5389, 40
        %v5568 = vpop.permute.xlu0 %5567
        %5569 = vrot.lane.b32.xlu0 %v5390, 40
        %v5570 = vpop.permute.xlu0 %5569
        %5571 = vrot.lane.b32.xlu0 %v5391, 40
        %v5572 = vpop.permute.xlu0 %5571
        %5573 = vrot.lane.b32.xlu0 %v5392, 40
        %v5574 = vpop.permute.xlu0 %5573
        %5575 = vrot.lane.b32.xlu0 %v5393, 40
        %v5576 = vpop.permute.xlu0 %5575
        %5577 = vrot.lane.b32.xlu0 %v5394, 40
        %v5578 = vpop.permute.xlu0 %5577
        %5579 = vrot.lane.b32.xlu0 %v5395, 40
        %v5580 = vpop.permute.xlu0 %5579
        %5581 = vrot.lane.b32.xlu0 %v5396, 40
        %v5582 = vpop.permute.xlu0 %5581
        %5583 = vrot.lane.b32.xlu0 %v5397, 40
        %v5584 = vpop.permute.xlu0 %5583
        %5585 = vrot.lane.b32.xlu0 %v5398, 40
        %v5586 = vpop.permute.xlu0 %5585
        %5587 = vrot.lane.b32.xlu0 %v5399, 40
        %v5588 = vpop.permute.xlu0 %5587
        %5589 = vrot.lane.b32.xlu0 %v5400, 40
        %v5590 = vpop.permute.xlu0 %5589
        %5591 = vrot.lane.b32.xlu0 %v5401, 40
        %v5592 = vpop.permute.xlu0 %5591
        %5593 = vrot.lane.b32.xlu0 %v5402, 40
        %v5594 = vpop.permute.xlu0 %5593
        %v5659 = vadd.f32 %v5266, %v5468
        %v5660 = vadd.f32 %v5267, %v5470
        %v5661 = vadd.f32 %v5268, %v5472
        %v5662 = vadd.f32 %v5269, %v5474
        %v5663 = vadd.f32 %v5270, %v5476
        %v5664 = vadd.f32 %v5271, %v5478
        %v5665 = vadd.f32 %v5272, %v5480
        %v5666 = vadd.f32 %v5273, %v5482
        %v5667 = vadd.f32 %v5274, %v5484
        %v5668 = vadd.f32 %v5275, %v5486
        %v5669 = vadd.f32 %v5276, %v5488
        %v5670 = vadd.f32 %v5277, %v5490
        %v5671 = vadd.f32 %v5278, %v5492
        %v5672 = vadd.f32 %v5279, %v5494
        %v5673 = vadd.f32 %v5280, %v5496
        %v5674 = vadd.f32 %v5281, %v5498
        %v5675 = vadd.f32 %v5282, %v5500
        %v5676 = vadd.f32 %v5283, %v5502
        %v5677 = vadd.f32 %v5284, %v5504
        %v5678 = vadd.f32 %v5285, %v5506
        %v5679 = vadd.f32 %v5286, %v5508
        %v5680 = vadd.f32 %v5287, %v5510
        %v5681 = vadd.f32 %v5288, %v5512
        %v5682 = vadd.f32 %v5289, %v5514
        %v5683 = vadd.f32 %v5290, %v5516
        %v5684 = vadd.f32 %v5291, %v5518
        %v5685 = vadd.f32 %v5292, %v5520
        %v5686 = vadd.f32 %v5293, %v5522
        %v5687 = vadd.f32 %v5294, %v5524
        %v5688 = vadd.f32 %v5295, %v5526
        %v5689 = vadd.f32 %v5296, %v5528
        %v5690 = vadd.f32 %v5297, %v5530
        %v5691 = vadd.f32 %v5298, %v5532
        %v5692 = vadd.f32 %v5299, %v5534
        %v5693 = vadd.f32 %v5300, %v5536
        %v5694 = vadd.f32 %v5301, %v5538
        %v5695 = vadd.f32 %v5302, %v5540
        %v5696 = vadd.f32 %v5303, %v5542
        %v5697 = vadd.f32 %v5304, %v5544
        %v5698 = vadd.f32 %v5305, %v5546
        %v5699 = vadd.f32 %v5306, %v5548
        %v5700 = vadd.f32 %v5307, %v5550
        %v5701 = vadd.f32 %v5308, %v5552
        %v5702 = vadd.f32 %v5309, %v5554
        %v5703 = vadd.f32 %v5310, %v5556
        %v5704 = vadd.f32 %v5311, %v5558
        %v5705 = vadd.f32 %v5312, %v5560
        %v5706 = vadd.f32 %v5313, %v5562
        %v5707 = vadd.f32 %v5314, %v5564
        %v5708 = vadd.f32 %v5315, %v5566
        %v5709 = vadd.f32 %v5316, %v5568
        %v5710 = vadd.f32 %v5317, %v5570
        %v5711 = vadd.f32 %v5318, %v5572
        %v5712 = vadd.f32 %v5319, %v5574
        %v5713 = vadd.f32 %v5320, %v5576
        %v5714 = vadd.f32 %v5321, %v5578
        %v5715 = vadd.f32 %v5322, %v5580
        %v5716 = vadd.f32 %v5323, %v5582
        %v5717 = vadd.f32 %v5324, %v5584
        %v5718 = vadd.f32 %v5325, %v5586
        %v5719 = vadd.f32 %v5326, %v5588
        %v5720 = vadd.f32 %v5327, %v5590
        %v5721 = vadd.f32 %v5328, %v5592
        %v5722 = vadd.f32 %v5329, %v5594
        %v5723 = vld [vmem:[%s3 + $0xc] sm:$0x1]
        %v5724 = vlaneseq
        %v5725 = vshrl.u32 %v5724, 7
        %v5726 = vsub.s32 0, %v5725
        %v5727 = vrot.slane %v5723, %v5726
        %5729 = vrot.lane.b32.xlu0 %v5727, 96
        %v5730 = vpop.permute.xlu0 %5729
        %v5732 = vmul.f32 %v1133, %v5730
        %v5733 = vmul.f32 %v1135, %v5730
        %v5734 = vmul.f32 %v1137, %v5730
        %v5735 = vmul.f32 %v1139, %v5730
        %v5736 = vmul.f32 %v1141, %v5730
        %v5737 = vmul.f32 %v1143, %v5730
        %v5738 = vmul.f32 %v1145, %v5730
        %v5739 = vmul.f32 %v1147, %v5730
        %v5740 = vmul.f32 %v1149, %v5730
        %v5741 = vmul.f32 %v1151, %v5730
        %v5742 = vmul.f32 %v1153, %v5730
        %v5743 = vmul.f32 %v1155, %v5730
        %v5744 = vmul.f32 %v1157, %v5730
        %v5745 = vmul.f32 %v1159, %v5730
        %v5746 = vmul.f32 %v1161, %v5730
        %v5747 = vmul.f32 %v1163, %v5730
        %v5748 = vmul.f32 %v1165, %v5730
        %v5749 = vmul.f32 %v1167, %v5730
        %v5750 = vmul.f32 %v1169, %v5730
        %v5751 = vmul.f32 %v1171, %v5730
        %v5752 = vmul.f32 %v1173, %v5730
        %v5753 = vmul.f32 %v1175, %v5730
        %v5754 = vmul.f32 %v1177, %v5730
        %v5755 = vmul.f32 %v1179, %v5730
        %v5756 = vmul.f32 %v1181, %v5730
        %v5757 = vmul.f32 %v1183, %v5730
        %v5758 = vmul.f32 %v1185, %v5730
        %v5759 = vmul.f32 %v1187, %v5730
        %v5760 = vmul.f32 %v1189, %v5730
        %v5761 = vmul.f32 %v1191, %v5730
        %v5762 = vmul.f32 %v1193, %v5730
        %v5763 = vmul.f32 %v1195, %v5730
        %v5764 = vmul.f32 %v1197, %v5730
        %v5765 = vmul.f32 %v1199, %v5730
        %v5766 = vmul.f32 %v1201, %v5730
        %v5767 = vmul.f32 %v1203, %v5730
        %v5768 = vmul.f32 %v1205, %v5730
        %v5769 = vmul.f32 %v1207, %v5730
        %v5770 = vmul.f32 %v1209, %v5730
        %v5771 = vmul.f32 %v1211, %v5730
        %v5772 = vmul.f32 %v1213, %v5730
        %v5773 = vmul.f32 %v1215, %v5730
        %v5774 = vmul.f32 %v1217, %v5730
        %v5775 = vmul.f32 %v1219, %v5730
        %v5776 = vmul.f32 %v1221, %v5730
        %v5777 = vmul.f32 %v1223, %v5730
        %v5778 = vmul.f32 %v1225, %v5730
        %v5779 = vmul.f32 %v1227, %v5730
        %v5780 = vmul.f32 %v1229, %v5730
        %v5781 = vmul.f32 %v1231, %v5730
        %v5782 = vmul.f32 %v1233, %v5730
        %v5783 = vmul.f32 %v1235, %v5730
        %v5784 = vmul.f32 %v1237, %v5730
        %v5785 = vmul.f32 %v1239, %v5730
        %v5786 = vmul.f32 %v1241, %v5730
        %v5787 = vmul.f32 %v1243, %v5730
        %v5788 = vmul.f32 %v1245, %v5730
        %v5789 = vmul.f32 %v1247, %v5730
        %v5790 = vmul.f32 %v1249, %v5730
        %v5791 = vmul.f32 %v1251, %v5730
        %v5792 = vmul.f32 %v1253, %v5730
        %v5793 = vmul.f32 %v1255, %v5730
        %v5794 = vmul.f32 %v1257, %v5730
        %v5795 = vmul.f32 %v1259, %v5730
        %5860 = vrot.lane.b32.xlu0 %v5732, 32
        %v5861 = vpop.permute.xlu0 %5860
        %5862 = vrot.lane.b32.xlu0 %v5733, 32
        %v5863 = vpop.permute.xlu0 %5862
        %5864 = vrot.lane.b32.xlu0 %v5734, 32
        %v5865 = vpop.permute.xlu0 %5864
        %5866 = vrot.lane.b32.xlu0 %v5735, 32
        %v5867 = vpop.permute.xlu0 %5866
        %5868 = vrot.lane.b32.xlu0 %v5736, 32
        %v5869 = vpop.permute.xlu0 %5868
        %5870 = vrot.lane.b32.xlu0 %v5737, 32
        %v5871 = vpop.permute.xlu0 %5870
        %5872 = vrot.lane.b32.xlu0 %v5738, 32
        %v5873 = vpop.permute.xlu0 %5872
        %5874 = vrot.lane.b32.xlu0 %v5739, 32
        %v5875 = vpop.permute.xlu0 %5874
        %5876 = vrot.lane.b32.xlu0 %v5740, 32
        %v5877 = vpop.permute.xlu0 %5876
        %5878 = vrot.lane.b32.xlu0 %v5741, 32
        %v5879 = vpop.permute.xlu0 %5878
        %5880 = vrot.lane.b32.xlu0 %v5742, 32
        %v5881 = vpop.permute.xlu0 %5880
        %5882 = vrot.lane.b32.xlu0 %v5743, 32
        %v5883 = vpop.permute.xlu0 %5882
        %5884 = vrot.lane.b32.xlu0 %v5744, 32
        %v5885 = vpop.permute.xlu0 %5884
        %5886 = vrot.lane.b32.xlu0 %v5745, 32
        %v5887 = vpop.permute.xlu0 %5886
        %5888 = vrot.lane.b32.xlu0 %v5746, 32
        %v5889 = vpop.permute.xlu0 %5888
        %5890 = vrot.lane.b32.xlu0 %v5747, 32
        %v5891 = vpop.permute.xlu0 %5890
        %5892 = vrot.lane.b32.xlu0 %v5748, 32
        %v5893 = vpop.permute.xlu0 %5892
        %5894 = vrot.lane.b32.xlu0 %v5749, 32
        %v5895 = vpop.permute.xlu0 %5894
        %5896 = vrot.lane.b32.xlu0 %v5750, 32
        %v5897 = vpop.permute.xlu0 %5896
        %5898 = vrot.lane.b32.xlu0 %v5751, 32
        %v5899 = vpop.permute.xlu0 %5898
        %5900 = vrot.lane.b32.xlu0 %v5752, 32
        %v5901 = vpop.permute.xlu0 %5900
        %5902 = vrot.lane.b32.xlu0 %v5753, 32
        %v5903 = vpop.permute.xlu0 %5902
        %5904 = vrot.lane.b32.xlu0 %v5754, 32
        %v5905 = vpop.permute.xlu0 %5904
        %5906 = vrot.lane.b32.xlu0 %v5755, 32
        %v5907 = vpop.permute.xlu0 %5906
        %5908 = vrot.lane.b32.xlu0 %v5756, 32
        %v5909 = vpop.permute.xlu0 %5908
        %5910 = vrot.lane.b32.xlu0 %v5757, 32
        %v5911 = vpop.permute.xlu0 %5910
        %5912 = vrot.lane.b32.xlu0 %v5758, 32
        %v5913 = vpop.permute.xlu0 %5912
        %5914 = vrot.lane.b32.xlu0 %v5759, 32
        %v5915 = vpop.permute.xlu0 %5914
        %5916 = vrot.lane.b32.xlu0 %v5760, 32
        %v5917 = vpop.permute.xlu0 %5916
        %5918 = vrot.lane.b32.xlu0 %v5761, 32
        %v5919 = vpop.permute.xlu0 %5918
        %5920 = vrot.lane.b32.xlu0 %v5762, 32
        %v5921 = vpop.permute.xlu0 %5920
        %5922 = vrot.lane.b32.xlu0 %v5763, 32
        %v5923 = vpop.permute.xlu0 %5922
        %5924 = vrot.lane.b32.xlu0 %v5764, 32
        %v5925 = vpop.permute.xlu0 %5924
        %5926 = vrot.lane.b32.xlu0 %v5765, 32
        %v5927 = vpop.permute.xlu0 %5926
        %5928 = vrot.lane.b32.xlu0 %v5766, 32
        %v5929 = vpop.permute.xlu0 %5928
        %5930 = vrot.lane.b32.xlu0 %v5767, 32
        %v5931 = vpop.permute.xlu0 %5930
        %5932 = vrot.lane.b32.xlu0 %v5768, 32
        %v5933 = vpop.permute.xlu0 %5932
        %5934 = vrot.lane.b32.xlu0 %v5769, 32
        %v5935 = vpop.permute.xlu0 %5934
        %5936 = vrot.lane.b32.xlu0 %v5770, 32
        %v5937 = vpop.permute.xlu0 %5936
        %5938 = vrot.lane.b32.xlu0 %v5771, 32
        %v5939 = vpop.permute.xlu0 %5938
        %5940 = vrot.lane.b32.xlu0 %v5772, 32
        %v5941 = vpop.permute.xlu0 %5940
        %5942 = vrot.lane.b32.xlu0 %v5773, 32
        %v5943 = vpop.permute.xlu0 %5942
        %5944 = vrot.lane.b32.xlu0 %v5774, 32
        %v5945 = vpop.permute.xlu0 %5944
        %5946 = vrot.lane.b32.xlu0 %v5775, 32
        %v5947 = vpop.permute.xlu0 %5946
        %5948 = vrot.lane.b32.xlu0 %v5776, 32
        %v5949 = vpop.permute.xlu0 %5948
        %5950 = vrot.lane.b32.xlu0 %v5777, 32
        %v5951 = vpop.permute.xlu0 %5950
        %5952 = vrot.lane.b32.xlu0 %v5778, 32
        %v5953 = vpop.permute.xlu0 %5952
        %5954 = vrot.lane.b32.xlu0 %v5779, 32
        %v5955 = vpop.permute.xlu0 %5954
        %5956 = vrot.lane.b32.xlu0 %v5780, 32
        %v5957 = vpop.permute.xlu0 %5956
        %5958 = vrot.lane.b32.xlu0 %v5781, 32
        %v5959 = vpop.permute.xlu0 %5958
        %5960 = vrot.lane.b32.xlu0 %v5782, 32
        %v5961 = vpop.permute.xlu0 %5960
        %5962 = vrot.lane.b32.xlu0 %v5783, 32
        %v5963 = vpop.permute.xlu0 %5962
        %5964 = vrot.lane.b32.xlu0 %v5784, 32
        %v5965 = vpop.permute.xlu0 %5964
        %5966 = vrot.lane.b32.xlu0 %v5785, 32
        %v5967 = vpop.permute.xlu0 %5966
        %5968 = vrot.lane.b32.xlu0 %v5786, 32
        %v5969 = vpop.permute.xlu0 %5968
        %5970 = vrot.lane.b32.xlu0 %v5787, 32
        %v5971 = vpop.permute.xlu0 %5970
        %5972 = vrot.lane.b32.xlu0 %v5788, 32
        %v5973 = vpop.permute.xlu0 %5972
        %5974 = vrot.lane.b32.xlu0 %v5789, 32
        %v5975 = vpop.permute.xlu0 %5974
        %5976 = vrot.lane.b32.xlu0 %v5790, 32
        %v5977 = vpop.permute.xlu0 %5976
        %5978 = vrot.lane.b32.xlu0 %v5791, 32
        %v5979 = vpop.permute.xlu0 %5978
        %5980 = vrot.lane.b32.xlu0 %v5792, 32
        %v5981 = vpop.permute.xlu0 %5980
        %5982 = vrot.lane.b32.xlu0 %v5793, 32
        %v5983 = vpop.permute.xlu0 %5982
        %5984 = vrot.lane.b32.xlu0 %v5794, 32
        %v5985 = vpop.permute.xlu0 %5984
        %5986 = vrot.lane.b32.xlu0 %v5795, 32
        %v5987 = vpop.permute.xlu0 %5986
        %v6052 = vadd.f32 %v5659, %v5861
        %v6053 = vadd.f32 %v5660, %v5863
        %v6054 = vadd.f32 %v5661, %v5865
        %v6055 = vadd.f32 %v5662, %v5867
        %v6056 = vadd.f32 %v5663, %v5869
        %v6057 = vadd.f32 %v5664, %v5871
        %v6058 = vadd.f32 %v5665, %v5873
        %v6059 = vadd.f32 %v5666, %v5875
        %v6060 = vadd.f32 %v5667, %v5877
        %v6061 = vadd.f32 %v5668, %v5879
        %v6062 = vadd.f32 %v5669, %v5881
        %v6063 = vadd.f32 %v5670, %v5883
        %v6064 = vadd.f32 %v5671, %v5885
        %v6065 = vadd.f32 %v5672, %v5887
        %v6066 = vadd.f32 %v5673, %v5889
        %v6067 = vadd.f32 %v5674, %v5891
        %v6068 = vadd.f32 %v5675, %v5893
        %v6069 = vadd.f32 %v5676, %v5895
        %v6070 = vadd.f32 %v5677, %v5897
        %v6071 = vadd.f32 %v5678, %v5899
        %v6072 = vadd.f32 %v5679, %v5901
        %v6073 = vadd.f32 %v5680, %v5903
        %v6074 = vadd.f32 %v5681, %v5905
        %v6075 = vadd.f32 %v5682, %v5907
        %v6076 = vadd.f32 %v5683, %v5909
        %v6077 = vadd.f32 %v5684, %v5911
        %v6078 = vadd.f32 %v5685, %v5913
        %v6079 = vadd.f32 %v5686, %v5915
        %v6080 = vadd.f32 %v5687, %v5917
        %v6081 = vadd.f32 %v5688, %v5919
        %v6082 = vadd.f32 %v5689, %v5921
        %v6083 = vadd.f32 %v5690, %v5923
        %v6084 = vadd.f32 %v5691, %v5925
        %v6085 = vadd.f32 %v5692, %v5927
        %v6086 = vadd.f32 %v5693, %v5929
        %v6087 = vadd.f32 %v5694, %v5931
        %v6088 = vadd.f32 %v5695, %v5933
        %v6089 = vadd.f32 %v5696, %v5935
        %v6090 = vadd.f32 %v5697, %v5937
        %v6091 = vadd.f32 %v5698, %v5939
        %v6092 = vadd.f32 %v5699, %v5941
        %v6093 = vadd.f32 %v5700, %v5943
        %v6094 = vadd.f32 %v5701, %v5945
        %v6095 = vadd.f32 %v5702, %v5947
        %v6096 = vadd.f32 %v5703, %v5949
        %v6097 = vadd.f32 %v5704, %v5951
        %v6098 = vadd.f32 %v5705, %v5953
        %v6099 = vadd.f32 %v5706, %v5955
        %v6100 = vadd.f32 %v5707, %v5957
        %v6101 = vadd.f32 %v5708, %v5959
        %v6102 = vadd.f32 %v5709, %v5961
        %v6103 = vadd.f32 %v5710, %v5963
        %v6104 = vadd.f32 %v5711, %v5965
        %v6105 = vadd.f32 %v5712, %v5967
        %v6106 = vadd.f32 %v5713, %v5969
        %v6107 = vadd.f32 %v5714, %v5971
        %v6108 = vadd.f32 %v5715, %v5973
        %v6109 = vadd.f32 %v5716, %v5975
        %v6110 = vadd.f32 %v5717, %v5977
        %v6111 = vadd.f32 %v5718, %v5979
        %v6112 = vadd.f32 %v5719, %v5981
        %v6113 = vadd.f32 %v5720, %v5983
        %v6114 = vadd.f32 %v5721, %v5985
        %v6115 = vadd.f32 %v5722, %v5987
        %v6116 = vld [vmem:[%s3 + $0xd] sm:$0x1]
        %v6117 = vlaneseq
        %v6118 = vshrl.u32 %v6117, 7
        %v6119 = vsub.s32 0, %v6118
        %v6120 = vrot.slane %v6116, %v6119
        %6122 = vrot.lane.b32.xlu0 %v6120, 104
        %v6123 = vpop.permute.xlu0 %6122
        %v6125 = vmul.f32 %v1133, %v6123
        %v6126 = vmul.f32 %v1135, %v6123
        %v6127 = vmul.f32 %v1137, %v6123
        %v6128 = vmul.f32 %v1139, %v6123
        %v6129 = vmul.f32 %v1141, %v6123
        %v6130 = vmul.f32 %v1143, %v6123
        %v6131 = vmul.f32 %v1145, %v6123
        %v6132 = vmul.f32 %v1147, %v6123
        %v6133 = vmul.f32 %v1149, %v6123
        %v6134 = vmul.f32 %v1151, %v6123
        %v6135 = vmul.f32 %v1153, %v6123
        %v6136 = vmul.f32 %v1155, %v6123
        %v6137 = vmul.f32 %v1157, %v6123
        %v6138 = vmul.f32 %v1159, %v6123
        %v6139 = vmul.f32 %v1161, %v6123
        %v6140 = vmul.f32 %v1163, %v6123
        %v6141 = vmul.f32 %v1165, %v6123
        %v6142 = vmul.f32 %v1167, %v6123
        %v6143 = vmul.f32 %v1169, %v6123
        %v6144 = vmul.f32 %v1171, %v6123
        %v6145 = vmul.f32 %v1173, %v6123
        %v6146 = vmul.f32 %v1175, %v6123
        %v6147 = vmul.f32 %v1177, %v6123
        %v6148 = vmul.f32 %v1179, %v6123
        %v6149 = vmul.f32 %v1181, %v6123
        %v6150 = vmul.f32 %v1183, %v6123
        %v6151 = vmul.f32 %v1185, %v6123
        %v6152 = vmul.f32 %v1187, %v6123
        %v6153 = vmul.f32 %v1189, %v6123
        %v6154 = vmul.f32 %v1191, %v6123
        %v6155 = vmul.f32 %v1193, %v6123
        %v6156 = vmul.f32 %v1195, %v6123
        %v6157 = vmul.f32 %v1197, %v6123
        %v6158 = vmul.f32 %v1199, %v6123
        %v6159 = vmul.f32 %v1201, %v6123
        %v6160 = vmul.f32 %v1203, %v6123
        %v6161 = vmul.f32 %v1205, %v6123
        %v6162 = vmul.f32 %v1207, %v6123
        %v6163 = vmul.f32 %v1209, %v6123
        %v6164 = vmul.f32 %v1211, %v6123
        %v6165 = vmul.f32 %v1213, %v6123
        %v6166 = vmul.f32 %v1215, %v6123
        %v6167 = vmul.f32 %v1217, %v6123
        %v6168 = vmul.f32 %v1219, %v6123
        %v6169 = vmul.f32 %v1221, %v6123
        %v6170 = vmul.f32 %v1223, %v6123
        %v6171 = vmul.f32 %v1225, %v6123
        %v6172 = vmul.f32 %v1227, %v6123
        %v6173 = vmul.f32 %v1229, %v6123
        %v6174 = vmul.f32 %v1231, %v6123
        %v6175 = vmul.f32 %v1233, %v6123
        %v6176 = vmul.f32 %v1235, %v6123
        %v6177 = vmul.f32 %v1237, %v6123
        %v6178 = vmul.f32 %v1239, %v6123
        %v6179 = vmul.f32 %v1241, %v6123
        %v6180 = vmul.f32 %v1243, %v6123
        %v6181 = vmul.f32 %v1245, %v6123
        %v6182 = vmul.f32 %v1247, %v6123
        %v6183 = vmul.f32 %v1249, %v6123
        %v6184 = vmul.f32 %v1251, %v6123
        %v6185 = vmul.f32 %v1253, %v6123
        %v6186 = vmul.f32 %v1255, %v6123
        %v6187 = vmul.f32 %v1257, %v6123
        %v6188 = vmul.f32 %v1259, %v6123
        %6253 = vrot.lane.b32.xlu0 %v6125, 24
        %v6254 = vpop.permute.xlu0 %6253
        %6255 = vrot.lane.b32.xlu0 %v6126, 24
        %v6256 = vpop.permute.xlu0 %6255
        %6257 = vrot.lane.b32.xlu0 %v6127, 24
        %v6258 = vpop.permute.xlu0 %6257
        %6259 = vrot.lane.b32.xlu0 %v6128, 24
        %v6260 = vpop.permute.xlu0 %6259
        %6261 = vrot.lane.b32.xlu0 %v6129, 24
        %v6262 = vpop.permute.xlu0 %6261
        %6263 = vrot.lane.b32.xlu0 %v6130, 24
        %v6264 = vpop.permute.xlu0 %6263
        %6265 = vrot.lane.b32.xlu0 %v6131, 24
        %v6266 = vpop.permute.xlu0 %6265
        %6267 = vrot.lane.b32.xlu0 %v6132, 24
        %v6268 = vpop.permute.xlu0 %6267
        %6269 = vrot.lane.b32.xlu0 %v6133, 24
        %v6270 = vpop.permute.xlu0 %6269
        %6271 = vrot.lane.b32.xlu0 %v6134, 24
        %v6272 = vpop.permute.xlu0 %6271
        %6273 = vrot.lane.b32.xlu0 %v6135, 24
        %v6274 = vpop.permute.xlu0 %6273
        %6275 = vrot.lane.b32.xlu0 %v6136, 24
        %v6276 = vpop.permute.xlu0 %6275
        %6277 = vrot.lane.b32.xlu0 %v6137, 24
        %v6278 = vpop.permute.xlu0 %6277
        %6279 = vrot.lane.b32.xlu0 %v6138, 24
        %v6280 = vpop.permute.xlu0 %6279
        %6281 = vrot.lane.b32.xlu0 %v6139, 24
        %v6282 = vpop.permute.xlu0 %6281
        %6283 = vrot.lane.b32.xlu0 %v6140, 24
        %v6284 = vpop.permute.xlu0 %6283
        %6285 = vrot.lane.b32.xlu0 %v6141, 24
        %v6286 = vpop.permute.xlu0 %6285
        %6287 = vrot.lane.b32.xlu0 %v6142, 24
        %v6288 = vpop.permute.xlu0 %6287
        %6289 = vrot.lane.b32.xlu0 %v6143, 24
        %v6290 = vpop.permute.xlu0 %6289
        %6291 = vrot.lane.b32.xlu0 %v6144, 24
        %v6292 = vpop.permute.xlu0 %6291
        %6293 = vrot.lane.b32.xlu0 %v6145, 24
        %v6294 = vpop.permute.xlu0 %6293
        %6295 = vrot.lane.b32.xlu0 %v6146, 24
        %v6296 = vpop.permute.xlu0 %6295
        %6297 = vrot.lane.b32.xlu0 %v6147, 24
        %v6298 = vpop.permute.xlu0 %6297
        %6299 = vrot.lane.b32.xlu0 %v6148, 24
        %v6300 = vpop.permute.xlu0 %6299
        %6301 = vrot.lane.b32.xlu0 %v6149, 24
        %v6302 = vpop.permute.xlu0 %6301
        %6303 = vrot.lane.b32.xlu0 %v6150, 24
        %v6304 = vpop.permute.xlu0 %6303
        %6305 = vrot.lane.b32.xlu0 %v6151, 24
        %v6306 = vpop.permute.xlu0 %6305
        %6307 = vrot.lane.b32.xlu0 %v6152, 24
        %v6308 = vpop.permute.xlu0 %6307
        %6309 = vrot.lane.b32.xlu0 %v6153, 24
        %v6310 = vpop.permute.xlu0 %6309
        %6311 = vrot.lane.b32.xlu0 %v6154, 24
        %v6312 = vpop.permute.xlu0 %6311
        %6313 = vrot.lane.b32.xlu0 %v6155, 24
        %v6314 = vpop.permute.xlu0 %6313
        %6315 = vrot.lane.b32.xlu0 %v6156, 24
        %v6316 = vpop.permute.xlu0 %6315
        %6317 = vrot.lane.b32.xlu0 %v6157, 24
        %v6318 = vpop.permute.xlu0 %6317
        %6319 = vrot.lane.b32.xlu0 %v6158, 24
        %v6320 = vpop.permute.xlu0 %6319
        %6321 = vrot.lane.b32.xlu0 %v6159, 24
        %v6322 = vpop.permute.xlu0 %6321
        %6323 = vrot.lane.b32.xlu0 %v6160, 24
        %v6324 = vpop.permute.xlu0 %6323
        %6325 = vrot.lane.b32.xlu0 %v6161, 24
        %v6326 = vpop.permute.xlu0 %6325
        %6327 = vrot.lane.b32.xlu0 %v6162, 24
        %v6328 = vpop.permute.xlu0 %6327
        %6329 = vrot.lane.b32.xlu0 %v6163, 24
        %v6330 = vpop.permute.xlu0 %6329
        %6331 = vrot.lane.b32.xlu0 %v6164, 24
        %v6332 = vpop.permute.xlu0 %6331
        %6333 = vrot.lane.b32.xlu0 %v6165, 24
        %v6334 = vpop.permute.xlu0 %6333
        %6335 = vrot.lane.b32.xlu0 %v6166, 24
        %v6336 = vpop.permute.xlu0 %6335
        %6337 = vrot.lane.b32.xlu0 %v6167, 24
        %v6338 = vpop.permute.xlu0 %6337
        %6339 = vrot.lane.b32.xlu0 %v6168, 24
        %v6340 = vpop.permute.xlu0 %6339
        %6341 = vrot.lane.b32.xlu0 %v6169, 24
        %v6342 = vpop.permute.xlu0 %6341
        %6343 = vrot.lane.b32.xlu0 %v6170, 24
        %v6344 = vpop.permute.xlu0 %6343
        %6345 = vrot.lane.b32.xlu0 %v6171, 24
        %v6346 = vpop.permute.xlu0 %6345
        %6347 = vrot.lane.b32.xlu0 %v6172, 24
        %v6348 = vpop.permute.xlu0 %6347
        %6349 = vrot.lane.b32.xlu0 %v6173, 24
        %v6350 = vpop.permute.xlu0 %6349
        %6351 = vrot.lane.b32.xlu0 %v6174, 24
        %v6352 = vpop.permute.xlu0 %6351
        %6353 = vrot.lane.b32.xlu0 %v6175, 24
        %v6354 = vpop.permute.xlu0 %6353
        %6355 = vrot.lane.b32.xlu0 %v6176, 24
        %v6356 = vpop.permute.xlu0 %6355
        %6357 = vrot.lane.b32.xlu0 %v6177, 24
        %v6358 = vpop.permute.xlu0 %6357
        %6359 = vrot.lane.b32.xlu0 %v6178, 24
        %v6360 = vpop.permute.xlu0 %6359
        %6361 = vrot.lane.b32.xlu0 %v6179, 24
        %v6362 = vpop.permute.xlu0 %6361
        %6363 = vrot.lane.b32.xlu0 %v6180, 24
        %v6364 = vpop.permute.xlu0 %6363
        %6365 = vrot.lane.b32.xlu0 %v6181, 24
        %v6366 = vpop.permute.xlu0 %6365
        %6367 = vrot.lane.b32.xlu0 %v6182, 24
        %v6368 = vpop.permute.xlu0 %6367
        %6369 = vrot.lane.b32.xlu0 %v6183, 24
        %v6370 = vpop.permute.xlu0 %6369
        %6371 = vrot.lane.b32.xlu0 %v6184, 24
        %v6372 = vpop.permute.xlu0 %6371
        %6373 = vrot.lane.b32.xlu0 %v6185, 24
        %v6374 = vpop.permute.xlu0 %6373
        %6375 = vrot.lane.b32.xlu0 %v6186, 24
        %v6376 = vpop.permute.xlu0 %6375
        %6377 = vrot.lane.b32.xlu0 %v6187, 24
        %v6378 = vpop.permute.xlu0 %6377
        %6379 = vrot.lane.b32.xlu0 %v6188, 24
        %v6380 = vpop.permute.xlu0 %6379
        %v6445 = vadd.f32 %v6052, %v6254
        %v6446 = vadd.f32 %v6053, %v6256
        %v6447 = vadd.f32 %v6054, %v6258
        %v6448 = vadd.f32 %v6055, %v6260
        %v6449 = vadd.f32 %v6056, %v6262
        %v6450 = vadd.f32 %v6057, %v6264
        %v6451 = vadd.f32 %v6058, %v6266
        %v6452 = vadd.f32 %v6059, %v6268
        %v6453 = vadd.f32 %v6060, %v6270
        %v6454 = vadd.f32 %v6061, %v6272
        %v6455 = vadd.f32 %v6062, %v6274
        %v6456 = vadd.f32 %v6063, %v6276
        %v6457 = vadd.f32 %v6064, %v6278
        %v6458 = vadd.f32 %v6065, %v6280
        %v6459 = vadd.f32 %v6066, %v6282
        %v6460 = vadd.f32 %v6067, %v6284
        %v6461 = vadd.f32 %v6068, %v6286
        %v6462 = vadd.f32 %v6069, %v6288
        %v6463 = vadd.f32 %v6070, %v6290
        %v6464 = vadd.f32 %v6071, %v6292
        %v6465 = vadd.f32 %v6072, %v6294
        %v6466 = vadd.f32 %v6073, %v6296
        %v6467 = vadd.f32 %v6074, %v6298
        %v6468 = vadd.f32 %v6075, %v6300
        %v6469 = vadd.f32 %v6076, %v6302
        %v6470 = vadd.f32 %v6077, %v6304
        %v6471 = vadd.f32 %v6078, %v6306
        %v6472 = vadd.f32 %v6079, %v6308
        %v6473 = vadd.f32 %v6080, %v6310
        %v6474 = vadd.f32 %v6081, %v6312
        %v6475 = vadd.f32 %v6082, %v6314
        %v6476 = vadd.f32 %v6083, %v6316
        %v6477 = vadd.f32 %v6084, %v6318
        %v6478 = vadd.f32 %v6085, %v6320
        %v6479 = vadd.f32 %v6086, %v6322
        %v6480 = vadd.f32 %v6087, %v6324
        %v6481 = vadd.f32 %v6088, %v6326
        %v6482 = vadd.f32 %v6089, %v6328
        %v6483 = vadd.f32 %v6090, %v6330
        %v6484 = vadd.f32 %v6091, %v6332
        %v6485 = vadd.f32 %v6092, %v6334
        %v6486 = vadd.f32 %v6093, %v6336
        %v6487 = vadd.f32 %v6094, %v6338
        %v6488 = vadd.f32 %v6095, %v6340
        %v6489 = vadd.f32 %v6096, %v6342
        %v6490 = vadd.f32 %v6097, %v6344
        %v6491 = vadd.f32 %v6098, %v6346
        %v6492 = vadd.f32 %v6099, %v6348
        %v6493 = vadd.f32 %v6100, %v6350
        %v6494 = vadd.f32 %v6101, %v6352
        %v6495 = vadd.f32 %v6102, %v6354
        %v6496 = vadd.f32 %v6103, %v6356
        %v6497 = vadd.f32 %v6104, %v6358
        %v6498 = vadd.f32 %v6105, %v6360
        %v6499 = vadd.f32 %v6106, %v6362
        %v6500 = vadd.f32 %v6107, %v6364
        %v6501 = vadd.f32 %v6108, %v6366
        %v6502 = vadd.f32 %v6109, %v6368
        %v6503 = vadd.f32 %v6110, %v6370
        %v6504 = vadd.f32 %v6111, %v6372
        %v6505 = vadd.f32 %v6112, %v6374
        %v6506 = vadd.f32 %v6113, %v6376
        %v6507 = vadd.f32 %v6114, %v6378
        %v6508 = vadd.f32 %v6115, %v6380
        %v6509 = vld [vmem:[%s3 + $0xe] sm:$0x1]
        %v6510 = vlaneseq
        %v6511 = vshrl.u32 %v6510, 7
        %v6512 = vsub.s32 0, %v6511
        %v6513 = vrot.slane %v6509, %v6512
        %6515 = vrot.lane.b32.xlu0 %v6513, 112
        %v6516 = vpop.permute.xlu0 %6515
        %v6518 = vmul.f32 %v1133, %v6516
        %v6519 = vmul.f32 %v1135, %v6516
        %v6520 = vmul.f32 %v1137, %v6516
        %v6521 = vmul.f32 %v1139, %v6516
        %v6522 = vmul.f32 %v1141, %v6516
        %v6523 = vmul.f32 %v1143, %v6516
        %v6524 = vmul.f32 %v1145, %v6516
        %v6525 = vmul.f32 %v1147, %v6516
        %v6526 = vmul.f32 %v1149, %v6516
        %v6527 = vmul.f32 %v1151, %v6516
        %v6528 = vmul.f32 %v1153, %v6516
        %v6529 = vmul.f32 %v1155, %v6516
        %v6530 = vmul.f32 %v1157, %v6516
        %v6531 = vmul.f32 %v1159, %v6516
        %v6532 = vmul.f32 %v1161, %v6516
        %v6533 = vmul.f32 %v1163, %v6516
        %v6534 = vmul.f32 %v1165, %v6516
        %v6535 = vmul.f32 %v1167, %v6516
        %v6536 = vmul.f32 %v1169, %v6516
        %v6537 = vmul.f32 %v1171, %v6516
        %v6538 = vmul.f32 %v1173, %v6516
        %v6539 = vmul.f32 %v1175, %v6516
        %v6540 = vmul.f32 %v1177, %v6516
        %v6541 = vmul.f32 %v1179, %v6516
        %v6542 = vmul.f32 %v1181, %v6516
        %v6543 = vmul.f32 %v1183, %v6516
        %v6544 = vmul.f32 %v1185, %v6516
        %v6545 = vmul.f32 %v1187, %v6516
        %v6546 = vmul.f32 %v1189, %v6516
        %v6547 = vmul.f32 %v1191, %v6516
        %v6548 = vmul.f32 %v1193, %v6516
        %v6549 = vmul.f32 %v1195, %v6516
        %v6550 = vmul.f32 %v1197, %v6516
        %v6551 = vmul.f32 %v1199, %v6516
        %v6552 = vmul.f32 %v1201, %v6516
        %v6553 = vmul.f32 %v1203, %v6516
        %v6554 = vmul.f32 %v1205, %v6516
        %v6555 = vmul.f32 %v1207, %v6516
        %v6556 = vmul.f32 %v1209, %v6516
        %v6557 = vmul.f32 %v1211, %v6516
        %v6558 = vmul.f32 %v1213, %v6516
        %v6559 = vmul.f32 %v1215, %v6516
        %v6560 = vmul.f32 %v1217, %v6516
        %v6561 = vmul.f32 %v1219, %v6516
        %v6562 = vmul.f32 %v1221, %v6516
        %v6563 = vmul.f32 %v1223, %v6516
        %v6564 = vmul.f32 %v1225, %v6516
        %v6565 = vmul.f32 %v1227, %v6516
        %v6566 = vmul.f32 %v1229, %v6516
        %v6567 = vmul.f32 %v1231, %v6516
        %v6568 = vmul.f32 %v1233, %v6516
        %v6569 = vmul.f32 %v1235, %v6516
        %v6570 = vmul.f32 %v1237, %v6516
        %v6571 = vmul.f32 %v1239, %v6516
        %v6572 = vmul.f32 %v1241, %v6516
        %v6573 = vmul.f32 %v1243, %v6516
        %v6574 = vmul.f32 %v1245, %v6516
        %v6575 = vmul.f32 %v1247, %v6516
        %v6576 = vmul.f32 %v1249, %v6516
        %v6577 = vmul.f32 %v1251, %v6516
        %v6578 = vmul.f32 %v1253, %v6516
        %v6579 = vmul.f32 %v1255, %v6516
        %v6580 = vmul.f32 %v1257, %v6516
        %v6581 = vmul.f32 %v1259, %v6516
        %6646 = vrot.lane.b32.xlu0 %v6518, 16
        %v6647 = vpop.permute.xlu0 %6646
        %6648 = vrot.lane.b32.xlu0 %v6519, 16
        %v6649 = vpop.permute.xlu0 %6648
        %6650 = vrot.lane.b32.xlu0 %v6520, 16
        %v6651 = vpop.permute.xlu0 %6650
        %6652 = vrot.lane.b32.xlu0 %v6521, 16
        %v6653 = vpop.permute.xlu0 %6652
        %6654 = vrot.lane.b32.xlu0 %v6522, 16
        %v6655 = vpop.permute.xlu0 %6654
        %6656 = vrot.lane.b32.xlu0 %v6523, 16
        %v6657 = vpop.permute.xlu0 %6656
        %6658 = vrot.lane.b32.xlu0 %v6524, 16
        %v6659 = vpop.permute.xlu0 %6658
        %6660 = vrot.lane.b32.xlu0 %v6525, 16
        %v6661 = vpop.permute.xlu0 %6660
        %6662 = vrot.lane.b32.xlu0 %v6526, 16
        %v6663 = vpop.permute.xlu0 %6662
        %6664 = vrot.lane.b32.xlu0 %v6527, 16
        %v6665 = vpop.permute.xlu0 %6664
        %6666 = vrot.lane.b32.xlu0 %v6528, 16
        %v6667 = vpop.permute.xlu0 %6666
        %6668 = vrot.lane.b32.xlu0 %v6529, 16
        %v6669 = vpop.permute.xlu0 %6668
        %6670 = vrot.lane.b32.xlu0 %v6530, 16
        %v6671 = vpop.permute.xlu0 %6670
        %6672 = vrot.lane.b32.xlu0 %v6531, 16
        %v6673 = vpop.permute.xlu0 %6672
        %6674 = vrot.lane.b32.xlu0 %v6532, 16
        %v6675 = vpop.permute.xlu0 %6674
        %6676 = vrot.lane.b32.xlu0 %v6533, 16
        %v6677 = vpop.permute.xlu0 %6676
        %6678 = vrot.lane.b32.xlu0 %v6534, 16
        %v6679 = vpop.permute.xlu0 %6678
        %6680 = vrot.lane.b32.xlu0 %v6535, 16
        %v6681 = vpop.permute.xlu0 %6680
        %6682 = vrot.lane.b32.xlu0 %v6536, 16
        %v6683 = vpop.permute.xlu0 %6682
        %6684 = vrot.lane.b32.xlu0 %v6537, 16
        %v6685 = vpop.permute.xlu0 %6684
        %6686 = vrot.lane.b32.xlu0 %v6538, 16
        %v6687 = vpop.permute.xlu0 %6686
        %6688 = vrot.lane.b32.xlu0 %v6539, 16
        %v6689 = vpop.permute.xlu0 %6688
        %6690 = vrot.lane.b32.xlu0 %v6540, 16
        %v6691 = vpop.permute.xlu0 %6690
        %6692 = vrot.lane.b32.xlu0 %v6541, 16
        %v6693 = vpop.permute.xlu0 %6692
        %6694 = vrot.lane.b32.xlu0 %v6542, 16
        %v6695 = vpop.permute.xlu0 %6694
        %6696 = vrot.lane.b32.xlu0 %v6543, 16
        %v6697 = vpop.permute.xlu0 %6696
        %6698 = vrot.lane.b32.xlu0 %v6544, 16
        %v6699 = vpop.permute.xlu0 %6698
        %6700 = vrot.lane.b32.xlu0 %v6545, 16
        %v6701 = vpop.permute.xlu0 %6700
        %6702 = vrot.lane.b32.xlu0 %v6546, 16
        %v6703 = vpop.permute.xlu0 %6702
        %6704 = vrot.lane.b32.xlu0 %v6547, 16
        %v6705 = vpop.permute.xlu0 %6704
        %6706 = vrot.lane.b32.xlu0 %v6548, 16
        %v6707 = vpop.permute.xlu0 %6706
        %6708 = vrot.lane.b32.xlu0 %v6549, 16
        %v6709 = vpop.permute.xlu0 %6708
        %6710 = vrot.lane.b32.xlu0 %v6550, 16
        %v6711 = vpop.permute.xlu0 %6710
        %6712 = vrot.lane.b32.xlu0 %v6551, 16
        %v6713 = vpop.permute.xlu0 %6712
        %6714 = vrot.lane.b32.xlu0 %v6552, 16
        %v6715 = vpop.permute.xlu0 %6714
        %6716 = vrot.lane.b32.xlu0 %v6553, 16
        %v6717 = vpop.permute.xlu0 %6716
        %6718 = vrot.lane.b32.xlu0 %v6554, 16
        %v6719 = vpop.permute.xlu0 %6718
        %6720 = vrot.lane.b32.xlu0 %v6555, 16
        %v6721 = vpop.permute.xlu0 %6720
        %6722 = vrot.lane.b32.xlu0 %v6556, 16
        %v6723 = vpop.permute.xlu0 %6722
        %6724 = vrot.lane.b32.xlu0 %v6557, 16
        %v6725 = vpop.permute.xlu0 %6724
        %6726 = vrot.lane.b32.xlu0 %v6558, 16
        %v6727 = vpop.permute.xlu0 %6726
        %6728 = vrot.lane.b32.xlu0 %v6559, 16
        %v6729 = vpop.permute.xlu0 %6728
        %6730 = vrot.lane.b32.xlu0 %v6560, 16
        %v6731 = vpop.permute.xlu0 %6730
        %6732 = vrot.lane.b32.xlu0 %v6561, 16
        %v6733 = vpop.permute.xlu0 %6732
        %6734 = vrot.lane.b32.xlu0 %v6562, 16
        %v6735 = vpop.permute.xlu0 %6734
        %6736 = vrot.lane.b32.xlu0 %v6563, 16
        %v6737 = vpop.permute.xlu0 %6736
        %6738 = vrot.lane.b32.xlu0 %v6564, 16
        %v6739 = vpop.permute.xlu0 %6738
        %6740 = vrot.lane.b32.xlu0 %v6565, 16
        %v6741 = vpop.permute.xlu0 %6740
        %6742 = vrot.lane.b32.xlu0 %v6566, 16
        %v6743 = vpop.permute.xlu0 %6742
        %6744 = vrot.lane.b32.xlu0 %v6567, 16
        %v6745 = vpop.permute.xlu0 %6744
        %6746 = vrot.lane.b32.xlu0 %v6568, 16
        %v6747 = vpop.permute.xlu0 %6746
        %6748 = vrot.lane.b32.xlu0 %v6569, 16
        %v6749 = vpop.permute.xlu0 %6748
        %6750 = vrot.lane.b32.xlu0 %v6570, 16
        %v6751 = vpop.permute.xlu0 %6750
        %6752 = vrot.lane.b32.xlu0 %v6571, 16
        %v6753 = vpop.permute.xlu0 %6752
        %6754 = vrot.lane.b32.xlu0 %v6572, 16
        %v6755 = vpop.permute.xlu0 %6754
        %6756 = vrot.lane.b32.xlu0 %v6573, 16
        %v6757 = vpop.permute.xlu0 %6756
        %6758 = vrot.lane.b32.xlu0 %v6574, 16
        %v6759 = vpop.permute.xlu0 %6758
        %6760 = vrot.lane.b32.xlu0 %v6575, 16
        %v6761 = vpop.permute.xlu0 %6760
        %6762 = vrot.lane.b32.xlu0 %v6576, 16
        %v6763 = vpop.permute.xlu0 %6762
        %6764 = vrot.lane.b32.xlu0 %v6577, 16
        %v6765 = vpop.permute.xlu0 %6764
        %6766 = vrot.lane.b32.xlu0 %v6578, 16
        %v6767 = vpop.permute.xlu0 %6766
        %6768 = vrot.lane.b32.xlu0 %v6579, 16
        %v6769 = vpop.permute.xlu0 %6768
        %6770 = vrot.lane.b32.xlu0 %v6580, 16
        %v6771 = vpop.permute.xlu0 %6770
        %6772 = vrot.lane.b32.xlu0 %v6581, 16
        %v6773 = vpop.permute.xlu0 %6772
        %v6838 = vadd.f32 %v6445, %v6647
        %v6839 = vadd.f32 %v6446, %v6649
        %v6840 = vadd.f32 %v6447, %v6651
        %v6841 = vadd.f32 %v6448, %v6653
        %v6842 = vadd.f32 %v6449, %v6655
        %v6843 = vadd.f32 %v6450, %v6657
        %v6844 = vadd.f32 %v6451, %v6659
        %v6845 = vadd.f32 %v6452, %v6661
        %v6846 = vadd.f32 %v6453, %v6663
        %v6847 = vadd.f32 %v6454, %v6665
        %v6848 = vadd.f32 %v6455, %v6667
        %v6849 = vadd.f32 %v6456, %v6669
        %v6850 = vadd.f32 %v6457, %v6671
        %v6851 = vadd.f32 %v6458, %v6673
        %v6852 = vadd.f32 %v6459, %v6675
        %v6853 = vadd.f32 %v6460, %v6677
        %v6854 = vadd.f32 %v6461, %v6679
        %v6855 = vadd.f32 %v6462, %v6681
        %v6856 = vadd.f32 %v6463, %v6683
        %v6857 = vadd.f32 %v6464, %v6685
        %v6858 = vadd.f32 %v6465, %v6687
        %v6859 = vadd.f32 %v6466, %v6689
        %v6860 = vadd.f32 %v6467, %v6691
        %v6861 = vadd.f32 %v6468, %v6693
        %v6862 = vadd.f32 %v6469, %v6695
        %v6863 = vadd.f32 %v6470, %v6697
        %v6864 = vadd.f32 %v6471, %v6699
        %v6865 = vadd.f32 %v6472, %v6701
        %v6866 = vadd.f32 %v6473, %v6703
        %v6867 = vadd.f32 %v6474, %v6705
        %v6868 = vadd.f32 %v6475, %v6707
        %v6869 = vadd.f32 %v6476, %v6709
        %v6870 = vadd.f32 %v6477, %v6711
        %v6871 = vadd.f32 %v6478, %v6713
        %v6872 = vadd.f32 %v6479, %v6715
        %v6873 = vadd.f32 %v6480, %v6717
        %v6874 = vadd.f32 %v6481, %v6719
        %v6875 = vadd.f32 %v6482, %v6721
        %v6876 = vadd.f32 %v6483, %v6723
        %v6877 = vadd.f32 %v6484, %v6725
        %v6878 = vadd.f32 %v6485, %v6727
        %v6879 = vadd.f32 %v6486, %v6729
        %v6880 = vadd.f32 %v6487, %v6731
        %v6881 = vadd.f32 %v6488, %v6733
        %v6882 = vadd.f32 %v6489, %v6735
        %v6883 = vadd.f32 %v6490, %v6737
        %v6884 = vadd.f32 %v6491, %v6739
        %v6885 = vadd.f32 %v6492, %v6741
        %v6886 = vadd.f32 %v6493, %v6743
        %v6887 = vadd.f32 %v6494, %v6745
        %v6888 = vadd.f32 %v6495, %v6747
        %v6889 = vadd.f32 %v6496, %v6749
        %v6890 = vadd.f32 %v6497, %v6751
        %v6891 = vadd.f32 %v6498, %v6753
        %v6892 = vadd.f32 %v6499, %v6755
        %v6893 = vadd.f32 %v6500, %v6757
        %v6894 = vadd.f32 %v6501, %v6759
        %v6895 = vadd.f32 %v6502, %v6761
        %v6896 = vadd.f32 %v6503, %v6763
        %v6897 = vadd.f32 %v6504, %v6765
        %v6898 = vadd.f32 %v6505, %v6767
        %v6899 = vadd.f32 %v6506, %v6769
        %v6900 = vadd.f32 %v6507, %v6771
        %v6901 = vadd.f32 %v6508, %v6773
        %v6902 = vld [vmem:[%s3 + $0xf] sm:$0x1]
        %v6903 = vlaneseq
        %v6904 = vshrl.u32 %v6903, 7
        %v6905 = vsub.s32 0, %v6904
        %v6906 = vrot.slane %v6902, %v6905
        %6908 = vrot.lane.b32.xlu0 %v6906, 120
        %v6909 = vpop.permute.xlu0 %6908
        %v6911 = vmul.f32 %v1133, %v6909
        %v6912 = vmul.f32 %v1135, %v6909
        %v6913 = vmul.f32 %v1137, %v6909
        %v6914 = vmul.f32 %v1139, %v6909
        %v6915 = vmul.f32 %v1141, %v6909
        %v6916 = vmul.f32 %v1143, %v6909
        %v6917 = vmul.f32 %v1145, %v6909
        %v6918 = vmul.f32 %v1147, %v6909
        %v6919 = vmul.f32 %v1149, %v6909
        %v6920 = vmul.f32 %v1151, %v6909
        %v6921 = vmul.f32 %v1153, %v6909
        %v6922 = vmul.f32 %v1155, %v6909
        %v6923 = vmul.f32 %v1157, %v6909
        %v6924 = vmul.f32 %v1159, %v6909
        %v6925 = vmul.f32 %v1161, %v6909
        %v6926 = vmul.f32 %v1163, %v6909
        %v6927 = vmul.f32 %v1165, %v6909
        %v6928 = vmul.f32 %v1167, %v6909
        %v6929 = vmul.f32 %v1169, %v6909
        %v6930 = vmul.f32 %v1171, %v6909
        %v6931 = vmul.f32 %v1173, %v6909
        %v6932 = vmul.f32 %v1175, %v6909
        %v6933 = vmul.f32 %v1177, %v6909
        %v6934 = vmul.f32 %v1179, %v6909
        %v6935 = vmul.f32 %v1181, %v6909
        %v6936 = vmul.f32 %v1183, %v6909
        %v6937 = vmul.f32 %v1185, %v6909
        %v6938 = vmul.f32 %v1187, %v6909
        %v6939 = vmul.f32 %v1189, %v6909
        %v6940 = vmul.f32 %v1191, %v6909
        %v6941 = vmul.f32 %v1193, %v6909
        %v6942 = vmul.f32 %v1195, %v6909
        %v6943 = vmul.f32 %v1197, %v6909
        %v6944 = vmul.f32 %v1199, %v6909
        %v6945 = vmul.f32 %v1201, %v6909
        %v6946 = vmul.f32 %v1203, %v6909
        %v6947 = vmul.f32 %v1205, %v6909
        %v6948 = vmul.f32 %v1207, %v6909
        %v6949 = vmul.f32 %v1209, %v6909
        %v6950 = vmul.f32 %v1211, %v6909
        %v6951 = vmul.f32 %v1213, %v6909
        %v6952 = vmul.f32 %v1215, %v6909
        %v6953 = vmul.f32 %v1217, %v6909
        %v6954 = vmul.f32 %v1219, %v6909
        %v6955 = vmul.f32 %v1221, %v6909
        %v6956 = vmul.f32 %v1223, %v6909
        %v6957 = vmul.f32 %v1225, %v6909
        %v6958 = vmul.f32 %v1227, %v6909
        %v6959 = vmul.f32 %v1229, %v6909
        %v6960 = vmul.f32 %v1231, %v6909
        %v6961 = vmul.f32 %v1233, %v6909
        %v6962 = vmul.f32 %v1235, %v6909
        %v6963 = vmul.f32 %v1237, %v6909
        %v6964 = vmul.f32 %v1239, %v6909
        %v6965 = vmul.f32 %v1241, %v6909
        %v6966 = vmul.f32 %v1243, %v6909
        %v6967 = vmul.f32 %v1245, %v6909
        %v6968 = vmul.f32 %v1247, %v6909
        %v6969 = vmul.f32 %v1249, %v6909
        %v6970 = vmul.f32 %v1251, %v6909
        %v6971 = vmul.f32 %v1253, %v6909
        %v6972 = vmul.f32 %v1255, %v6909
        %v6973 = vmul.f32 %v1257, %v6909
        %v6974 = vmul.f32 %v1259, %v6909
        %7039 = vrot.lane.b32.xlu0 %v6911, 8
        %v7040 = vpop.permute.xlu0 %7039
        %7041 = vrot.lane.b32.xlu0 %v6912, 8
        %v7042 = vpop.permute.xlu0 %7041
        %7043 = vrot.lane.b32.xlu0 %v6913, 8
        %v7044 = vpop.permute.xlu0 %7043
        %7045 = vrot.lane.b32.xlu0 %v6914, 8
        %v7046 = vpop.permute.xlu0 %7045
        %7047 = vrot.lane.b32.xlu0 %v6915, 8
        %v7048 = vpop.permute.xlu0 %7047
        %7049 = vrot.lane.b32.xlu0 %v6916, 8
        %v7050 = vpop.permute.xlu0 %7049
        %7051 = vrot.lane.b32.xlu0 %v6917, 8
        %v7052 = vpop.permute.xlu0 %7051
        %7053 = vrot.lane.b32.xlu0 %v6918, 8
        %v7054 = vpop.permute.xlu0 %7053
        %7055 = vrot.lane.b32.xlu0 %v6919, 8
        %v7056 = vpop.permute.xlu0 %7055
        %7057 = vrot.lane.b32.xlu0 %v6920, 8
        %v7058 = vpop.permute.xlu0 %7057
        %7059 = vrot.lane.b32.xlu0 %v6921, 8
        %v7060 = vpop.permute.xlu0 %7059
        %7061 = vrot.lane.b32.xlu0 %v6922, 8
        %v7062 = vpop.permute.xlu0 %7061
        %7063 = vrot.lane.b32.xlu0 %v6923, 8
        %v7064 = vpop.permute.xlu0 %7063
        %7065 = vrot.lane.b32.xlu0 %v6924, 8
        %v7066 = vpop.permute.xlu0 %7065
        %7067 = vrot.lane.b32.xlu0 %v6925, 8
        %v7068 = vpop.permute.xlu0 %7067
        %7069 = vrot.lane.b32.xlu0 %v6926, 8
        %v7070 = vpop.permute.xlu0 %7069
        %7071 = vrot.lane.b32.xlu0 %v6927, 8
        %v7072 = vpop.permute.xlu0 %7071
        %7073 = vrot.lane.b32.xlu0 %v6928, 8
        %v7074 = vpop.permute.xlu0 %7073
        %7075 = vrot.lane.b32.xlu0 %v6929, 8
        %v7076 = vpop.permute.xlu0 %7075
        %7077 = vrot.lane.b32.xlu0 %v6930, 8
        %v7078 = vpop.permute.xlu0 %7077
        %7079 = vrot.lane.b32.xlu0 %v6931, 8
        %v7080 = vpop.permute.xlu0 %7079
        %7081 = vrot.lane.b32.xlu0 %v6932, 8
        %v7082 = vpop.permute.xlu0 %7081
        %7083 = vrot.lane.b32.xlu0 %v6933, 8
        %v7084 = vpop.permute.xlu0 %7083
        %7085 = vrot.lane.b32.xlu0 %v6934, 8
        %v7086 = vpop.permute.xlu0 %7085
        %7087 = vrot.lane.b32.xlu0 %v6935, 8
        %v7088 = vpop.permute.xlu0 %7087
        %7089 = vrot.lane.b32.xlu0 %v6936, 8
        %v7090 = vpop.permute.xlu0 %7089
        %7091 = vrot.lane.b32.xlu0 %v6937, 8
        %v7092 = vpop.permute.xlu0 %7091
        %7093 = vrot.lane.b32.xlu0 %v6938, 8
        %v7094 = vpop.permute.xlu0 %7093
        %7095 = vrot.lane.b32.xlu0 %v6939, 8
        %v7096 = vpop.permute.xlu0 %7095
        %7097 = vrot.lane.b32.xlu0 %v6940, 8
        %v7098 = vpop.permute.xlu0 %7097
        %7099 = vrot.lane.b32.xlu0 %v6941, 8
        %v7100 = vpop.permute.xlu0 %7099
        %7101 = vrot.lane.b32.xlu0 %v6942, 8
        %v7102 = vpop.permute.xlu0 %7101
        %7103 = vrot.lane.b32.xlu0 %v6943, 8
        %v7104 = vpop.permute.xlu0 %7103
        %7105 = vrot.lane.b32.xlu0 %v6944, 8
        %v7106 = vpop.permute.xlu0 %7105
        %7107 = vrot.lane.b32.xlu0 %v6945, 8
        %v7108 = vpop.permute.xlu0 %7107
        %7109 = vrot.lane.b32.xlu0 %v6946, 8
        %v7110 = vpop.permute.xlu0 %7109
        %7111 = vrot.lane.b32.xlu0 %v6947, 8
        %v7112 = vpop.permute.xlu0 %7111
        %7113 = vrot.lane.b32.xlu0 %v6948, 8
        %v7114 = vpop.permute.xlu0 %7113
        %7115 = vrot.lane.b32.xlu0 %v6949, 8
        %v7116 = vpop.permute.xlu0 %7115
        %7117 = vrot.lane.b32.xlu0 %v6950, 8
        %v7118 = vpop.permute.xlu0 %7117
        %7119 = vrot.lane.b32.xlu0 %v6951, 8
        %v7120 = vpop.permute.xlu0 %7119
        %7121 = vrot.lane.b32.xlu0 %v6952, 8
        %v7122 = vpop.permute.xlu0 %7121
        %7123 = vrot.lane.b32.xlu0 %v6953, 8
        %v7124 = vpop.permute.xlu0 %7123
        %7125 = vrot.lane.b32.xlu0 %v6954, 8
        %v7126 = vpop.permute.xlu0 %7125
        %7127 = vrot.lane.b32.xlu0 %v6955, 8
        %v7128 = vpop.permute.xlu0 %7127
        %7129 = vrot.lane.b32.xlu0 %v6956, 8
        %v7130 = vpop.permute.xlu0 %7129
        %7131 = vrot.lane.b32.xlu0 %v6957, 8
        %v7132 = vpop.permute.xlu0 %7131
        %7133 = vrot.lane.b32.xlu0 %v6958, 8
        %v7134 = vpop.permute.xlu0 %7133
        %7135 = vrot.lane.b32.xlu0 %v6959, 8
        %v7136 = vpop.permute.xlu0 %7135
        %7137 = vrot.lane.b32.xlu0 %v6960, 8
        %v7138 = vpop.permute.xlu0 %7137
        %7139 = vrot.lane.b32.xlu0 %v6961, 8
        %v7140 = vpop.permute.xlu0 %7139
        %7141 = vrot.lane.b32.xlu0 %v6962, 8
        %v7142 = vpop.permute.xlu0 %7141
        %7143 = vrot.lane.b32.xlu0 %v6963, 8
        %v7144 = vpop.permute.xlu0 %7143
        %7145 = vrot.lane.b32.xlu0 %v6964, 8
        %v7146 = vpop.permute.xlu0 %7145
        %7147 = vrot.lane.b32.xlu0 %v6965, 8
        %v7148 = vpop.permute.xlu0 %7147
        %7149 = vrot.lane.b32.xlu0 %v6966, 8
        %v7150 = vpop.permute.xlu0 %7149
        %7151 = vrot.lane.b32.xlu0 %v6967, 8
        %v7152 = vpop.permute.xlu0 %7151
        %7153 = vrot.lane.b32.xlu0 %v6968, 8
        %v7154 = vpop.permute.xlu0 %7153
        %7155 = vrot.lane.b32.xlu0 %v6969, 8
        %v7156 = vpop.permute.xlu0 %7155
        %7157 = vrot.lane.b32.xlu0 %v6970, 8
        %v7158 = vpop.permute.xlu0 %7157
        %7159 = vrot.lane.b32.xlu0 %v6971, 8
        %v7160 = vpop.permute.xlu0 %7159
        %7161 = vrot.lane.b32.xlu0 %v6972, 8
        %v7162 = vpop.permute.xlu0 %7161
        %7163 = vrot.lane.b32.xlu0 %v6973, 8
        %v7164 = vpop.permute.xlu0 %7163
        %7165 = vrot.lane.b32.xlu0 %v6974, 8
        %v7166 = vpop.permute.xlu0 %7165
        %v7231 = vadd.f32 %v6838, %v7040
        %v7232 = vadd.f32 %v6839, %v7042
        %v7233 = vadd.f32 %v6840, %v7044
        %v7234 = vadd.f32 %v6841, %v7046
        %v7235 = vadd.f32 %v6842, %v7048
        %v7236 = vadd.f32 %v6843, %v7050
        %v7237 = vadd.f32 %v6844, %v7052
        %v7238 = vadd.f32 %v6845, %v7054
        %v7239 = vadd.f32 %v6846, %v7056
        %v7240 = vadd.f32 %v6847, %v7058
        %v7241 = vadd.f32 %v6848, %v7060
        %v7242 = vadd.f32 %v6849, %v7062
        %v7243 = vadd.f32 %v6850, %v7064
        %v7244 = vadd.f32 %v6851, %v7066
        %v7245 = vadd.f32 %v6852, %v7068
        %v7246 = vadd.f32 %v6853, %v7070
        %v7247 = vadd.f32 %v6854, %v7072
        %v7248 = vadd.f32 %v6855, %v7074
        %v7249 = vadd.f32 %v6856, %v7076
        %v7250 = vadd.f32 %v6857, %v7078
        %v7251 = vadd.f32 %v6858, %v7080
        %v7252 = vadd.f32 %v6859, %v7082
        %v7253 = vadd.f32 %v6860, %v7084
        %v7254 = vadd.f32 %v6861, %v7086
        %v7255 = vadd.f32 %v6862, %v7088
        %v7256 = vadd.f32 %v6863, %v7090
        %v7257 = vadd.f32 %v6864, %v7092
        %v7258 = vadd.f32 %v6865, %v7094
        %v7259 = vadd.f32 %v6866, %v7096
        %v7260 = vadd.f32 %v6867, %v7098
        %v7261 = vadd.f32 %v6868, %v7100
        %v7262 = vadd.f32 %v6869, %v7102
        %v7263 = vadd.f32 %v6870, %v7104
        %v7264 = vadd.f32 %v6871, %v7106
        %v7265 = vadd.f32 %v6872, %v7108
        %v7266 = vadd.f32 %v6873, %v7110
        %v7267 = vadd.f32 %v6874, %v7112
        %v7268 = vadd.f32 %v6875, %v7114
        %v7269 = vadd.f32 %v6876, %v7116
        %v7270 = vadd.f32 %v6877, %v7118
        %v7271 = vadd.f32 %v6878, %v7120
        %v7272 = vadd.f32 %v6879, %v7122
        %v7273 = vadd.f32 %v6880, %v7124
        %v7274 = vadd.f32 %v6881, %v7126
        %v7275 = vadd.f32 %v6882, %v7128
        %v7276 = vadd.f32 %v6883, %v7130
        %v7277 = vadd.f32 %v6884, %v7132
        %v7278 = vadd.f32 %v6885, %v7134
        %v7279 = vadd.f32 %v6886, %v7136
        %v7280 = vadd.f32 %v6887, %v7138
        %v7281 = vadd.f32 %v6888, %v7140
        %v7282 = vadd.f32 %v6889, %v7142
        %v7283 = vadd.f32 %v6890, %v7144
        %v7284 = vadd.f32 %v6891, %v7146
        %v7285 = vadd.f32 %v6892, %v7148
        %v7286 = vadd.f32 %v6893, %v7150
        %v7287 = vadd.f32 %v6894, %v7152
        %v7288 = vadd.f32 %v6895, %v7154
        %v7289 = vadd.f32 %v6896, %v7156
        %v7290 = vadd.f32 %v6897, %v7158
        %v7291 = vadd.f32 %v6898, %v7160
        %v7292 = vadd.f32 %v6899, %v7162
        %v7293 = vadd.f32 %v6900, %v7164
        %v7294 = vadd.f32 %v6901, %v7166
        %v7295 = vsel %vm298, %v7231, 0.0
        %v7296 = vsel %vm298, %v7232, 0.0
        %v7297 = vsel %vm298, %v7233, 0.0
        %v7298 = vsel %vm298, %v7234, 0.0
        %v7299 = vsel %vm298, %v7235, 0.0
        %v7300 = vsel %vm298, %v7236, 0.0
        %v7301 = vsel %vm298, %v7237, 0.0
        %v7302 = vsel %vm298, %v7238, 0.0
        %v7303 = vsel %vm298, %v7239, 0.0
        %v7304 = vsel %vm298, %v7240, 0.0
        %v7305 = vsel %vm298, %v7241, 0.0
        %v7306 = vsel %vm298, %v7242, 0.0
        %v7307 = vsel %vm298, %v7243, 0.0
        %v7308 = vsel %vm298, %v7244, 0.0
        %v7309 = vsel %vm298, %v7245, 0.0
        %v7310 = vsel %vm298, %v7246, 0.0
        %v7311 = vsel %vm298, %v7247, 0.0
        %v7312 = vsel %vm298, %v7248, 0.0
        %v7313 = vsel %vm298, %v7249, 0.0
        %v7314 = vsel %vm298, %v7250, 0.0
        %v7315 = vsel %vm298, %v7251, 0.0
        %v7316 = vsel %vm298, %v7252, 0.0
        %v7317 = vsel %vm298, %v7253, 0.0
        %v7318 = vsel %vm298, %v7254, 0.0
        %v7319 = vsel %vm298, %v7255, 0.0
        %v7320 = vsel %vm298, %v7256, 0.0
        %v7321 = vsel %vm298, %v7257, 0.0
        %v7322 = vsel %vm298, %v7258, 0.0
        %v7323 = vsel %vm298, %v7259, 0.0
        %v7324 = vsel %vm298, %v7260, 0.0
        %v7325 = vsel %vm298, %v7261, 0.0
        %v7326 = vsel %vm298, %v7262, 0.0
        %v7327 = vsel %vm298, %v7263, 0.0
        %v7328 = vsel %vm298, %v7264, 0.0
        %v7329 = vsel %vm298, %v7265, 0.0
        %v7330 = vsel %vm298, %v7266, 0.0
        %v7331 = vsel %vm298, %v7267, 0.0
        %v7332 = vsel %vm298, %v7268, 0.0
        %v7333 = vsel %vm298, %v7269, 0.0
        %v7334 = vsel %vm298, %v7270, 0.0
        %v7335 = vsel %vm298, %v7271, 0.0
        %v7336 = vsel %vm298, %v7272, 0.0
        %v7337 = vsel %vm298, %v7273, 0.0
        %v7338 = vsel %vm298, %v7274, 0.0
        %v7339 = vsel %vm298, %v7275, 0.0
        %v7340 = vsel %vm298, %v7276, 0.0
        %v7341 = vsel %vm298, %v7277, 0.0
        %v7342 = vsel %vm298, %v7278, 0.0
        %v7343 = vsel %vm298, %v7279, 0.0
        %v7344 = vsel %vm298, %v7280, 0.0
        %v7345 = vsel %vm298, %v7281, 0.0
        %v7346 = vsel %vm298, %v7282, 0.0
        %v7347 = vsel %vm298, %v7283, 0.0
        %v7348 = vsel %vm298, %v7284, 0.0
        %v7349 = vsel %vm298, %v7285, 0.0
        %v7350 = vsel %vm298, %v7286, 0.0
        %v7351 = vsel %vm298, %v7287, 0.0
        %v7352 = vsel %vm298, %v7288, 0.0
        %v7353 = vsel %vm298, %v7289, 0.0
        %v7354 = vsel %vm298, %v7290, 0.0
        %v7355 = vsel %vm298, %v7291, 0.0
        %v7356 = vsel %vm298, %v7292, 0.0
        %v7357 = vsel %vm298, %v7293, 0.0
        %v7358 = vsel %vm298, %v7294, 0.0
        %7359 = vst [vmem:[%s218] sm:$0xff] %v7295
        %7360 = vst [vmem:[%s218 + $0x8] sm:$0xff] %v7296
        %7361 = vst [vmem:[%s218 + $0x10] sm:$0xff] %v7297
        %7362 = vst [vmem:[%s218 + $0x18] sm:$0xff] %v7298
        %7363 = vst [vmem:[%s218 + $0x20] sm:$0xff] %v7299
        %7364 = vst [vmem:[%s218 + $0x28] sm:$0xff] %v7300
        %7365 = vst [vmem:[%s218 + $0x30] sm:$0xff] %v7301
        %7366 = vst [vmem:[%s218 + $0x38] sm:$0xff] %v7302
        %7367 = vst [vmem:[%s218 + $0x40] sm:$0xff] %v7303
        %7368 = vst [vmem:[%s218 + $0x48] sm:$0xff] %v7304
        %7369 = vst [vmem:[%s218 + $0x50] sm:$0xff] %v7305
        %7370 = vst [vmem:[%s218 + $0x58] sm:$0xff] %v7306
        %7371 = vst [vmem:[%s218 + $0x60] sm:$0xff] %v7307
        %7372 = vst [vmem:[%s218 + $0x68] sm:$0xff] %v7308
        %7373 = vst [vmem:[%s218 + $0x70] sm:$0xff] %v7309
        %7374 = vst [vmem:[%s218 + $0x78] sm:$0xff] %v7310
        %7375 = vst [vmem:[%s218 + $0x80] sm:$0xff] %v7311
        %7376 = vst [vmem:[%s218 + $0x88] sm:$0xff] %v7312
        %7377 = vst [vmem:[%s218 + $0x90] sm:$0xff] %v7313
        %7378 = vst [vmem:[%s218 + $0x98] sm:$0xff] %v7314
        %7379 = vst [vmem:[%s218 + $0xa0] sm:$0xff] %v7315
        %7380 = vst [vmem:[%s218 + $0xa8] sm:$0xff] %v7316
        %7381 = vst [vmem:[%s218 + $0xb0] sm:$0xff] %v7317
        %7382 = vst [vmem:[%s218 + $0xb8] sm:$0xff] %v7318
        %7383 = vst [vmem:[%s218 + $0xc0] sm:$0xff] %v7319
        %7384 = vst [vmem:[%s218 + $0xc8] sm:$0xff] %v7320
        %7385 = vst [vmem:[%s218 + $0xd0] sm:$0xff] %v7321
        %7386 = vst [vmem:[%s218 + $0xd8] sm:$0xff] %v7322
        %7387 = vst [vmem:[%s218 + $0xe0] sm:$0xff] %v7323
        %7388 = vst [vmem:[%s218 + $0xe8] sm:$0xff] %v7324
        %7389 = vst [vmem:[%s218 + $0xf0] sm:$0xff] %v7325
        %7390 = vst [vmem:[%s218 + $0xf8] sm:$0xff] %v7326
        %7391 = vst [vmem:[%s218 + $0x100] sm:$0xff] %v7327
        %7392 = vst [vmem:[%s218 + $0x108] sm:$0xff] %v7328
        %7393 = vst [vmem:[%s218 + $0x110] sm:$0xff] %v7329
        %7394 = vst [vmem:[%s218 + $0x118] sm:$0xff] %v7330
        %7395 = vst [vmem:[%s218 + $0x120] sm:$0xff] %v7331
        %7396 = vst [vmem:[%s218 + $0x128] sm:$0xff] %v7332
        %7397 = vst [vmem:[%s218 + $0x130] sm:$0xff] %v7333
        %7398 = vst [vmem:[%s218 + $0x138] sm:$0xff] %v7334
        %7399 = vst [vmem:[%s218 + $0x140] sm:$0xff] %v7335
        %7400 = vst [vmem:[%s218 + $0x148] sm:$0xff] %v7336
        %7401 = vst [vmem:[%s218 + $0x150] sm:$0xff] %v7337
        %7402 = vst [vmem:[%s218 + $0x158] sm:$0xff] %v7338
        %7403 = vst [vmem:[%s218 + $0x160] sm:$0xff] %v7339
        %7404 = vst [vmem:[%s218 + $0x168] sm:$0xff] %v7340
        %7405 = vst [vmem:[%s218 + $0x170] sm:$0xff] %v7341
        %7406 = vst [vmem:[%s218 + $0x178] sm:$0xff] %v7342
        %7407 = vst [vmem:[%s218 + $0x180] sm:$0xff] %v7343
        %7408 = vst [vmem:[%s218 + $0x188] sm:$0xff] %v7344
        %7409 = vst [vmem:[%s218 + $0x190] sm:$0xff] %v7345
        %7410 = vst [vmem:[%s218 + $0x198] sm:$0xff] %v7346
        %7411 = vst [vmem:[%s218 + $0x1a0] sm:$0xff] %v7347
        %7412 = vst [vmem:[%s218 + $0x1a8] sm:$0xff] %v7348
        %7413 = vst [vmem:[%s218 + $0x1b0] sm:$0xff] %v7349
        %7414 = vst [vmem:[%s218 + $0x1b8] sm:$0xff] %v7350
        %7415 = vst [vmem:[%s218 + $0x1c0] sm:$0xff] %v7351
        %7416 = vst [vmem:[%s218 + $0x1c8] sm:$0xff] %v7352
        %7417 = vst [vmem:[%s218 + $0x1d0] sm:$0xff] %v7353
        %7418 = vst [vmem:[%s218 + $0x1d8] sm:$0xff] %v7354
        %7419 = vst [vmem:[%s218 + $0x1e0] sm:$0xff] %v7355
        %7420 = vst [vmem:[%s218 + $0x1e8] sm:$0xff] %v7356
        %7421 = vst [vmem:[%s218 + $0x1f0] sm:$0xff] %v7357
        %7422 = vst [vmem:[%s218 + $0x1f8] sm:$0xff] %v7358
        %s7423 = sand.u32 %s137, 1
        %s7424 = scalar_lea.sflag [#allocation3], %s7423
        %s7425 = sand.u32 %s137, 1
        %s7426 = smul.addr %s7425, 512
        %s7427 = scalar_lea.vmem [#allocation2], %s7426
        // Predicated region
        $region41: #{tpu_custom_call.1} parent=39 // pred_check
          %p7428 = pneg %p147
        $region42: #{tpu_custom_call.1} parent=39 // pred_check_branch
          %7430 = sbr.rel (%p7428) target = $region44
        $region43: #{tpu_custom_call.1} parent=39 // pred_region
          %s7431 = smul.u32 64, %s19
          %s7433 = ssub.s32 8192, 8192
          %7434 = vsyncadd %s7424, %s7433
          %s7435 = smul.addr %s7431, 128
          %s7436 = scalar_lea.hbm %s5, %s7435
          %s7437 = sshll.u32 %s7427, 4
          %s7438 = int_to_ptr.vmem [resolvable:$true] %s7437
          %7443 = dma.vmem_to_hbm [thread:$0]  %s7438, 8192, %s7436, %s7424, 128, 128, 8
        $region44: #{tpu_custom_call.1} parent=39 // pred_fallthru
          _
      $region40: #{tpu_custom_call.1} parent=5 // pred_fallthru
        _
      %p7444 = scmp.le.s32.totalorder 2, %s14
      // Predicated region
      $region45: #{tpu_custom_call.1} parent=5 // pred_check
        %p7445 = pneg %p7444
      $region46: #{tpu_custom_call.1} parent=5 // pred_check_branch
        %7447 = sbr.rel (%p7445) target = $region48
      $region47: #{tpu_custom_call.1} parent=5 // pred_region
        %s7448 = ssub.s32 %s14, 2
        // Predicated region
        $region49: #{tpu_custom_call.1} parent=47 // pred_check
          %p7449 = pneg %p153
        $region50: #{tpu_custom_call.1} parent=47 // pred_check_branch
          %7451 = sbr.rel (%p7449) target = $region52
        $region51: #{tpu_custom_call.1} parent=47 // pred_region
          %s7452 = sand.u32 %s138, 1
          %s7453 = scalar_lea.sflag [#allocation3], %s7452
          %s7454 = sand.u32 %s138, 1
          %s7455 = smul.addr %s7454, 512
          %s7456 = scalar_lea.vmem [#allocation2], %s7455
          %7457 = dma.done %s7453, 8192
        $region52: #{tpu_custom_call.1} parent=47 // pred_fallthru
          _
      $region48: #{tpu_custom_call.1} parent=5 // pred_fallthru
        _
    $region6: #{tpu_custom_call.1} parent=1 // loop_footer
      %s18 = sadd.s32 1, %s14
    $region7: #{tpu_custom_call.1} parent=1 // loop_footer_branch
      %13 = sbr.rel target = $region3
    $region8: #{tpu_custom_call.1} parent=1 // loop_exit
      _
    %7458 = vsyncpa [#allocation3], 1
    %s7459 = scalar_lea.sflag [#allocation3], 1
    %7460 = vsyncpa %s7459, 1

</llo_original>
